<compile_context>
chip_gen: v7x
topology: tpu7x:2x2x1
jax: 0.10.0
libtpu: 0.0.40
codegen_flags: <defaults>
</compile_context>

<pallas_src>
import functools

import jax
import jax.numpy as jnp
from jax.experimental import pallas as pl
from jax.experimental.pallas import tpu as pltpu


# ---------------------------------------------------------------------------
# Kernel 1: one GCN layer, row-tiled over nodes.
#   out[rows] = maybe_relu( A[rows, :] @ (X @ W) + b )
#   a_ref : (TM, N_pad)      bf16   (row slab, streamed / double-buffered)
#   x_ref : (N_pad, F_pad)   f32    (VMEM-resident, fetched once per core)
#   w_ref : (F_pad, H_pad)   f32
#   b_ref : (1, H_pad)       f32
#   out   : (TM, H_pad)      f32
# ---------------------------------------------------------------------------
def _gcn_layer_kernel(a_ref, x_ref, w_ref, b_ref, out_ref, *, relu):
    # Dense linear transform on the resident features (MXU, f32 accumulate).
    xw = jnp.dot(x_ref[...], w_ref[...], preferred_element_type=jnp.float32)
    # Normalized aggregation for this row slab: bf16 x bf16 MXU, f32 accumulate.
    agg = jnp.dot(a_ref[...], xw.astype(jnp.bfloat16),
                  preferred_element_type=jnp.float32)
    h = agg + b_ref[...]
    if relu:
        h = jnp.maximum(h, 0.0)
    out_ref[...] = h


def _choose_row_tile(n):
    """Largest row tile (multiple of 8, capped at 512) whose double-buffered
    bf16 A slab stays within a ~12 MiB budget (safe for v7x's 64 MiB VMEM)."""
    n8 = -(-n // 8) * 8
    budget = 12 * 1024 * 1024            # bytes for 2 x (TM, N) bf16 buffers
    tm = budget // (2 * 2 * max(n8, 1))
    tm = max(8, min(n8, (tm // 8) * 8))
    return min(tm, 512)


def _vmem_limit_bytes(tm, n_pad, f_pad, h_pad):
    need = (2 * tm * n_pad * 2           # A slab, double-buffered, bf16
            + tm * n_pad * 2             # headroom for an in-kernel A copy
            + n_pad * f_pad * 4          # resident X (f32)
            + n_pad * h_pad * 6          # XW temporaries (f32 + bf16 cast)
            + 2 * tm * h_pad * 4         # output slab, double-buffered
            + f_pad * h_pad * 4 + h_pad * 4
            + (4 << 20))                 # general headroom
    return int(min(max(need, 16 << 20), 48 << 20))


def gcn_layer(a_bf16, x, w, b2d, *, relu, tm):
    """out = maybe_relu(A @ (X @ W) + b), row-tiled pallas_call."""
    n_pad, f_pad = x.shape
    h_pad = w.shape[1]
    assert a_bf16.shape == (n_pad, n_pad) and n_pad % tm == 0
    grid = (n_pad // tm,)

    return pl.pallas_call(
        functools.partial(_gcn_layer_kernel, relu=relu),
        out_shape=jax.ShapeDtypeStruct((n_pad, h_pad), jnp.float32),
        grid=grid,
        in_specs=[
            pl.BlockSpec((tm, n_pad), lambda i: (i, 0)),      # A row slab
            pl.BlockSpec((n_pad, f_pad), lambda i: (0, 0)),   # X (resident)
            pl.BlockSpec((f_pad, h_pad), lambda i: (0, 0)),   # W (resident)
            pl.BlockSpec((1, h_pad), lambda i: (0, 0)),       # bias (2-D)
        ],
        out_specs=pl.BlockSpec((tm, h_pad), lambda i: (i, 0)),
        compiler_params=pltpu.CompilerParams(
            dimension_semantics=("parallel",),                # megacore on v7x
            vmem_limit_bytes=_vmem_limit_bytes(tm, n_pad, f_pad, h_pad),
        ),
    )(a_bf16, x, w, b2d)


# ---------------------------------------------------------------------------
# Kernel 2: pair classifier head.
#   logits = xa @ Wc[:C] + xb @ Wc[C:] + bc   ==  concat([xa, xb], 1) @ Wc + bc
# Implemented as lane reductions (XLU) to avoid a width-1 MXU output.
#   xa/xb : (P_pad, C_pad) f32, wa/wb : (1, C_pad) f32, bc : (1, 1) f32
# ---------------------------------------------------------------------------
def _classifier_head_kernel(xa_ref, xb_ref, wa_ref, wb_ref, bc_ref, out_ref):
    za = jnp.sum(xa_ref[...] * wa_ref[...], axis=1, keepdims=True)
    zb = jnp.sum(xb_ref[...] * wb_ref[...], axis=1, keepdims=True)
    out_ref[...] = za + zb + bc_ref[...]


def classifier_head(xa, xb, wa2d, wb2d, bc2d):
    p_pad, c_pad = xa.shape
    full = lambda shape: pl.BlockSpec(shape, lambda i: (0,) * len(shape))
    return pl.pallas_call(
        _classifier_head_kernel,
        out_shape=jax.ShapeDtypeStruct((p_pad, 1), jnp.float32),
        grid=(1,),
        in_specs=[full((p_pad, c_pad)), full((p_pad, c_pad)),
                  full((1, c_pad)), full((1, c_pad)), full((1, 1))],
        out_specs=full((p_pad, 1)),
        compiler_params=pltpu.CompilerParams(
            dimension_semantics=("arbitrary",)),
    )(xa, xb, wa2d, wb2d, bc2d)


# ---------------------------------------------------------------------------
# Plain-JAX glue
# ---------------------------------------------------------------------------
def build_normalized_adjacency(edge_index, num_nodes, padded_size=None):
    """Dense GCN-normalized adjacency with self-loops (matches PyG gcn_norm).
    Padded rows/cols (>= num_nodes) are zero."""
    size = num_nodes if padded_size is None else padded_size
    src = edge_index[0]
    dst = edge_index[1]
    loop = jnp.arange(num_nodes, dtype=src.dtype)
    src = jnp.concatenate([src, loop])
    dst = jnp.concatenate([dst, loop])
    ones = jnp.ones(src.shape, dtype=jnp.float32)
    deg = jnp.zeros((size,), dtype=jnp.float32).at[dst].add(ones)
    deg_inv_sqrt = jnp.where(deg > 0, jax.lax.rsqrt(jnp.maximum(deg, 1.0)), 0.0)
    norm = deg_inv_sqrt[src] * deg_inv_sqrt[dst]
    return jnp.zeros((size, size), dtype=jnp.float32).at[dst, src].add(norm)


def _pad2d(x, rows, cols):
    return jnp.pad(x, ((0, rows - x.shape[0]), (0, cols - x.shape[1])))


def _round_up(v, m):
    return -(-v // m) * m


def no_cross_gcn_encoder_forward(params, vector_tensor, edge_index,
                                 article1_idx, article2_idx, labels=None):
    """Mirrors NoCrossGCNEncoderModel.forward.  Returns (logits, loss)."""
    n, f_in = vector_tensor.shape
    hidden = params["w1"].shape[1]
    f_out = params["w2"].shape[1]

    # --- layout / tiling decisions ------------------------------------------------
    tm = _choose_row_tile(n)
    n_pad = _round_up(n, tm)
    f_in_pad = _round_up(f_in, 128)
    h_pad = _round_up(hidden, 128)
    o_pad = _round_up(f_out, 128)

    # --- padded operands (zero padding is exact) ----------------------------------
    x_pad = _pad2d(vector_tensor.astype(jnp.float32), n_pad, f_in_pad)
    a_hat = build_normalized_adjacency(edge_index, n, padded_size=n_pad)
    a_bf16 = a_hat.astype(jnp.bfloat16)          # halve HBM bytes on the hot path

    w1_pad = _pad2d(params["w1"], f_in_pad, h_pad)
    b1_pad = _pad2d(params["b1"].reshape(1, hidden), 1, h_pad)
    w2_pad = _pad2d(params["w2"], h_pad, o_pad)
    b2_pad = _pad2d(params["b2"].reshape(1, f_out), 1, o_pad)

    # --- encoder: two row-tiled GCN layers -----------------------------------------
    h1 = gcn_layer(a_bf16, x_pad, w1_pad, b1_pad, relu=True, tm=tm)
    h2 = gcn_layer(a_bf16, h1, w2_pad, b2_pad, relu=False, tm=tm)

    # --- pair gather (plain-JAX glue) + linear classifier head ---------------------
    p = article1_idx.shape[0]
    p_pad = max(8, _round_up(p, 8))
    a1 = jnp.pad(article1_idx, (0, p_pad - p))
    a2 = jnp.pad(article2_idx, (0, p_pad - p))
    xa = h2[a1]                                   # (p_pad, o_pad)
    xb = h2[a2]

    wc = params["wc"]                             # (2*f_out, 1)
    wa2d = _pad2d(wc[:f_out].reshape(1, f_out), 1, o_pad)
    wb2d = _pad2d(wc[f_out:2 * f_out].reshape(1, f_out), 1, o_pad)
    bc2d = params["bc"].reshape(1, 1)

    logits = classifier_head(xa, xb, wa2d, wb2d, bc2d)[:p]

    loss = None
    if labels is not None:
        # BCEWithLogitsLoss (numerically stable), plain-JAX scalar reduction.
        z = logits.reshape(-1)
        y = labels.astype(jnp.float32).reshape(-1)
        loss = jnp.mean(jnp.maximum(z, 0.0) - z * y + jnp.log1p(jnp.exp(-jnp.abs(z))))
    return logits, loss


def reference_forward(params, vector_tensor, edge_index, article1_idx, article2_idx):
    """Pure-JAX f32 reference of the module's forward (for validation)."""
    n = vector_tensor.shape[0]
    a_hat = build_normalized_adjacency(edge_index, n)
    h1 = jnp.maximum(a_hat @ (vector_tensor @ params["w1"]) + params["b1"], 0.0)
    h2 = a_hat @ (h1 @ params["w2"]) + params["b2"]
    comb = jnp.concatenate([h2[article1_idx], h2[article2_idx]], axis=1)
    return comb @ params["wc"] + params["bc"]


# ---------------------------------------------------------------------------
# Deterministic setup + smoke test
# ---------------------------------------------------------------------------
if __name__ == "__main__":
    key = jax.random.PRNGKey(0)

    N = 1024            # nodes (=> row tile 512, grid of 2 slabs)
    IN_CHANNELS = 8
    HIDDEN = 16         # GCNConv(in_channels, 16)
    OUT_CHANNELS = 8    # must equal IN_CHANNELS for the module's classifier dims
    E = 4096            # directed edges
    P = 12              # number of (article1, article2) pairs

    k_x, k_e1, k_e2, k_w1, k_w2, k_wc, k_ab = jax.random.split(key, 7)

    vector_tensor = jax.random.normal(k_x, (N, IN_CHANNELS), dtype=jnp.float32)
    src = jax.random.randint(k_e1, (E,), 0, N, dtype=jnp.int32)
    dst = jax.random.randint(k_e2, (E,), 0, N, dtype=jnp.int32)
    edge_index = jnp.stack([src, dst], axis=0)

    idx = jax.random.randint(k_ab, (2, P), 0, N, dtype=jnp.int32)
    article1_idx, article2_idx = idx[0], idx[1]

    # Deterministic parameter init (Glorot-like scale).
    params = {
        "w1": jax.random.normal(k_w1, (IN_CHANNELS, HIDDEN), dtype=jnp.float32)
        * (1.0 / jnp.sqrt(IN_CHANNELS)),
        "b1": jnp.zeros((HIDDEN,), dtype=jnp.float32),
        "w2": jax.random.normal(k_w2, (HIDDEN, OUT_CHANNELS), dtype=jnp.float32)
        * (1.0 / jnp.sqrt(HIDDEN)),
        "b2": jnp.zeros((OUT_CHANNELS,), dtype=jnp.float32),
        "wc": jax.random.normal(k_wc, (2 * OUT_CHANNELS, 1), dtype=jnp.float32)
        * (1.0 / jnp.sqrt(2 * OUT_CHANNELS)),
        "bc": jnp.zeros((1,), dtype=jnp.float32),
    }

    logits, loss = no_cross_gcn_encoder_forward(
        params, vector_tensor, edge_index, article1_idx, article2_idx)
    logits = jax.block_until_ready(logits)

    assert logits.shape == (P, 1)
    assert logits.dtype == jnp.float32
    assert bool(jnp.all(jnp.isfinite(logits)))

    # Validate against a pure-JAX f32 reference (loose tolerance: A_hat / XW are bf16).
    ref = reference_forward(params, vector_tensor, edge_index, article1_idx, article2_idx)
    max_err = float(jnp.max(jnp.abs(logits - ref)))
    assert max_err < 0.2, f"max |pallas - reference| = {max_err}"

    # Exercise the labels / BCE-with-logits branch once.
    labels = (jax.random.uniform(jax.random.PRNGKey(1), (P,)) > 0.5).astype(jnp.float32)
    _, loss = no_cross_gcn_encoder_forward(
        params, vector_tensor, edge_index, article1_idx, article2_idx, labels)
    loss = jax.block_until_ready(loss)
    assert bool(jnp.isfinite(loss))

    # TODO(synk): training-mode Dropout(0.1) is declared in the module but never
    # applied in forward(), so it is intentionally not implemented here.
    print("KERNEL_OK")
</pallas_src>

<mosaic_0001>
module attributes {stable_mosaic.version = 11 : i64} {
  func.func @_gcn_layer_kernel(%arg0: i32, %arg1: memref<512x1024xbf16, #tpu.memory_space<vmem>>, %arg2: memref<1024x128xf32, #tpu.memory_space<vmem>>, %arg3: memref<128x128xf32, #tpu.memory_space<vmem>>, %arg4: memref<1x128xf32, #tpu.memory_space<vmem>>, %arg5: memref<512x128xf32, #tpu.memory_space<vmem>>) attributes {dimension_semantics = [#tpu.dimension_semantics<parallel>], iteration_bounds = array<i64: 2>, scalar_prefetch = 0 : i64, scratch_operands = 0 : i64, tpu.core_type = #tpu.core_type<tc>, window_params = [{transform_indices = @transform_0, window_bounds = array<i64: 512, 1024>}, {pipeline_mode = #tpu.pipeline_mode<synchronous>, transform_indices = @transform_1, window_bounds = array<i64: 1024, 128>}, {pipeline_mode = #tpu.pipeline_mode<synchronous>, transform_indices = @transform_2, window_bounds = array<i64: 128, 128>}, {pipeline_mode = #tpu.pipeline_mode<synchronous>, transform_indices = @transform_3, window_bounds = array<i64: 1, 128>}, {transform_indices = @transform_4, window_bounds = array<i64: 512, 128>}]} {
    %c0 = arith.constant 0 : index
    %c0_0 = arith.constant 0 : index
    %0 = vector.load %arg2[%c0, %c0_0] : memref<1024x128xf32, #tpu.memory_space<vmem>>, vector<1024x128xf32>
    %c0_1 = arith.constant 0 : index
    %c0_2 = arith.constant 0 : index
    %1 = vector.load %arg3[%c0_1, %c0_2] : memref<128x128xf32, #tpu.memory_space<vmem>>, vector<128x128xf32>
    %cst = arith.constant dense<0.000000e+00> : vector<1024x128xf32>
    %2 = tpu.matmul %0, %1, %cst {dimension_numbers = #tpu.dot_dimension_numbers<[1], [0], [0], [1], [0, 0, 1, 1], [], []>} : vector<1024x128xf32>, vector<128x128xf32>, vector<1024x128xf32> -> vector<1024x128xf32>
    %c0_3 = arith.constant 0 : index
    %c0_4 = arith.constant 0 : index
    %3 = vector.load %arg1[%c0_3, %c0_4] : memref<512x1024xbf16, #tpu.memory_space<vmem>>, vector<512x1024xbf16>
    %4 = arith.truncf %2 : vector<1024x128xf32> to vector<1024x128xbf16>
    %cst_5 = arith.constant dense<0.000000e+00> : vector<512x128xf32>
    %5 = tpu.matmul %3, %4, %cst_5 {dimension_numbers = #tpu.dot_dimension_numbers<[1], [0], [0], [1], [0, 0, 1, 1], [], []>} : vector<512x1024xbf16>, vector<1024x128xbf16>, vector<512x128xf32> -> vector<512x128xf32>
    %c0_6 = arith.constant 0 : index
    %c0_7 = arith.constant 0 : index
    %6 = vector.load %arg4[%c0_6, %c0_7] : memref<1x128xf32, #tpu.memory_space<vmem>>, vector<1x128xf32>
    %7 = vector.broadcast %6 : vector<1x128xf32> to vector<512x128xf32>
    %8 = arith.addf %5, %7 : vector<512x128xf32>
    %cst_8 = arith.constant 0.000000e+00 : f32
    %9 = vector.broadcast %cst_8 : f32 to vector<512x128xf32>
    %10 = arith.maximumf %8, %9 : vector<512x128xf32>
    %c0_9 = arith.constant 0 : index
    %c0_10 = arith.constant 0 : index
    %11 = vector.load %arg5[%c0_9, %c0_10] : memref<512x128xf32, #tpu.memory_space<vmem>>, vector<512x128xf32>
    tpu.vector_store %arg5[%c0_9, %c0_10], %10 {strides = array<i32>} : memref<512x128xf32, #tpu.memory_space<vmem>>, vector<512x128xf32>,
    return
  }
  func.func @transform_0(%arg0: i32) -> (i32, i32) {
    %c0_i32 = arith.constant 0 : i32
    %c0_i32_0 = arith.constant 0 : i32
    return %arg0, %c0_i32 : i32, i32
  }
  func.func @transform_1(%arg0: i32) -> (i32, i32) {
    %c0_i32 = arith.constant 0 : i32
    %c0_i32_0 = arith.constant 0 : i32
    %c0_i32_1 = arith.constant 0 : i32
    return %c0_i32, %c0_i32_0 : i32, i32
  }
  func.func @transform_2(%arg0: i32) -> (i32, i32) {
    %c0_i32 = arith.constant 0 : i32
    %c0_i32_0 = arith.constant 0 : i32
    %c0_i32_1 = arith.constant 0 : i32
    return %c0_i32, %c0_i32_0 : i32, i32
  }
  func.func @transform_3(%arg0: i32) -> (i32, i32) {
    %c0_i32 = arith.constant 0 : i32
    %c0_i32_0 = arith.constant 0 : i32
    %c0_i32_1 = arith.constant 0 : i32
    return %c0_i32, %c0_i32_0 : i32, i32
  }
  func.func @transform_4(%arg0: i32) -> (i32, i32) {
    %c0_i32 = arith.constant 0 : i32
    %c0_i32_0 = arith.constant 0 : i32
    return %arg0, %c0_i32 : i32, i32
  }
}

</mosaic_0001>

<llo_original>
// kernel: tpu_custom_call.1
$region0: #{tpu_custom_call.1}
  #allocation0 [shape = 'u32[]', space=smem, size = 0x4, offset = 0x4, fixed_abs, tag = 'smem constant byte address 0x4 - core index']
  #allocation1 [shape = 'u32[144,128]{1,0:T(1,128)}', space=vmem, size = 0x12000, scoped, tag = 'internal scratch']
  %s0 = inlined_call_operand.hbm [shape: bf16[1024,1024], index: 0, kind: input, shape index: {}]
  %s1 = inlined_call_operand.hbm [shape: f32[1024,128], index: 1, kind: input, shape index: {}]
  %s2 = inlined_call_operand.hbm [shape: f32[128,128], index: 2, kind: input, shape index: {}]
  %s3 = inlined_call_operand.hbm [shape: f32[1,128], index: 3, kind: input, shape index: {}]
  %s4 = inlined_call_operand.hbm [shape: f32[1024,128], index: 4, kind: output, shape index: {}]
  %s5 = sld [smem:[#allocation0]]
  $region65: #{tpu_custom_call.1} parent=0
    _
  %s7 = ssub.s32 1, %s5
  %s8 = scalar_select 0, %s7, %s5
  $region1: #{tpu_custom_call.1} parent=0
    #allocation2 [shape = 'u8[2097152]{0}', space=vmem, size = 0x200000, scoped, tag = 'input window, operand 0']
    #allocation3 [shape = 's32[2]{0}', space=sflag, size = 0x8, scoped, tag = 'scoped memory for tpu_custom_call.1']
    #allocation4 [shape = 's32[2]{0}', space=sflag, size = 0x8, scoped, tag = 'scoped memory for tpu_custom_call.1']
    #allocation5 [shape = 'u8[524288]{0}', space=vmem, size = 0x80000, scoped, tag = 'input window, operand 1, single buffered']
    #allocation6 [shape = 's32[1]{0}', space=sflag, size = 0x4, scoped, tag = 'scoped memory for tpu_custom_call.1']
    #allocation7 [shape = 'u8[65536]{0}', space=vmem, size = 0x10000, scoped, tag = 'input window, operand 2, single buffered']
    #allocation8 [shape = 'u8[512]{0}', space=vmem, size = 0x400, scoped, tag = 'input window, operand 3, single buffered']
    #allocation9 [shape = 's32[1]{0}', space=sflag, size = 0x4, scoped, tag = 'scoped memory for tpu_custom_call.1']
    #allocation10 [shape = 'u8[524288]{0}', space=vmem, size = 0x80000, scoped, tag = 'output window, operand 0']
    %9 = vsyncpa [#allocation3], 0
    %s10 = scalar_lea.sflag [#allocation3], 1
    %11 = vsyncpa %s10, 0
    %12 = vsyncpa [#allocation6], 0
    %13 = vsyncpa [#allocation9], 0
    %14 = vsyncpa [#allocation4], 0
    %s15 = scalar_lea.sflag [#allocation4], 1
    %16 = vsyncpa %s15, 0
    loop: start=0, step=1, limit=4
    $region2: #{tpu_custom_call.1} parent=1 // loop_pre_header
      _
    $region3: #{tpu_custom_call.1} parent=1 // loop_header
      %s18 = sphi 0, %s22
      %p19 = scmp.ge.s32.totalorder %s18, 4
      %s28 = sphi 0, %s30
      %s31 = sphi 0, %s28
      %s32 = sphi 0, %s31
      %s48 = sphi 0, %s32
      %s52 = sphi 0, %s52
      %s54 = sphi 0, %s52
      %s55 = sphi 0, %s54
      %s69 = sphi 0, %s55
      %s73 = sphi 0, %s73
      %s75 = sphi 0, %s73
      %s76 = sphi 0, %s75
      %s90 = sphi 0, %s76
      %s94 = sphi 0, %s94
      %s96 = sphi 0, %s94
      %s97 = sphi 0, %s96
      %s111 = sphi 0, %s97
      %s117 = sphi 0, %s119
      %s120 = sphi 0, %s117
      %s121 = sphi 0, %s120
      %s137 = sphi 0, %s121
    $region4: #{tpu_custom_call.1} parent=1 // loop_header_branch
      %21 = sbr.rel (%p19) target = $region8
    $region5: #{tpu_custom_call.1} parent=1 // loop_body
      %s23 = ssub.s32 %s18, 1
      %s24 = ssub.s32 %s18, 2
      %s25 = sadd.s32 %s18, 1
      %s26 = ssub.s32 %s18, %s25
      %p27 = scmp.eq.s32.totalorder %s26, 0
      %s29 = sadd.s32 %s28, 1
      %s30 = scalar_select %p27, %s28, %s29
      %p33 = pneg %p27
      %p34 = scmp.eq.s32.totalorder %s18, 1
      %p35 = por %p33, %p34
      %p36 = scmp.ne.s32.totalorder %s28, %s31
      %p37 = scmp.eq.s32.totalorder %s18, 0
      %p38 = por %p36, %p37
      %p39 = scmp.ne.s32.totalorder %s28, %s31
      %p40 = scmp.eq.s32.totalorder %s23, 1
      %p41 = por %p39, %p40
      %p42 = scmp.ne.s32.totalorder %s31, %s32
      %p43 = scmp.eq.s32.totalorder %s23, 0
      %p44 = por %p42, %p43
      %p45 = scmp.ne.s32.totalorder %s31, %s32
      %p46 = scmp.eq.s32.totalorder %s24, 1
      %p47 = por %p45, %p46
      %p49 = scmp.ne.s32.totalorder %s32, %s48
      %p50 = scmp.eq.s32.totalorder %s24, 0
      %p51 = por %p49, %p50
      %s53 = sadd.s32 %s52, 1
      %p56 = scmp.eq.s32.totalorder %s18, 1
      %p57 = scmp.ne.s32.totalorder %s52, %s54
      %p58 = scmp.eq.s32.totalorder %s18, 0
      %p59 = por %p57, %p58
      %p60 = scmp.ne.s32.totalorder %s52, %s54
      %p61 = scmp.eq.s32.totalorder %s23, 1
      %p62 = por %p60, %p61
      %p63 = scmp.ne.s32.totalorder %s54, %s55
      %p64 = scmp.eq.s32.totalorder %s23, 0
      %p65 = por %p63, %p64
      %p66 = scmp.ne.s32.totalorder %s54, %s55
      %p67 = scmp.eq.s32.totalorder %s24, 1
      %p68 = por %p66, %p67
      %p70 = scmp.ne.s32.totalorder %s55, %s69
      %p71 = scmp.eq.s32.totalorder %s24, 0
      %p72 = por %p70, %p71
      %s74 = sadd.s32 %s73, 1
      %p77 = scmp.eq.s32.totalorder %s18, 1
      %p78 = scmp.ne.s32.totalorder %s73, %s75
      %p79 = scmp.eq.s32.totalorder %s18, 0
      %p80 = por %p78, %p79
      %p81 = scmp.ne.s32.totalorder %s73, %s75
      %p82 = scmp.eq.s32.totalorder %s23, 1
      %p83 = por %p81, %p82
      %p84 = scmp.ne.s32.totalorder %s75, %s76
      %p85 = scmp.eq.s32.totalorder %s23, 0
      %p86 = por %p84, %p85
      %p87 = scmp.ne.s32.totalorder %s75, %s76
      %p88 = scmp.eq.s32.totalorder %s24, 1
      %p89 = por %p87, %p88
      %p91 = scmp.ne.s32.totalorder %s76, %s90
      %p92 = scmp.eq.s32.totalorder %s24, 0
      %p93 = por %p91, %p92
      %s95 = sadd.s32 %s94, 1
      %p98 = scmp.eq.s32.totalorder %s18, 1
      %p99 = scmp.ne.s32.totalorder %s94, %s96
      %p100 = scmp.eq.s32.totalorder %s18, 0
      %p101 = por %p99, %p100
      %p102 = scmp.ne.s32.totalorder %s94, %s96
      %p103 = scmp.eq.s32.totalorder %s23, 1
      %p104 = por %p102, %p103
      %p105 = scmp.ne.s32.totalorder %s96, %s97
      %p106 = scmp.eq.s32.totalorder %s23, 0
      %p107 = por %p105, %p106
      %p108 = scmp.ne.s32.totalorder %s96, %s97
      %p109 = scmp.eq.s32.totalorder %s24, 1
      %p110 = por %p108, %p109
      %p112 = scmp.ne.s32.totalorder %s97, %s111
      %p113 = scmp.eq.s32.totalorder %s24, 0
      %p114 = por %p112, %p113
      %s115 = ssub.s32 %s18, %s25
      %p116 = scmp.eq.s32.totalorder %s115, 0
      %s118 = sadd.s32 %s117, 1
      %s119 = scalar_select %p116, %s117, %s118
      %p122 = pneg %p116
      %p123 = scmp.eq.s32.totalorder %s18, 1
      %p124 = por %p122, %p123
      %p125 = scmp.ne.s32.totalorder %s117, %s120
      %p126 = scmp.eq.s32.totalorder %s18, 0
      %p127 = por %p125, %p126
      %p128 = scmp.ne.s32.totalorder %s117, %s120
      %p129 = scmp.eq.s32.totalorder %s23, 1
      %p130 = por %p128, %p129
      %p131 = scmp.ne.s32.totalorder %s120, %s121
      %p132 = scmp.eq.s32.totalorder %s23, 0
      %p133 = por %p131, %p132
      %p134 = scmp.ne.s32.totalorder %s120, %s121
      %p135 = scmp.eq.s32.totalorder %s24, 1
      %p136 = por %p134, %p135
      %p138 = scmp.ne.s32.totalorder %s121, %s137
      %p139 = scmp.eq.s32.totalorder %s24, 0
      %p140 = por %p138, %p139
      %p141 = scmp.le.s32.totalorder 1, %s18
      %p142 = scmp.lt.s32.totalorder %s18, 3
      %p143 = pnand %p141, %p142
      %p144 = pneg %p143
      // Predicated region
      $region9: #{tpu_custom_call.1} parent=5 // pred_check
        _
      $region10: #{tpu_custom_call.1} parent=5 // pred_check_branch
        %146 = sbr.rel (%p143) target = $region12
      $region11: #{tpu_custom_call.1} parent=5 // pred_region
        %s147 = ssub.s32 %s18, 1
        // Predicated region
        $region13: #{tpu_custom_call.1} parent=11 // pred_check
          %p148 = pneg %p65
        $region14: #{tpu_custom_call.1} parent=11 // pred_check_branch
          %150 = sbr.rel (%p148) target = $region16
        $region15: #{tpu_custom_call.1} parent=11 // pred_region
          %s152 = ssub.s32 16384, 16384
          %153 = vsyncadd [#allocation6], %s152
          %s154 = sshll.u32 [#allocation5], 4
          %s155 = int_to_ptr.vmem [resolvable:$true] %s154
          %160 = dma.hbm_to_vmem [thread:$0]  %s1, 16384, %s155, [#allocation6], 128, 128, 8
        $region16: #{tpu_custom_call.1} parent=11 // pred_fallthru
          _
        // Predicated region
        $region17: #{tpu_custom_call.1} parent=11 // pred_check
          %p161 = pneg %p86
        $region18: #{tpu_custom_call.1} parent=11 // pred_check_branch
          %163 = sbr.rel (%p161) target = $region20
        $region19: #{tpu_custom_call.1} parent=11 // pred_region
          %s165 = ssub.s32 2048, 2048
          %166 = vsyncadd [#allocation6], %s165
          %s167 = sshll.u32 [#allocation7], 4
          %s168 = int_to_ptr.vmem [resolvable:$true] %s167
          %173 = dma.hbm_to_vmem [thread:$0]  %s2, 2048, %s168, [#allocation6], 128, 128, 8
        $region20: #{tpu_custom_call.1} parent=11 // pred_fallthru
          _
        // Predicated region
        $region21: #{tpu_custom_call.1} parent=11 // pred_check
          %p174 = pneg %p107
        $region22: #{tpu_custom_call.1} parent=11 // pred_check_branch
          %176 = sbr.rel (%p174) target = $region24
        $region23: #{tpu_custom_call.1} parent=11 // pred_region
          %s178 = ssub.s32 16, 16
          %179 = vsyncadd [#allocation9], %s178
          %s181 = sshll.u32 [#allocation8], 4
          %s182 = int_to_ptr.vmem [resolvable:$true] %s181
          %184 = dma.hbm_to_vmem [thread:$0]  %s3, 16, %s182, [#allocation9]
        $region24: #{tpu_custom_call.1} parent=11 // pred_fallthru
          _
      $region12: #{tpu_custom_call.1} parent=5 // pred_fallthru
        _
      %p185 = scmp.lt.s32.totalorder %s18, 2
      // Predicated region
      $region25: #{tpu_custom_call.1} parent=5 // pred_check
        %p186 = pneg %p185
      $region26: #{tpu_custom_call.1} parent=5 // pred_check_branch
        %188 = sbr.rel (%p186) target = $region28
      $region27: #{tpu_custom_call.1} parent=5 // pred_region
        // Predicated region
        $region29: #{tpu_custom_call.1} parent=27 // pred_check
          %p189 = pneg %p38
        $region30: #{tpu_custom_call.1} parent=27 // pred_check_branch
          %191 = sbr.rel (%p189) target = $region32
        $region31: #{tpu_custom_call.1} parent=27 // pred_region
          %s192 = sand.u32 %s28, 1
          %s193 = scalar_lea.sflag [#allocation3], %s192
          %s194 = sand.u32 %s28, 1
          %s195 = smul.addr %s194, 2048
          %s196 = scalar_lea.vmem [#allocation2], %s195
          %s197 = smul.u32 64, %s18
          %s199 = ssub.s32 32768, 32768
          %200 = vsyncadd %s193, %s199
          %s201 = smul.addr %s197, 8
          %s202 = smul.addr %s201, 64
          %s203 = scalar_lea.hbm %s0, %s202
          %s204 = sshll.u32 %s196, 4
          %s205 = int_to_ptr.vmem [resolvable:$true] %s204
          %210 = dma.hbm_to_vmem [thread:$0]  %s203, 32768, %s205, %s193, 512, 512, 32
        $region32: #{tpu_custom_call.1} parent=27 // pred_fallthru
          _
      $region28: #{tpu_custom_call.1} parent=5 // pred_fallthru
        _
      %p211 = scmp.le.s32.totalorder 1, %s18
      %p212 = scmp.lt.s32.totalorder %s18, 3
      %p213 = pnand %p211, %p212
      %p214 = pneg %p213
      // Predicated region
      $region33: #{tpu_custom_call.1} parent=5 // pred_check
        _
      $region34: #{tpu_custom_call.1} parent=5 // pred_check_branch
        %216 = sbr.rel (%p213) target = $region36
      $region35: #{tpu_custom_call.1} parent=5 // pred_region
        %s217 = ssub.s32 %s18, 1
        %s218 = sand.u32 %s31, 1
        %s219 = scalar_lea.sflag [#allocation3], %s218
        %s220 = sand.u32 %s31, 1
        %s221 = smul.addr %s220, 2048
        %s222 = scalar_lea.vmem [#allocation2], %s221
        // Predicated region
        $region37: #{tpu_custom_call.1} parent=35 // pred_check
          %p223 = pneg %p44
        $region38: #{tpu_custom_call.1} parent=35 // pred_check_branch
          %225 = sbr.rel (%p223) target = $region40
        $region39: #{tpu_custom_call.1} parent=35 // pred_region
          %226 = dma.done %s219, 32768
        $region40: #{tpu_custom_call.1} parent=35 // pred_fallthru
          _
        // Predicated region
        $region41: #{tpu_custom_call.1} parent=35 // pred_check
          %p227 = pneg %p65
        $region42: #{tpu_custom_call.1} parent=35 // pred_check_branch
          %229 = sbr.rel (%p227) target = $region44
        $region43: #{tpu_custom_call.1} parent=35 // pred_region
          %230 = dma.done [#allocation6], 16384
        $region44: #{tpu_custom_call.1} parent=35 // pred_fallthru
          _
        // Predicated region
        $region45: #{tpu_custom_call.1} parent=35 // pred_check
          %p231 = pneg %p86
        $region46: #{tpu_custom_call.1} parent=35 // pred_check_branch
          %233 = sbr.rel (%p231) target = $region48
        $region47: #{tpu_custom_call.1} parent=35 // pred_region
          %234 = dma.done [#allocation6], 2048
        $region48: #{tpu_custom_call.1} parent=35 // pred_fallthru
          _
        // Predicated region
        $region49: #{tpu_custom_call.1} parent=35 // pred_check
          %p235 = pneg %p107
        $region50: #{tpu_custom_call.1} parent=35 // pred_check_branch
          %237 = sbr.rel (%p235) target = $region52
        $region51: #{tpu_custom_call.1} parent=35 // pred_region
          %238 = dma.done [#allocation9], 16
        $region52: #{tpu_custom_call.1} parent=35 // pred_fallthru
          _
        %s239 = sand.u32 %s31, 1
        %s240 = scalar_lea.sflag [#allocation3], %s239
        %s241 = sand.u32 %s31, 1
        %s242 = smul.addr %s241, 2048
        %s243 = scalar_lea.vmem [#allocation2], %s242
        %p244 = pneg %p44
        %p245 = pneg %p41
        %p246 = pneg %p65
        %p247 = pneg %p62
        %p248 = pneg %p86
        %p249 = pneg %p83
        %p250 = pneg %p107
        %p251 = pneg %p104
        %p252 = pneg %p133
        %p253 = pneg %p130
        %s254 = sand.u32 %s120, 1
        %s255 = scalar_lea.sflag [#allocation4], %s254
        %s256 = sand.u32 %s120, 1
        %s257 = smul.addr %s256, 512
        %s258 = scalar_lea.vmem [#allocation10], %s257
        %s259 = smul.u32 64, %s23
        %s260 = smul.u32 64, %s23
        %v262 = vld [vmem:[#allocation5] sm:$0xff]
        %v263 = vld [vmem:[#allocation5 + $0x8] sm:$0xff]
        %v264 = vld [vmem:[#allocation5 + $0x10] sm:$0xff]
        %v265 = vld [vmem:[#allocation5 + $0x18] sm:$0xff]
        %v266 = vld [vmem:[#allocation5 + $0x20] sm:$0xff]
        %v267 = vld [vmem:[#allocation5 + $0x28] sm:$0xff]
        %v268 = vld [vmem:[#allocation5 + $0x30] sm:$0xff]
        %v269 = vld [vmem:[#allocation5 + $0x38] sm:$0xff]
        %v270 = vld [vmem:[#allocation5 + $0x40] sm:$0xff]
        %v271 = vld [vmem:[#allocation5 + $0x48] sm:$0xff]
        %v272 = vld [vmem:[#allocation5 + $0x50] sm:$0xff]
        %v273 = vld [vmem:[#allocation5 + $0x58] sm:$0xff]
        %v274 = vld [vmem:[#allocation5 + $0x60] sm:$0xff]
        %v275 = vld [vmem:[#allocation5 + $0x68] sm:$0xff]
        %v276 = vld [vmem:[#allocation5 + $0x70] sm:$0xff]
        %v277 = vld [vmem:[#allocation5 + $0x78] sm:$0xff]
        %v278 = vld [vmem:[#allocation5 + $0x80] sm:$0xff]
        %v279 = vld [vmem:[#allocation5 + $0x88] sm:$0xff]
        %v280 = vld [vmem:[#allocation5 + $0x90] sm:$0xff]
        %v281 = vld [vmem:[#allocation5 + $0x98] sm:$0xff]
        %v282 = vld [vmem:[#allocation5 + $0xa0] sm:$0xff]
        %v283 = vld [vmem:[#allocation5 + $0xa8] sm:$0xff]
        %v284 = vld [vmem:[#allocation5 + $0xb0] sm:$0xff]
        %v285 = vld [vmem:[#allocation5 + $0xb8] sm:$0xff]
        %v286 = vld [vmem:[#allocation5 + $0xc0] sm:$0xff]
        %v287 = vld [vmem:[#allocation5 + $0xc8] sm:$0xff]
        %v288 = vld [vmem:[#allocation5 + $0xd0] sm:$0xff]
        %v289 = vld [vmem:[#allocation5 + $0xd8] sm:$0xff]
        %v290 = vld [vmem:[#allocation5 + $0xe0] sm:$0xff]
        %v291 = vld [vmem:[#allocation5 + $0xe8] sm:$0xff]
        %v292 = vld [vmem:[#allocation5 + $0xf0] sm:$0xff]
        %v293 = vld [vmem:[#allocation5 + $0xf8] sm:$0xff]
        %v294 = vld [vmem:[#allocation5 + $0x100] sm:$0xff]
        %v295 = vld [vmem:[#allocation5 + $0x108] sm:$0xff]
        %v296 = vld [vmem:[#allocation5 + $0x110] sm:$0xff]
        %v297 = vld [vmem:[#allocation5 + $0x118] sm:$0xff]
        %v298 = vld [vmem:[#allocation5 + $0x120] sm:$0xff]
        %v299 = vld [vmem:[#allocation5 + $0x128] sm:$0xff]
        %v300 = vld [vmem:[#allocation5 + $0x130] sm:$0xff]
        %v301 = vld [vmem:[#allocation5 + $0x138] sm:$0xff]
        %v302 = vld [vmem:[#allocation5 + $0x140] sm:$0xff]
        %v303 = vld [vmem:[#allocation5 + $0x148] sm:$0xff]
        %v304 = vld [vmem:[#allocation5 + $0x150] sm:$0xff]
        %v305 = vld [vmem:[#allocation5 + $0x158] sm:$0xff]
        %v306 = vld [vmem:[#allocation5 + $0x160] sm:$0xff]
        %v307 = vld [vmem:[#allocation5 + $0x168] sm:$0xff]
        %v308 = vld [vmem:[#allocation5 + $0x170] sm:$0xff]
        %v309 = vld [vmem:[#allocation5 + $0x178] sm:$0xff]
        %v310 = vld [vmem:[#allocation5 + $0x180] sm:$0xff]
        %v311 = vld [vmem:[#allocation5 + $0x188] sm:$0xff]
        %v312 = vld [vmem:[#allocation5 + $0x190] sm:$0xff]
        %v313 = vld [vmem:[#allocation5 + $0x198] sm:$0xff]
        %v314 = vld [vmem:[#allocation5 + $0x1a0] sm:$0xff]
        %v315 = vld [vmem:[#allocation5 + $0x1a8] sm:$0xff]
        %v316 = vld [vmem:[#allocation5 + $0x1b0] sm:$0xff]
        %v317 = vld [vmem:[#allocation5 + $0x1b8] sm:$0xff]
        %v318 = vld [vmem:[#allocation5 + $0x1c0] sm:$0xff]
        %v319 = vld [vmem:[#allocation5 + $0x1c8] sm:$0xff]
        %v320 = vld [vmem:[#allocation5 + $0x1d0] sm:$0xff]
        %v321 = vld [vmem:[#allocation5 + $0x1d8] sm:$0xff]
        %v322 = vld [vmem:[#allocation5 + $0x1e0] sm:$0xff]
        %v323 = vld [vmem:[#allocation5 + $0x1e8] sm:$0xff]
        %v324 = vld [vmem:[#allocation5 + $0x1f0] sm:$0xff]
        %v325 = vld [vmem:[#allocation5 + $0x1f8] sm:$0xff]
        %v326 = vld [vmem:[#allocation5 + $0x200] sm:$0xff]
        %v327 = vld [vmem:[#allocation5 + $0x208] sm:$0xff]
        %v328 = vld [vmem:[#allocation5 + $0x210] sm:$0xff]
        %v329 = vld [vmem:[#allocation5 + $0x218] sm:$0xff]
        %v330 = vld [vmem:[#allocation5 + $0x220] sm:$0xff]
        %v331 = vld [vmem:[#allocation5 + $0x228] sm:$0xff]
        %v332 = vld [vmem:[#allocation5 + $0x230] sm:$0xff]
        %v333 = vld [vmem:[#allocation5 + $0x238] sm:$0xff]
        %v334 = vld [vmem:[#allocation5 + $0x240] sm:$0xff]
        %v335 = vld [vmem:[#allocation5 + $0x248] sm:$0xff]
        %v336 = vld [vmem:[#allocation5 + $0x250] sm:$0xff]
        %v337 = vld [vmem:[#allocation5 + $0x258] sm:$0xff]
        %v338 = vld [vmem:[#allocation5 + $0x260] sm:$0xff]
        %v339 = vld [vmem:[#allocation5 + $0x268] sm:$0xff]
        %v340 = vld [vmem:[#allocation5 + $0x270] sm:$0xff]
        %v341 = vld [vmem:[#allocation5 + $0x278] sm:$0xff]
        %v342 = vld [vmem:[#allocation5 + $0x280] sm:$0xff]
        %v343 = vld [vmem:[#allocation5 + $0x288] sm:$0xff]
        %v344 = vld [vmem:[#allocation5 + $0x290] sm:$0xff]
        %v345 = vld [vmem:[#allocation5 + $0x298] sm:$0xff]
        %v346 = vld [vmem:[#allocation5 + $0x2a0] sm:$0xff]
        %v347 = vld [vmem:[#allocation5 + $0x2a8] sm:$0xff]
        %v348 = vld [vmem:[#allocation5 + $0x2b0] sm:$0xff]
        %v349 = vld [vmem:[#allocation5 + $0x2b8] sm:$0xff]
        %v350 = vld [vmem:[#allocation5 + $0x2c0] sm:$0xff]
        %v351 = vld [vmem:[#allocation5 + $0x2c8] sm:$0xff]
        %v352 = vld [vmem:[#allocation5 + $0x2d0] sm:$0xff]
        %v353 = vld [vmem:[#allocation5 + $0x2d8] sm:$0xff]
        %v354 = vld [vmem:[#allocation5 + $0x2e0] sm:$0xff]
        %v355 = vld [vmem:[#allocation5 + $0x2e8] sm:$0xff]
        %v356 = vld [vmem:[#allocation5 + $0x2f0] sm:$0xff]
        %v357 = vld [vmem:[#allocation5 + $0x2f8] sm:$0xff]
        %v358 = vld [vmem:[#allocation5 + $0x300] sm:$0xff]
        %v359 = vld [vmem:[#allocation5 + $0x308] sm:$0xff]
        %v360 = vld [vmem:[#allocation5 + $0x310] sm:$0xff]
        %v361 = vld [vmem:[#allocation5 + $0x318] sm:$0xff]
        %v362 = vld [vmem:[#allocation5 + $0x320] sm:$0xff]
        %v363 = vld [vmem:[#allocation5 + $0x328] sm:$0xff]
        %v364 = vld [vmem:[#allocation5 + $0x330] sm:$0xff]
        %v365 = vld [vmem:[#allocation5 + $0x338] sm:$0xff]
        %v366 = vld [vmem:[#allocation5 + $0x340] sm:$0xff]
        %v367 = vld [vmem:[#allocation5 + $0x348] sm:$0xff]
        %v368 = vld [vmem:[#allocation5 + $0x350] sm:$0xff]
        %v369 = vld [vmem:[#allocation5 + $0x358] sm:$0xff]
        %v370 = vld [vmem:[#allocation5 + $0x360] sm:$0xff]
        %v371 = vld [vmem:[#allocation5 + $0x368] sm:$0xff]
        %v372 = vld [vmem:[#allocation5 + $0x370] sm:$0xff]
        %v373 = vld [vmem:[#allocation5 + $0x378] sm:$0xff]
        %v374 = vld [vmem:[#allocation5 + $0x380] sm:$0xff]
        %v375 = vld [vmem:[#allocation5 + $0x388] sm:$0xff]
        %v376 = vld [vmem:[#allocation5 + $0x390] sm:$0xff]
        %v377 = vld [vmem:[#allocation5 + $0x398] sm:$0xff]
        %v378 = vld [vmem:[#allocation5 + $0x3a0] sm:$0xff]
        %v379 = vld [vmem:[#allocation5 + $0x3a8] sm:$0xff]
        %v380 = vld [vmem:[#allocation5 + $0x3b0] sm:$0xff]
        %v381 = vld [vmem:[#allocation5 + $0x3b8] sm:$0xff]
        %v382 = vld [vmem:[#allocation5 + $0x3c0] sm:$0xff]
        %v383 = vld [vmem:[#allocation5 + $0x3c8] sm:$0xff]
        %v384 = vld [vmem:[#allocation5 + $0x3d0] sm:$0xff]
        %v385 = vld [vmem:[#allocation5 + $0x3d8] sm:$0xff]
        %v386 = vld [vmem:[#allocation5 + $0x3e0] sm:$0xff]
        %v387 = vld [vmem:[#allocation5 + $0x3e8] sm:$0xff]
        %v388 = vld [vmem:[#allocation5 + $0x3f0] sm:$0xff]
        %v389 = vld [vmem:[#allocation5 + $0x3f8] sm:$0xff]
        %v390 = vld [vmem:[#allocation7] sm:$0xff]
        %v391 = vld [vmem:[#allocation7 + $0x8] sm:$0xff]
        %v392 = vld [vmem:[#allocation7 + $0x10] sm:$0xff]
        %v393 = vld [vmem:[#allocation7 + $0x18] sm:$0xff]
        %v394 = vld [vmem:[#allocation7 + $0x20] sm:$0xff]
        %v395 = vld [vmem:[#allocation7 + $0x28] sm:$0xff]
        %v396 = vld [vmem:[#allocation7 + $0x30] sm:$0xff]
        %v397 = vld [vmem:[#allocation7 + $0x38] sm:$0xff]
        %v398 = vld [vmem:[#allocation7 + $0x40] sm:$0xff]
        %v399 = vld [vmem:[#allocation7 + $0x48] sm:$0xff]
        %v400 = vld [vmem:[#allocation7 + $0x50] sm:$0xff]
        %v401 = vld [vmem:[#allocation7 + $0x58] sm:$0xff]
        %v402 = vld [vmem:[#allocation7 + $0x60] sm:$0xff]
        %v403 = vld [vmem:[#allocation7 + $0x68] sm:$0xff]
        %v404 = vld [vmem:[#allocation7 + $0x70] sm:$0xff]
        %v405 = vld [vmem:[#allocation7 + $0x78] sm:$0xff]
        %406 = vmatprep.subr.mxu0 0.0
        %407 = vmatpush1.msra.mxu0 %v390
        %408 = vmatprep.subr.mxu0 0.0
        %409 = vmatpush1.msra.mxu0 %v391
        %410 = vmatprep.subr.mxu0 0.0
        %411 = vmatpush1.msra.mxu0 %v392
        %412 = vmatprep.subr.mxu0 0.0
        %413 = vmatpush1.msra.mxu0 %v393
        %414 = vmatprep.subr.mxu0 0.0
        %415 = vmatpush1.msra.mxu0 %v394
        %416 = vmatprep.subr.mxu0 0.0
        %417 = vmatpush1.msra.mxu0 %v395
        %418 = vmatprep.subr.mxu0 0.0
        %419 = vmatpush1.msra.mxu0 %v396
        %420 = vmatprep.subr.mxu0 0.0
        %421 = vmatpush1.msra.mxu0 %v397
        %422 = vmatprep.subr.mxu0 0.0
        %423 = vmatpush1.msra.mxu0 %v398
        %424 = vmatprep.subr.mxu0 0.0
        %425 = vmatpush1.msra.mxu0 %v399
        %426 = vmatprep.subr.mxu0 0.0
        %427 = vmatpush1.msra.mxu0 %v400
        %428 = vmatprep.subr.mxu0 0.0
        %429 = vmatpush1.msra.mxu0 %v401
        %430 = vmatprep.subr.mxu0 0.0
        %431 = vmatpush1.msra.mxu0 %v402
        %432 = vmatprep.subr.mxu0 0.0
        %433 = vmatpush1.msra.mxu0 %v403
        %434 = vmatprep.subr.mxu0 0.0
        %435 = vmatpush1.msra.mxu0 %v404
        %436 = vmatprep.subr.mxu0 0.0
        %437 = vmatpush1.msra.mxu0 %v405
        %438 = vmatprep.subr.mxu0 0.0
        %439 = vmatpush1.msra.mxu0 0.0
        %440 = vmatprep.subr.mxu0 0.0
        %441 = vmatpush1.msra.mxu0 0.0
        %442 = vmatprep.subr.mxu0 0.0
        %443 = vmatpush1.msra.mxu0 0.0
        %444 = vmatprep.subr.mxu0 0.0
        %445 = vmatpush1.msra.mxu0 0.0
        %446 = vmatprep.subr.mxu0 0.0
        %447 = vmatpush1.msra.mxu0 0.0
        %448 = vmatprep.subr.mxu0 0.0
        %449 = vmatpush1.msra.mxu0 0.0
        %450 = vmatprep.subr.mxu0 0.0
        %451 = vmatpush1.msra.mxu0 0.0
        %452 = vmatprep.subr.mxu0 0.0
        %453 = vmatpush1.msra.mxu0 0.0
        %454 = vmatprep.subr.mxu0 0.0
        %455 = vmatpush1.msra.mxu0 0.0
        %456 = vmatprep.subr.mxu0 0.0
        %457 = vmatpush1.msra.mxu0 0.0
        %458 = vmatprep.subr.mxu0 0.0
        %459 = vmatpush1.msra.mxu0 0.0
        %460 = vmatprep.subr.mxu0 0.0
        %461 = vmatpush1.msra.mxu0 0.0
        %462 = vmatprep.subr.mxu0 0.0
        %463 = vmatpush1.msra.mxu0 0.0
        %464 = vmatprep.subr.mxu0 0.0
        %465 = vmatpush1.msra.mxu0 0.0
        %466 = vmatprep.subr.mxu0 0.0
        %467 = vmatpush1.msra.mxu0 0.0
        %468 = vmatprep.subr.mxu0 0.0
        %469 = vmatpush1.msra.mxu0 0.0
        %470 = vmatprep.mubr.f32.mxu0 0.0
        %471 = vmatmul.mubr.f32.gmra.mrb[0].mxu0 %v262
        %v472 = vpop.f32.mrb[0].mxu0
        %v473 = vadd.f32 0.0, %v472
        %v474 = vpop.f32.mrb[0].mxu0
        %475 = vmatprep.mubr.f32.mxu0 0.0
        %476 = vmatmul.mubr.f32.gmra.mrb[0].mxu0 %v263
        %v477 = vpop.f32.mrb[0].mxu0
        %v478 = vadd.f32 0.0, %v477
        %v479 = vpop.f32.mrb[0].mxu0
        %480 = vmatprep.mubr.f32.mxu0 0.0
        %481 = vmatmul.mubr.f32.gmra.mrb[0].mxu0 %v264
        %v482 = vpop.f32.mrb[0].mxu0
        %v483 = vadd.f32 0.0, %v482
        %v484 = vpop.f32.mrb[0].mxu0
        %485 = vmatprep.mubr.f32.mxu0 0.0
        %486 = vmatmul.mubr.f32.gmra.mrb[0].mxu0 %v265
        %v487 = vpop.f32.mrb[0].mxu0
        %v488 = vadd.f32 0.0, %v487
        %v489 = vpop.f32.mrb[0].mxu0
        %490 = vmatprep.mubr.f32.mxu0 0.0
        %491 = vmatmul.mubr.f32.gmra.mrb[0].mxu0 %v266
        %v492 = vpop.f32.mrb[0].mxu0
        %v493 = vadd.f32 0.0, %v492
        %v494 = vpop.f32.mrb[0].mxu0
        %495 = vmatprep.mubr.f32.mxu0 0.0
        %496 = vmatmul.mubr.f32.gmra.mrb[0].mxu0 %v267
        %v497 = vpop.f32.mrb[0].mxu0
        %v498 = vadd.f32 0.0, %v497
        %v499 = vpop.f32.mrb[0].mxu0
        %500 = vmatprep.mubr.f32.mxu0 0.0
        %501 = vmatmul.mubr.f32.gmra.mrb[0].mxu0 %v268
        %v502 = vpop.f32.mrb[0].mxu0
        %v503 = vadd.f32 0.0, %v502
        %v504 = vpop.f32.mrb[0].mxu0
        %505 = vmatprep.mubr.f32.mxu0 0.0
        %506 = vmatmul.mubr.f32.gmra.mrb[0].mxu0 %v269
        %v507 = vpop.f32.mrb[0].mxu0
        %v508 = vadd.f32 0.0, %v507
        %v509 = vpop.f32.mrb[0].mxu0
        %510 = vmatprep.mubr.f32.mxu0 0.0
        %511 = vmatmul.mubr.f32.gmra.mrb[0].mxu0 %v270
        %v512 = vpop.f32.mrb[0].mxu0
        %v513 = vadd.f32 0.0, %v512
        %v514 = vpop.f32.mrb[0].mxu0
        %515 = vmatprep.mubr.f32.mxu0 0.0
        %516 = vmatmul.mubr.f32.gmra.mrb[0].mxu0 %v271
        %v517 = vpop.f32.mrb[0].mxu0
        %v518 = vadd.f32 0.0, %v517
        %v519 = vpop.f32.mrb[0].mxu0
        %520 = vmatprep.mubr.f32.mxu0 0.0
        %521 = vmatmul.mubr.f32.gmra.mrb[0].mxu0 %v272
        %v522 = vpop.f32.mrb[0].mxu0
        %v523 = vadd.f32 0.0, %v522
        %v524 = vpop.f32.mrb[0].mxu0
        %525 = vmatprep.mubr.f32.mxu0 0.0
        %526 = vmatmul.mubr.f32.gmra.mrb[0].mxu0 %v273
        %v527 = vpop.f32.mrb[0].mxu0
        %v528 = vadd.f32 0.0, %v527
        %v529 = vpop.f32.mrb[0].mxu0
        %530 = vmatprep.mubr.f32.mxu0 0.0
        %531 = vmatmul.mubr.f32.gmra.mrb[0].mxu0 %v274
        %v532 = vpop.f32.mrb[0].mxu0
        %v533 = vadd.f32 0.0, %v532
        %v534 = vpop.f32.mrb[0].mxu0
        %535 = vmatprep.mubr.f32.mxu0 0.0
        %536 = vmatmul.mubr.f32.gmra.mrb[0].mxu0 %v275
        %v537 = vpop.f32.mrb[0].mxu0
        %v538 = vadd.f32 0.0, %v537
        %v539 = vpop.f32.mrb[0].mxu0
        %540 = vmatprep.mubr.f32.mxu0 0.0
        %541 = vmatmul.mubr.f32.gmra.mrb[0].mxu0 %v276
        %v542 = vpop.f32.mrb[0].mxu0
        %v543 = vadd.f32 0.0, %v542
        %v544 = vpop.f32.mrb[0].mxu0
        %545 = vmatprep.mubr.f32.mxu0 0.0
        %546 = vmatmul.mubr.f32.gmra.mrb[0].mxu0 %v277
        %v547 = vpop.f32.mrb[0].mxu0
        %v548 = vadd.f32 0.0, %v547
        %v549 = vpop.f32.mrb[0].mxu0
        %550 = vmatprep.mubr.f32.mxu0 0.0
        %551 = vmatmul.mubr.f32.gmra.mrb[0].mxu0 %v278
        %v552 = vpop.f32.mrb[0].mxu0
        %v553 = vadd.f32 0.0, %v552
        %v554 = vpop.f32.mrb[0].mxu0
        %555 = vmatprep.mubr.f32.mxu0 0.0
        %556 = vmatmul.mubr.f32.gmra.mrb[0].mxu0 %v279
        %v557 = vpop.f32.mrb[0].mxu0
        %v558 = vadd.f32 0.0, %v557
        %v559 = vpop.f32.mrb[0].mxu0
        %560 = vmatprep.mubr.f32.mxu0 0.0
        %561 = vmatmul.mubr.f32.gmra.mrb[0].mxu0 %v280
        %v562 = vpop.f32.mrb[0].mxu0
        %v563 = vadd.f32 0.0, %v562
        %v564 = vpop.f32.mrb[0].mxu0
        %565 = vmatprep.mubr.f32.mxu0 0.0
        %566 = vmatmul.mubr.f32.gmra.mrb[0].mxu0 %v281
        %v567 = vpop.f32.mrb[0].mxu0
        %v568 = vadd.f32 0.0, %v567
        %v569 = vpop.f32.mrb[0].mxu0
        %570 = vmatprep.mubr.f32.mxu0 0.0
        %571 = vmatmul.mubr.f32.gmra.mrb[0].mxu0 %v282
        %v572 = vpop.f32.mrb[0].mxu0
        %v573 = vadd.f32 0.0, %v572
        %v574 = vpop.f32.mrb[0].mxu0
        %575 = vmatprep.mubr.f32.mxu0 0.0
        %576 = vmatmul.mubr.f32.gmra.mrb[0].mxu0 %v283
        %v577 = vpop.f32.mrb[0].mxu0
        %v578 = vadd.f32 0.0, %v577
        %v579 = vpop.f32.mrb[0].mxu0
        %580 = vmatprep.mubr.f32.mxu0 0.0
        %581 = vmatmul.mubr.f32.gmra.mrb[0].mxu0 %v284
        %v582 = vpop.f32.mrb[0].mxu0
        %v583 = vadd.f32 0.0, %v582
        %v584 = vpop.f32.mrb[0].mxu0
        %585 = vmatprep.mubr.f32.mxu0 0.0
        %586 = vmatmul.mubr.f32.gmra.mrb[0].mxu0 %v285
        %v587 = vpop.f32.mrb[0].mxu0
        %v588 = vadd.f32 0.0, %v587
        %v589 = vpop.f32.mrb[0].mxu0
        %590 = vmatprep.mubr.f32.mxu0 0.0
        %591 = vmatmul.mubr.f32.gmra.mrb[0].mxu0 %v286
        %v592 = vpop.f32.mrb[0].mxu0
        %v593 = vadd.f32 0.0, %v592
        %v594 = vpop.f32.mrb[0].mxu0
        %595 = vmatprep.mubr.f32.mxu0 0.0
        %596 = vmatmul.mubr.f32.gmra.mrb[0].mxu0 %v287
        %v597 = vpop.f32.mrb[0].mxu0
        %v598 = vadd.f32 0.0, %v597
        %v599 = vpop.f32.mrb[0].mxu0
        %600 = vmatprep.mubr.f32.mxu0 0.0
        %601 = vmatmul.mubr.f32.gmra.mrb[0].mxu0 %v288
        %v602 = vpop.f32.mrb[0].mxu0
        %v603 = vadd.f32 0.0, %v602
        %v604 = vpop.f32.mrb[0].mxu0
        %605 = vmatprep.mubr.f32.mxu0 0.0
        %606 = vmatmul.mubr.f32.gmra.mrb[0].mxu0 %v289
        %v607 = vpop.f32.mrb[0].mxu0
        %v608 = vadd.f32 0.0, %v607
        %v609 = vpop.f32.mrb[0].mxu0
        %610 = vmatprep.mubr.f32.mxu0 0.0
        %611 = vmatmul.mubr.f32.gmra.mrb[0].mxu0 %v290
        %v612 = vpop.f32.mrb[0].mxu0
        %v613 = vadd.f32 0.0, %v612
        %v614 = vpop.f32.mrb[0].mxu0
        %615 = vmatprep.mubr.f32.mxu0 0.0
        %616 = vmatmul.mubr.f32.gmra.mrb[0].mxu0 %v291
        %v617 = vpop.f32.mrb[0].mxu0
        %v618 = vadd.f32 0.0, %v617
        %v619 = vpop.f32.mrb[0].mxu0
        %620 = vmatprep.mubr.f32.mxu0 0.0
        %621 = vmatmul.mubr.f32.gmra.mrb[0].mxu0 %v292
        %v622 = vpop.f32.mrb[0].mxu0
        %v623 = vadd.f32 0.0, %v622
        %v624 = vpop.f32.mrb[0].mxu0
        %625 = vmatprep.mubr.f32.mxu0 0.0
        %626 = vmatmul.mubr.f32.gmra.mrb[0].mxu0 %v293
        %v627 = vpop.f32.mrb[0].mxu0
        %v628 = vadd.f32 0.0, %v627
        %v629 = vpop.f32.mrb[0].mxu0
        %630 = vmatprep.mubr.f32.mxu0 0.0
        %631 = vmatmul.mubr.f32.gmra.mrb[0].mxu0 %v294
        %v632 = vpop.f32.mrb[0].mxu0
        %v633 = vadd.f32 0.0, %v632
        %v634 = vpop.f32.mrb[0].mxu0
        %635 = vmatprep.mubr.f32.mxu0 0.0
        %636 = vmatmul.mubr.f32.gmra.mrb[0].mxu0 %v295
        %v637 = vpop.f32.mrb[0].mxu0
        %v638 = vadd.f32 0.0, %v637
        %v639 = vpop.f32.mrb[0].mxu0
        %640 = vmatprep.mubr.f32.mxu0 0.0
        %641 = vmatmul.mubr.f32.gmra.mrb[0].mxu0 %v296
        %v642 = vpop.f32.mrb[0].mxu0
        %v643 = vadd.f32 0.0, %v642
        %v644 = vpop.f32.mrb[0].mxu0
        %645 = vmatprep.mubr.f32.mxu0 0.0
        %646 = vmatmul.mubr.f32.gmra.mrb[0].mxu0 %v297
        %v647 = vpop.f32.mrb[0].mxu0
        %v648 = vadd.f32 0.0, %v647
        %v649 = vpop.f32.mrb[0].mxu0
        %650 = vmatprep.mubr.f32.mxu0 0.0
        %651 = vmatmul.mubr.f32.gmra.mrb[0].mxu0 %v298
        %v652 = vpop.f32.mrb[0].mxu0
        %v653 = vadd.f32 0.0, %v652
        %v654 = vpop.f32.mrb[0].mxu0
        %655 = vmatprep.mubr.f32.mxu0 0.0
        %656 = vmatmul.mubr.f32.gmra.mrb[0].mxu0 %v299
        %v657 = vpop.f32.mrb[0].mxu0
        %v658 = vadd.f32 0.0, %v657
        %v659 = vpop.f32.mrb[0].mxu0
        %660 = vmatprep.mubr.f32.mxu0 0.0
        %661 = vmatmul.mubr.f32.gmra.mrb[0].mxu0 %v300
        %v662 = vpop.f32.mrb[0].mxu0
        %v663 = vadd.f32 0.0, %v662
        %v664 = vpop.f32.mrb[0].mxu0
        %665 = vmatprep.mubr.f32.mxu0 0.0
        %666 = vmatmul.mubr.f32.gmra.mrb[0].mxu0 %v301
        %v667 = vpop.f32.mrb[0].mxu0
        %v668 = vadd.f32 0.0, %v667
        %v669 = vpop.f32.mrb[0].mxu0
        %670 = vmatprep.mubr.f32.mxu0 0.0
        %671 = vmatmul.mubr.f32.gmra.mrb[0].mxu0 %v302
        %v672 = vpop.f32.mrb[0].mxu0
        %v673 = vadd.f32 0.0, %v672
        %v674 = vpop.f32.mrb[0].mxu0
        %675 = vmatprep.mubr.f32.mxu0 0.0
        %676 = vmatmul.mubr.f32.gmra.mrb[0].mxu0 %v303
        %v677 = vpop.f32.mrb[0].mxu0
        %v678 = vadd.f32 0.0, %v677
        %v679 = vpop.f32.mrb[0].mxu0
        %680 = vmatprep.mubr.f32.mxu0 0.0
        %681 = vmatmul.mubr.f32.gmra.mrb[0].mxu0 %v304
        %v682 = vpop.f32.mrb[0].mxu0
        %v683 = vadd.f32 0.0, %v682
        %v684 = vpop.f32.mrb[0].mxu0
        %685 = vmatprep.mubr.f32.mxu0 0.0
        %686 = vmatmul.mubr.f32.gmra.mrb[0].mxu0 %v305
        %v687 = vpop.f32.mrb[0].mxu0
        %v688 = vadd.f32 0.0, %v687
        %v689 = vpop.f32.mrb[0].mxu0
        %690 = vmatprep.mubr.f32.mxu0 0.0
        %691 = vmatmul.mubr.f32.gmra.mrb[0].mxu0 %v306
        %v692 = vpop.f32.mrb[0].mxu0
        %v693 = vadd.f32 0.0, %v692
        %v694 = vpop.f32.mrb[0].mxu0
        %695 = vmatprep.mubr.f32.mxu0 0.0
        %696 = vmatmul.mubr.f32.gmra.mrb[0].mxu0 %v307
        %v697 = vpop.f32.mrb[0].mxu0
        %v698 = vadd.f32 0.0, %v697
        %v699 = vpop.f32.mrb[0].mxu0
        %700 = vmatprep.mubr.f32.mxu0 0.0
        %701 = vmatmul.mubr.f32.gmra.mrb[0].mxu0 %v308
        %v702 = vpop.f32.mrb[0].mxu0
        %v703 = vadd.f32 0.0, %v702
        %v704 = vpop.f32.mrb[0].mxu0
        %705 = vmatprep.mubr.f32.mxu0 0.0
        %706 = vmatmul.mubr.f32.gmra.mrb[0].mxu0 %v309
        %v707 = vpop.f32.mrb[0].mxu0
        %v708 = vadd.f32 0.0, %v707
        %v709 = vpop.f32.mrb[0].mxu0
        %710 = vmatprep.mubr.f32.mxu0 0.0
        %711 = vmatmul.mubr.f32.gmra.mrb[0].mxu0 %v310
        %v712 = vpop.f32.mrb[0].mxu0
        %v713 = vadd.f32 0.0, %v712
        %v714 = vpop.f32.mrb[0].mxu0
        %715 = vmatprep.mubr.f32.mxu0 0.0
        %716 = vmatmul.mubr.f32.gmra.mrb[0].mxu0 %v311
        %v717 = vpop.f32.mrb[0].mxu0
        %v718 = vadd.f32 0.0, %v717
        %v719 = vpop.f32.mrb[0].mxu0
        %720 = vmatprep.mubr.f32.mxu0 0.0
        %721 = vmatmul.mubr.f32.gmra.mrb[0].mxu0 %v312
        %v722 = vpop.f32.mrb[0].mxu0
        %v723 = vadd.f32 0.0, %v722
        %v724 = vpop.f32.mrb[0].mxu0
        %725 = vmatprep.mubr.f32.mxu0 0.0
        %726 = vmatmul.mubr.f32.gmra.mrb[0].mxu0 %v313
        %v727 = vpop.f32.mrb[0].mxu0
        %v728 = vadd.f32 0.0, %v727
        %v729 = vpop.f32.mrb[0].mxu0
        %730 = vmatprep.mubr.f32.mxu0 0.0
        %731 = vmatmul.mubr.f32.gmra.mrb[0].mxu0 %v314
        %v732 = vpop.f32.mrb[0].mxu0
        %v733 = vadd.f32 0.0, %v732
        %v734 = vpop.f32.mrb[0].mxu0
        %735 = vmatprep.mubr.f32.mxu0 0.0
        %736 = vmatmul.mubr.f32.gmra.mrb[0].mxu0 %v315
        %v737 = vpop.f32.mrb[0].mxu0
        %v738 = vadd.f32 0.0, %v737
        %v739 = vpop.f32.mrb[0].mxu0
        %740 = vmatprep.mubr.f32.mxu0 0.0
        %741 = vmatmul.mubr.f32.gmra.mrb[0].mxu0 %v316
        %v742 = vpop.f32.mrb[0].mxu0
        %v743 = vadd.f32 0.0, %v742
        %v744 = vpop.f32.mrb[0].mxu0
        %745 = vmatprep.mubr.f32.mxu0 0.0
        %746 = vmatmul.mubr.f32.gmra.mrb[0].mxu0 %v317
        %v747 = vpop.f32.mrb[0].mxu0
        %v748 = vadd.f32 0.0, %v747
        %v749 = vpop.f32.mrb[0].mxu0
        %750 = vmatprep.mubr.f32.mxu0 0.0
        %751 = vmatmul.mubr.f32.gmra.mrb[0].mxu0 %v318
        %v752 = vpop.f32.mrb[0].mxu0
        %v753 = vadd.f32 0.0, %v752
        %v754 = vpop.f32.mrb[0].mxu0
        %755 = vmatprep.mubr.f32.mxu0 0.0
        %756 = vmatmul.mubr.f32.gmra.mrb[0].mxu0 %v319
        %v757 = vpop.f32.mrb[0].mxu0
        %v758 = vadd.f32 0.0, %v757
        %v759 = vpop.f32.mrb[0].mxu0
        %760 = vmatprep.mubr.f32.mxu0 0.0
        %761 = vmatmul.mubr.f32.gmra.mrb[0].mxu0 %v320
        %v762 = vpop.f32.mrb[0].mxu0
        %v763 = vadd.f32 0.0, %v762
        %v764 = vpop.f32.mrb[0].mxu0
        %765 = vmatprep.mubr.f32.mxu0 0.0
        %766 = vmatmul.mubr.f32.gmra.mrb[0].mxu0 %v321
        %v767 = vpop.f32.mrb[0].mxu0
        %v768 = vadd.f32 0.0, %v767
        %v769 = vpop.f32.mrb[0].mxu0
        %770 = vmatprep.mubr.f32.mxu0 0.0
        %771 = vmatmul.mubr.f32.gmra.mrb[0].mxu0 %v322
        %v772 = vpop.f32.mrb[0].mxu0
        %v773 = vadd.f32 0.0, %v772
        %v774 = vpop.f32.mrb[0].mxu0
        %775 = vmatprep.mubr.f32.mxu0 0.0
        %776 = vmatmul.mubr.f32.gmra.mrb[0].mxu0 %v323
        %v777 = vpop.f32.mrb[0].mxu0
        %v778 = vadd.f32 0.0, %v777
        %v779 = vpop.f32.mrb[0].mxu0
        %780 = vmatprep.mubr.f32.mxu0 0.0
        %781 = vmatmul.mubr.f32.gmra.mrb[0].mxu0 %v324
        %v782 = vpop.f32.mrb[0].mxu0
        %v783 = vadd.f32 0.0, %v782
        %v784 = vpop.f32.mrb[0].mxu0
        %785 = vmatprep.mubr.f32.mxu0 0.0
        %786 = vmatmul.mubr.f32.gmra.mrb[0].mxu0 %v325
        %v787 = vpop.f32.mrb[0].mxu0
        %v788 = vadd.f32 0.0, %v787
        %v789 = vpop.f32.mrb[0].mxu0
        %790 = vmatprep.mubr.f32.mxu0 0.0
        %791 = vmatmul.mubr.f32.gmra.mrb[0].mxu0 %v326
        %v792 = vpop.f32.mrb[0].mxu0
        %v793 = vadd.f32 0.0, %v792
        %v794 = vpop.f32.mrb[0].mxu0
        %795 = vmatprep.mubr.f32.mxu0 0.0
        %796 = vmatmul.mubr.f32.gmra.mrb[0].mxu0 %v327
        %v797 = vpop.f32.mrb[0].mxu0
        %v798 = vadd.f32 0.0, %v797
        %v799 = vpop.f32.mrb[0].mxu0
        %800 = vmatprep.mubr.f32.mxu0 0.0
        %801 = vmatmul.mubr.f32.gmra.mrb[0].mxu0 %v328
        %v802 = vpop.f32.mrb[0].mxu0
        %v803 = vadd.f32 0.0, %v802
        %v804 = vpop.f32.mrb[0].mxu0
        %805 = vmatprep.mubr.f32.mxu0 0.0
        %806 = vmatmul.mubr.f32.gmra.mrb[0].mxu0 %v329
        %v807 = vpop.f32.mrb[0].mxu0
        %v808 = vadd.f32 0.0, %v807
        %v809 = vpop.f32.mrb[0].mxu0
        %810 = vmatprep.mubr.f32.mxu0 0.0
        %811 = vmatmul.mubr.f32.gmra.mrb[0].mxu0 %v330
        %v812 = vpop.f32.mrb[0].mxu0
        %v813 = vadd.f32 0.0, %v812
        %v814 = vpop.f32.mrb[0].mxu0
        %815 = vmatprep.mubr.f32.mxu0 0.0
        %816 = vmatmul.mubr.f32.gmra.mrb[0].mxu0 %v331
        %v817 = vpop.f32.mrb[0].mxu0
        %v818 = vadd.f32 0.0, %v817
        %v819 = vpop.f32.mrb[0].mxu0
        %820 = vmatprep.mubr.f32.mxu0 0.0
        %821 = vmatmul.mubr.f32.gmra.mrb[0].mxu0 %v332
        %v822 = vpop.f32.mrb[0].mxu0
        %v823 = vadd.f32 0.0, %v822
        %v824 = vpop.f32.mrb[0].mxu0
        %825 = vmatprep.mubr.f32.mxu0 0.0
        %826 = vmatmul.mubr.f32.gmra.mrb[0].mxu0 %v333
        %v827 = vpop.f32.mrb[0].mxu0
        %v828 = vadd.f32 0.0, %v827
        %v829 = vpop.f32.mrb[0].mxu0
        %830 = vmatprep.mubr.f32.mxu0 0.0
        %831 = vmatmul.mubr.f32.gmra.mrb[0].mxu0 %v334
        %v832 = vpop.f32.mrb[0].mxu0
        %v833 = vadd.f32 0.0, %v832
        %v834 = vpop.f32.mrb[0].mxu0
        %835 = vmatprep.mubr.f32.mxu0 0.0
        %836 = vmatmul.mubr.f32.gmra.mrb[0].mxu0 %v335
        %v837 = vpop.f32.mrb[0].mxu0
        %v838 = vadd.f32 0.0, %v837
        %v839 = vpop.f32.mrb[0].mxu0
        %840 = vmatprep.mubr.f32.mxu0 0.0
        %841 = vmatmul.mubr.f32.gmra.mrb[0].mxu0 %v336
        %v842 = vpop.f32.mrb[0].mxu0
        %v843 = vadd.f32 0.0, %v842
        %v844 = vpop.f32.mrb[0].mxu0
        %845 = vmatprep.mubr.f32.mxu0 0.0
        %846 = vmatmul.mubr.f32.gmra.mrb[0].mxu0 %v337
        %v847 = vpop.f32.mrb[0].mxu0
        %v848 = vadd.f32 0.0, %v847
        %v849 = vpop.f32.mrb[0].mxu0
        %850 = vmatprep.mubr.f32.mxu0 0.0
        %851 = vmatmul.mubr.f32.gmra.mrb[0].mxu0 %v338
        %v852 = vpop.f32.mrb[0].mxu0
        %v853 = vadd.f32 0.0, %v852
        %v854 = vpop.f32.mrb[0].mxu0
        %855 = vmatprep.mubr.f32.mxu0 0.0
        %856 = vmatmul.mubr.f32.gmra.mrb[0].mxu0 %v339
        %v857 = vpop.f32.mrb[0].mxu0
        %v858 = vadd.f32 0.0, %v857
        %v859 = vpop.f32.mrb[0].mxu0
        %860 = vmatprep.mubr.f32.mxu0 0.0
        %861 = vmatmul.mubr.f32.gmra.mrb[0].mxu0 %v340
        %v862 = vpop.f32.mrb[0].mxu0
        %v863 = vadd.f32 0.0, %v862
        %v864 = vpop.f32.mrb[0].mxu0
        %865 = vmatprep.mubr.f32.mxu0 0.0
        %866 = vmatmul.mubr.f32.gmra.mrb[0].mxu0 %v341
        %v867 = vpop.f32.mrb[0].mxu0
        %v868 = vadd.f32 0.0, %v867
        %v869 = vpop.f32.mrb[0].mxu0
        %870 = vmatprep.mubr.f32.mxu0 0.0
        %871 = vmatmul.mubr.f32.gmra.mrb[0].mxu0 %v342
        %v872 = vpop.f32.mrb[0].mxu0
        %v873 = vadd.f32 0.0, %v872
        %v874 = vpop.f32.mrb[0].mxu0
        %875 = vmatprep.mubr.f32.mxu0 0.0
        %876 = vmatmul.mubr.f32.gmra.mrb[0].mxu0 %v343
        %v877 = vpop.f32.mrb[0].mxu0
        %v878 = vadd.f32 0.0, %v877
        %v879 = vpop.f32.mrb[0].mxu0
        %880 = vmatprep.mubr.f32.mxu0 0.0
        %881 = vmatmul.mubr.f32.gmra.mrb[0].mxu0 %v344
        %v882 = vpop.f32.mrb[0].mxu0
        %v883 = vadd.f32 0.0, %v882
        %v884 = vpop.f32.mrb[0].mxu0
        %885 = vmatprep.mubr.f32.mxu0 0.0
        %886 = vmatmul.mubr.f32.gmra.mrb[0].mxu0 %v345
        %v887 = vpop.f32.mrb[0].mxu0
        %v888 = vadd.f32 0.0, %v887
        %v889 = vpop.f32.mrb[0].mxu0
        %890 = vmatprep.mubr.f32.mxu0 0.0
        %891 = vmatmul.mubr.f32.gmra.mrb[0].mxu0 %v346
        %v892 = vpop.f32.mrb[0].mxu0
        %v893 = vadd.f32 0.0, %v892
        %v894 = vpop.f32.mrb[0].mxu0
        %895 = vmatprep.mubr.f32.mxu0 0.0
        %896 = vmatmul.mubr.f32.gmra.mrb[0].mxu0 %v347
        %v897 = vpop.f32.mrb[0].mxu0
        %v898 = vadd.f32 0.0, %v897
        %v899 = vpop.f32.mrb[0].mxu0
        %900 = vmatprep.mubr.f32.mxu0 0.0
        %901 = vmatmul.mubr.f32.gmra.mrb[0].mxu0 %v348
        %v902 = vpop.f32.mrb[0].mxu0
        %v903 = vadd.f32 0.0, %v902
        %v904 = vpop.f32.mrb[0].mxu0
        %905 = vmatprep.mubr.f32.mxu0 0.0
        %906 = vmatmul.mubr.f32.gmra.mrb[0].mxu0 %v349
        %v907 = vpop.f32.mrb[0].mxu0
        %v908 = vadd.f32 0.0, %v907
        %v909 = vpop.f32.mrb[0].mxu0
        %910 = vmatprep.mubr.f32.mxu0 0.0
        %911 = vmatmul.mubr.f32.gmra.mrb[0].mxu0 %v350
        %v912 = vpop.f32.mrb[0].mxu0
        %v913 = vadd.f32 0.0, %v912
        %v914 = vpop.f32.mrb[0].mxu0
        %915 = vmatprep.mubr.f32.mxu0 0.0
        %916 = vmatmul.mubr.f32.gmra.mrb[0].mxu0 %v351
        %v917 = vpop.f32.mrb[0].mxu0
        %v918 = vadd.f32 0.0, %v917
        %v919 = vpop.f32.mrb[0].mxu0
        %920 = vmatprep.mubr.f32.mxu0 0.0
        %921 = vmatmul.mubr.f32.gmra.mrb[0].mxu0 %v352
        %v922 = vpop.f32.mrb[0].mxu0
        %v923 = vadd.f32 0.0, %v922
        %v924 = vpop.f32.mrb[0].mxu0
        %925 = vmatprep.mubr.f32.mxu0 0.0
        %926 = vmatmul.mubr.f32.gmra.mrb[0].mxu0 %v353
        %v927 = vpop.f32.mrb[0].mxu0
        %v928 = vadd.f32 0.0, %v927
        %v929 = vpop.f32.mrb[0].mxu0
        %930 = vmatprep.mubr.f32.mxu0 0.0
        %931 = vmatmul.mubr.f32.gmra.mrb[0].mxu0 %v354
        %v932 = vpop.f32.mrb[0].mxu0
        %v933 = vadd.f32 0.0, %v932
        %v934 = vpop.f32.mrb[0].mxu0
        %935 = vmatprep.mubr.f32.mxu0 0.0
        %936 = vmatmul.mubr.f32.gmra.mrb[0].mxu0 %v355
        %v937 = vpop.f32.mrb[0].mxu0
        %v938 = vadd.f32 0.0, %v937
        %v939 = vpop.f32.mrb[0].mxu0
        %940 = vmatprep.mubr.f32.mxu0 0.0
        %941 = vmatmul.mubr.f32.gmra.mrb[0].mxu0 %v356
        %v942 = vpop.f32.mrb[0].mxu0
        %v943 = vadd.f32 0.0, %v942
        %v944 = vpop.f32.mrb[0].mxu0
        %945 = vmatprep.mubr.f32.mxu0 0.0
        %946 = vmatmul.mubr.f32.gmra.mrb[0].mxu0 %v357
        %v947 = vpop.f32.mrb[0].mxu0
        %v948 = vadd.f32 0.0, %v947
        %v949 = vpop.f32.mrb[0].mxu0
        %950 = vmatprep.mubr.f32.mxu0 0.0
        %951 = vmatmul.mubr.f32.gmra.mrb[0].mxu0 %v358
        %v952 = vpop.f32.mrb[0].mxu0
        %v953 = vadd.f32 0.0, %v952
        %v954 = vpop.f32.mrb[0].mxu0
        %955 = vmatprep.mubr.f32.mxu0 0.0
        %956 = vmatmul.mubr.f32.gmra.mrb[0].mxu0 %v359
        %v957 = vpop.f32.mrb[0].mxu0
        %v958 = vadd.f32 0.0, %v957
        %v959 = vpop.f32.mrb[0].mxu0
        %960 = vmatprep.mubr.f32.mxu0 0.0
        %961 = vmatmul.mubr.f32.gmra.mrb[0].mxu0 %v360
        %v962 = vpop.f32.mrb[0].mxu0
        %v963 = vadd.f32 0.0, %v962
        %v964 = vpop.f32.mrb[0].mxu0
        %965 = vmatprep.mubr.f32.mxu0 0.0
        %966 = vmatmul.mubr.f32.gmra.mrb[0].mxu0 %v361
        %v967 = vpop.f32.mrb[0].mxu0
        %v968 = vadd.f32 0.0, %v967
        %v969 = vpop.f32.mrb[0].mxu0
        %970 = vmatprep.mubr.f32.mxu0 0.0
        %971 = vmatmul.mubr.f32.gmra.mrb[0].mxu0 %v362
        %v972 = vpop.f32.mrb[0].mxu0
        %v973 = vadd.f32 0.0, %v972
        %v974 = vpop.f32.mrb[0].mxu0
        %975 = vmatprep.mubr.f32.mxu0 0.0
        %976 = vmatmul.mubr.f32.gmra.mrb[0].mxu0 %v363
        %v977 = vpop.f32.mrb[0].mxu0
        %v978 = vadd.f32 0.0, %v977
        %v979 = vpop.f32.mrb[0].mxu0
        %980 = vmatprep.mubr.f32.mxu0 0.0
        %981 = vmatmul.mubr.f32.gmra.mrb[0].mxu0 %v364
        %v982 = vpop.f32.mrb[0].mxu0
        %v983 = vadd.f32 0.0, %v982
        %v984 = vpop.f32.mrb[0].mxu0
        %985 = vmatprep.mubr.f32.mxu0 0.0
        %986 = vmatmul.mubr.f32.gmra.mrb[0].mxu0 %v365
        %v987 = vpop.f32.mrb[0].mxu0
        %v988 = vadd.f32 0.0, %v987
        %v989 = vpop.f32.mrb[0].mxu0
        %990 = vmatprep.mubr.f32.mxu0 0.0
        %991 = vmatmul.mubr.f32.gmra.mrb[0].mxu0 %v366
        %v992 = vpop.f32.mrb[0].mxu0
        %v993 = vadd.f32 0.0, %v992
        %v994 = vpop.f32.mrb[0].mxu0
        %995 = vmatprep.mubr.f32.mxu0 0.0
        %996 = vmatmul.mubr.f32.gmra.mrb[0].mxu0 %v367
        %v997 = vpop.f32.mrb[0].mxu0
        %v998 = vadd.f32 0.0, %v997
        %v999 = vpop.f32.mrb[0].mxu0
        %1000 = vmatprep.mubr.f32.mxu0 0.0
        %1001 = vmatmul.mubr.f32.gmra.mrb[0].mxu0 %v368
        %v1002 = vpop.f32.mrb[0].mxu0
        %v1003 = vadd.f32 0.0, %v1002
        %v1004 = vpop.f32.mrb[0].mxu0
        %1005 = vmatprep.mubr.f32.mxu0 0.0
        %1006 = vmatmul.mubr.f32.gmra.mrb[0].mxu0 %v369
        %v1007 = vpop.f32.mrb[0].mxu0
        %v1008 = vadd.f32 0.0, %v1007
        %v1009 = vpop.f32.mrb[0].mxu0
        %1010 = vmatprep.mubr.f32.mxu0 0.0
        %1011 = vmatmul.mubr.f32.gmra.mrb[0].mxu0 %v370
        %v1012 = vpop.f32.mrb[0].mxu0
        %v1013 = vadd.f32 0.0, %v1012
        %v1014 = vpop.f32.mrb[0].mxu0
        %1015 = vmatprep.mubr.f32.mxu0 0.0
        %1016 = vmatmul.mubr.f32.gmra.mrb[0].mxu0 %v371
        %v1017 = vpop.f32.mrb[0].mxu0
        %v1018 = vadd.f32 0.0, %v1017
        %v1019 = vpop.f32.mrb[0].mxu0
        %1020 = vmatprep.mubr.f32.mxu0 0.0
        %1021 = vmatmul.mubr.f32.gmra.mrb[0].mxu0 %v372
        %v1022 = vpop.f32.mrb[0].mxu0
        %v1023 = vadd.f32 0.0, %v1022
        %v1024 = vpop.f32.mrb[0].mxu0
        %1025 = vmatprep.mubr.f32.mxu0 0.0
        %1026 = vmatmul.mubr.f32.gmra.mrb[0].mxu0 %v373
        %v1027 = vpop.f32.mrb[0].mxu0
        %v1028 = vadd.f32 0.0, %v1027
        %v1029 = vpop.f32.mrb[0].mxu0
        %1030 = vmatprep.mubr.f32.mxu0 0.0
        %1031 = vmatmul.mubr.f32.gmra.mrb[0].mxu0 %v374
        %v1032 = vpop.f32.mrb[0].mxu0
        %v1033 = vadd.f32 0.0, %v1032
        %v1034 = vpop.f32.mrb[0].mxu0
        %1035 = vmatprep.mubr.f32.mxu0 0.0
        %1036 = vmatmul.mubr.f32.gmra.mrb[0].mxu0 %v375
        %v1037 = vpop.f32.mrb[0].mxu0
        %v1038 = vadd.f32 0.0, %v1037
        %v1039 = vpop.f32.mrb[0].mxu0
        %1040 = vmatprep.mubr.f32.mxu0 0.0
        %1041 = vmatmul.mubr.f32.gmra.mrb[0].mxu0 %v376
        %v1042 = vpop.f32.mrb[0].mxu0
        %v1043 = vadd.f32 0.0, %v1042
        %v1044 = vpop.f32.mrb[0].mxu0
        %1045 = vmatprep.mubr.f32.mxu0 0.0
        %1046 = vmatmul.mubr.f32.gmra.mrb[0].mxu0 %v377
        %v1047 = vpop.f32.mrb[0].mxu0
        %v1048 = vadd.f32 0.0, %v1047
        %v1049 = vpop.f32.mrb[0].mxu0
        %1050 = vmatprep.mubr.f32.mxu0 0.0
        %1051 = vmatmul.mubr.f32.gmra.mrb[0].mxu0 %v378
        %v1052 = vpop.f32.mrb[0].mxu0
        %v1053 = vadd.f32 0.0, %v1052
        %v1054 = vpop.f32.mrb[0].mxu0
        %1055 = vmatprep.mubr.f32.mxu0 0.0
        %1056 = vmatmul.mubr.f32.gmra.mrb[0].mxu0 %v379
        %v1057 = vpop.f32.mrb[0].mxu0
        %v1058 = vadd.f32 0.0, %v1057
        %v1059 = vpop.f32.mrb[0].mxu0
        %1060 = vmatprep.mubr.f32.mxu0 0.0
        %1061 = vmatmul.mubr.f32.gmra.mrb[0].mxu0 %v380
        %v1062 = vpop.f32.mrb[0].mxu0
        %v1063 = vadd.f32 0.0, %v1062
        %v1064 = vpop.f32.mrb[0].mxu0
        %1065 = vmatprep.mubr.f32.mxu0 0.0
        %1066 = vmatmul.mubr.f32.gmra.mrb[0].mxu0 %v381
        %v1067 = vpop.f32.mrb[0].mxu0
        %v1068 = vadd.f32 0.0, %v1067
        %v1069 = vpop.f32.mrb[0].mxu0
        %1070 = vmatprep.mubr.f32.mxu0 0.0
        %1071 = vmatmul.mubr.f32.gmra.mrb[0].mxu0 %v382
        %v1072 = vpop.f32.mrb[0].mxu0
        %v1073 = vadd.f32 0.0, %v1072
        %v1074 = vpop.f32.mrb[0].mxu0
        %1075 = vmatprep.mubr.f32.mxu0 0.0
        %1076 = vmatmul.mubr.f32.gmra.mrb[0].mxu0 %v383
        %v1077 = vpop.f32.mrb[0].mxu0
        %v1078 = vadd.f32 0.0, %v1077
        %v1079 = vpop.f32.mrb[0].mxu0
        %1080 = vmatprep.mubr.f32.mxu0 0.0
        %1081 = vmatmul.mubr.f32.gmra.mrb[0].mxu0 %v384
        %v1082 = vpop.f32.mrb[0].mxu0
        %v1083 = vadd.f32 0.0, %v1082
        %v1084 = vpop.f32.mrb[0].mxu0
        %1085 = vmatprep.mubr.f32.mxu0 0.0
        %1086 = vmatmul.mubr.f32.gmra.mrb[0].mxu0 %v385
        %v1087 = vpop.f32.mrb[0].mxu0
        %v1088 = vadd.f32 0.0, %v1087
        %v1089 = vpop.f32.mrb[0].mxu0
        %1090 = vmatprep.mubr.f32.mxu0 0.0
        %1091 = vmatmul.mubr.f32.gmra.mrb[0].mxu0 %v386
        %v1092 = vpop.f32.mrb[0].mxu0
        %v1093 = vadd.f32 0.0, %v1092
        %v1094 = vpop.f32.mrb[0].mxu0
        %1095 = vmatprep.mubr.f32.mxu0 0.0
        %1096 = vmatmul.mubr.f32.gmra.mrb[0].mxu0 %v387
        %v1097 = vpop.f32.mrb[0].mxu0
        %v1098 = vadd.f32 0.0, %v1097
        %v1099 = vpop.f32.mrb[0].mxu0
        %1100 = vmatprep.mubr.f32.mxu0 0.0
        %1101 = vmatmul.mubr.f32.gmra.mrb[0].mxu0 %v388
        %v1102 = vpop.f32.mrb[0].mxu0
        %v1103 = vadd.f32 0.0, %v1102
        %v1104 = vpop.f32.mrb[0].mxu0
        %1105 = vmatprep.mubr.f32.mxu0 0.0
        %1106 = vmatmul.mubr.f32.gmra.mrb[0].mxu0 %v389
        %v1107 = vpop.f32.mrb[0].mxu0
        %v1108 = vadd.f32 0.0, %v1107
        %v1109 = vpop.f32.mrb[0].mxu0
        %1110 = vdwg.mxu0
        %v1111 = vld [vmem:[%s222] sm:$0xff]
        %v1112 = vld [vmem:[%s222 + $0x8] sm:$0xff]
        %v1113 = vld [vmem:[%s222 + $0x10] sm:$0xff]
        %v1114 = vld [vmem:[%s222 + $0x18] sm:$0xff]
        %v1115 = vld [vmem:[%s222 + $0x20] sm:$0xff]
        %v1116 = vld [vmem:[%s222 + $0x28] sm:$0xff]
        %v1117 = vld [vmem:[%s222 + $0x30] sm:$0xff]
        %v1118 = vld [vmem:[%s222 + $0x38] sm:$0xff]
        %v1119 = vld [vmem:[%s222 + $0x40] sm:$0xff]
        %v1120 = vld [vmem:[%s222 + $0x48] sm:$0xff]
        %v1121 = vld [vmem:[%s222 + $0x50] sm:$0xff]
        %v1122 = vld [vmem:[%s222 + $0x58] sm:$0xff]
        %v1123 = vld [vmem:[%s222 + $0x60] sm:$0xff]
        %v1124 = vld [vmem:[%s222 + $0x68] sm:$0xff]
        %v1125 = vld [vmem:[%s222 + $0x70] sm:$0xff]
        %v1126 = vld [vmem:[%s222 + $0x78] sm:$0xff]
        %v1127 = vld [vmem:[%s222 + $0x80] sm:$0xff]
        %v1128 = vld [vmem:[%s222 + $0x88] sm:$0xff]
        %v1129 = vld [vmem:[%s222 + $0x90] sm:$0xff]
        %v1130 = vld [vmem:[%s222 + $0x98] sm:$0xff]
        %v1131 = vld [vmem:[%s222 + $0xa0] sm:$0xff]
        %v1132 = vld [vmem:[%s222 + $0xa8] sm:$0xff]
        %v1133 = vld [vmem:[%s222 + $0xb0] sm:$0xff]
        %v1134 = vld [vmem:[%s222 + $0xb8] sm:$0xff]
        %v1135 = vld [vmem:[%s222 + $0xc0] sm:$0xff]
        %v1136 = vld [vmem:[%s222 + $0xc8] sm:$0xff]
        %v1137 = vld [vmem:[%s222 + $0xd0] sm:$0xff]
        %v1138 = vld [vmem:[%s222 + $0xd8] sm:$0xff]
        %v1139 = vld [vmem:[%s222 + $0xe0] sm:$0xff]
        %v1140 = vld [vmem:[%s222 + $0xe8] sm:$0xff]
        %v1141 = vld [vmem:[%s222 + $0xf0] sm:$0xff]
        %v1142 = vld [vmem:[%s222 + $0xf8] sm:$0xff]
        %v1143 = vld [vmem:[%s222 + $0x100] sm:$0xff]
        %v1144 = vld [vmem:[%s222 + $0x108] sm:$0xff]
        %v1145 = vld [vmem:[%s222 + $0x110] sm:$0xff]
        %v1146 = vld [vmem:[%s222 + $0x118] sm:$0xff]
        %v1147 = vld [vmem:[%s222 + $0x120] sm:$0xff]
        %v1148 = vld [vmem:[%s222 + $0x128] sm:$0xff]
        %v1149 = vld [vmem:[%s222 + $0x130] sm:$0xff]
        %v1150 = vld [vmem:[%s222 + $0x138] sm:$0xff]
        %v1151 = vld [vmem:[%s222 + $0x140] sm:$0xff]
        %v1152 = vld [vmem:[%s222 + $0x148] sm:$0xff]
        %v1153 = vld [vmem:[%s222 + $0x150] sm:$0xff]
        %v1154 = vld [vmem:[%s222 + $0x158] sm:$0xff]
        %v1155 = vld [vmem:[%s222 + $0x160] sm:$0xff]
        %v1156 = vld [vmem:[%s222 + $0x168] sm:$0xff]
        %v1157 = vld [vmem:[%s222 + $0x170] sm:$0xff]
        %v1158 = vld [vmem:[%s222 + $0x178] sm:$0xff]
        %v1159 = vld [vmem:[%s222 + $0x180] sm:$0xff]
        %v1160 = vld [vmem:[%s222 + $0x188] sm:$0xff]
        %v1161 = vld [vmem:[%s222 + $0x190] sm:$0xff]
        %v1162 = vld [vmem:[%s222 + $0x198] sm:$0xff]
        %v1163 = vld [vmem:[%s222 + $0x1a0] sm:$0xff]
        %v1164 = vld [vmem:[%s222 + $0x1a8] sm:$0xff]
        %v1165 = vld [vmem:[%s222 + $0x1b0] sm:$0xff]
        %v1166 = vld [vmem:[%s222 + $0x1b8] sm:$0xff]
        %v1167 = vld [vmem:[%s222 + $0x1c0] sm:$0xff]
        %v1168 = vld [vmem:[%s222 + $0x1c8] sm:$0xff]
        %v1169 = vld [vmem:[%s222 + $0x1d0] sm:$0xff]
        %v1170 = vld [vmem:[%s222 + $0x1d8] sm:$0xff]
        %v1171 = vld [vmem:[%s222 + $0x1e0] sm:$0xff]
        %v1172 = vld [vmem:[%s222 + $0x1e8] sm:$0xff]
        %v1173 = vld [vmem:[%s222 + $0x1f0] sm:$0xff]
        %v1174 = vld [vmem:[%s222 + $0x1f8] sm:$0xff]
        %v1175 = vld [vmem:[%s222 + $0x200] sm:$0xff]
        %v1176 = vld [vmem:[%s222 + $0x208] sm:$0xff]
        %v1177 = vld [vmem:[%s222 + $0x210] sm:$0xff]
        %v1178 = vld [vmem:[%s222 + $0x218] sm:$0xff]
        %v1179 = vld [vmem:[%s222 + $0x220] sm:$0xff]
        %v1180 = vld [vmem:[%s222 + $0x228] sm:$0xff]
        %v1181 = vld [vmem:[%s222 + $0x230] sm:$0xff]
        %v1182 = vld [vmem:[%s222 + $0x238] sm:$0xff]
        %v1183 = vld [vmem:[%s222 + $0x240] sm:$0xff]
        %v1184 = vld [vmem:[%s222 + $0x248] sm:$0xff]
        %v1185 = vld [vmem:[%s222 + $0x250] sm:$0xff]
        %v1186 = vld [vmem:[%s222 + $0x258] sm:$0xff]
        %v1187 = vld [vmem:[%s222 + $0x260] sm:$0xff]
        %v1188 = vld [vmem:[%s222 + $0x268] sm:$0xff]
        %v1189 = vld [vmem:[%s222 + $0x270] sm:$0xff]
        %v1190 = vld [vmem:[%s222 + $0x278] sm:$0xff]
        %v1191 = vld [vmem:[%s222 + $0x280] sm:$0xff]
        %v1192 = vld [vmem:[%s222 + $0x288] sm:$0xff]
        %v1193 = vld [vmem:[%s222 + $0x290] sm:$0xff]
        %v1194 = vld [vmem:[%s222 + $0x298] sm:$0xff]
        %v1195 = vld [vmem:[%s222 + $0x2a0] sm:$0xff]
        %v1196 = vld [vmem:[%s222 + $0x2a8] sm:$0xff]
        %v1197 = vld [vmem:[%s222 + $0x2b0] sm:$0xff]
        %v1198 = vld [vmem:[%s222 + $0x2b8] sm:$0xff]
        %v1199 = vld [vmem:[%s222 + $0x2c0] sm:$0xff]
        %v1200 = vld [vmem:[%s222 + $0x2c8] sm:$0xff]
        %v1201 = vld [vmem:[%s222 + $0x2d0] sm:$0xff]
        %v1202 = vld [vmem:[%s222 + $0x2d8] sm:$0xff]
        %v1203 = vld [vmem:[%s222 + $0x2e0] sm:$0xff]
        %v1204 = vld [vmem:[%s222 + $0x2e8] sm:$0xff]
        %v1205 = vld [vmem:[%s222 + $0x2f0] sm:$0xff]
        %v1206 = vld [vmem:[%s222 + $0x2f8] sm:$0xff]
        %v1207 = vld [vmem:[%s222 + $0x300] sm:$0xff]
        %v1208 = vld [vmem:[%s222 + $0x308] sm:$0xff]
        %v1209 = vld [vmem:[%s222 + $0x310] sm:$0xff]
        %v1210 = vld [vmem:[%s222 + $0x318] sm:$0xff]
        %v1211 = vld [vmem:[%s222 + $0x320] sm:$0xff]
        %v1212 = vld [vmem:[%s222 + $0x328] sm:$0xff]
        %v1213 = vld [vmem:[%s222 + $0x330] sm:$0xff]
        %v1214 = vld [vmem:[%s222 + $0x338] sm:$0xff]
        %v1215 = vld [vmem:[%s222 + $0x340] sm:$0xff]
        %v1216 = vld [vmem:[%s222 + $0x348] sm:$0xff]
        %v1217 = vld [vmem:[%s222 + $0x350] sm:$0xff]
        %v1218 = vld [vmem:[%s222 + $0x358] sm:$0xff]
        %v1219 = vld [vmem:[%s222 + $0x360] sm:$0xff]
        %v1220 = vld [vmem:[%s222 + $0x368] sm:$0xff]
        %v1221 = vld [vmem:[%s222 + $0x370] sm:$0xff]
        %v1222 = vld [vmem:[%s222 + $0x378] sm:$0xff]
        %v1223 = vld [vmem:[%s222 + $0x380] sm:$0xff]
        %v1224 = vld [vmem:[%s222 + $0x388] sm:$0xff]
        %v1225 = vld [vmem:[%s222 + $0x390] sm:$0xff]
        %v1226 = vld [vmem:[%s222 + $0x398] sm:$0xff]
        %v1227 = vld [vmem:[%s222 + $0x3a0] sm:$0xff]
        %v1228 = vld [vmem:[%s222 + $0x3a8] sm:$0xff]
        %v1229 = vld [vmem:[%s222 + $0x3b0] sm:$0xff]
        %v1230 = vld [vmem:[%s222 + $0x3b8] sm:$0xff]
        %v1231 = vld [vmem:[%s222 + $0x3c0] sm:$0xff]
        %v1232 = vld [vmem:[%s222 + $0x3c8] sm:$0xff]
        %v1233 = vld [vmem:[%s222 + $0x3d0] sm:$0xff]
        %v1234 = vld [vmem:[%s222 + $0x3d8] sm:$0xff]
        %v1235 = vld [vmem:[%s222 + $0x3e0] sm:$0xff]
        %v1236 = vld [vmem:[%s222 + $0x3e8] sm:$0xff]
        %v1237 = vld [vmem:[%s222 + $0x3f0] sm:$0xff]
        %v1238 = vld [vmem:[%s222 + $0x3f8] sm:$0xff]
        %v1239 = vld [vmem:[%s222 + $0x400] sm:$0xff]
        %v1240 = vld [vmem:[%s222 + $0x408] sm:$0xff]
        %v1241 = vld [vmem:[%s222 + $0x410] sm:$0xff]
        %v1242 = vld [vmem:[%s222 + $0x418] sm:$0xff]
        %v1243 = vld [vmem:[%s222 + $0x420] sm:$0xff]
        %v1244 = vld [vmem:[%s222 + $0x428] sm:$0xff]
        %v1245 = vld [vmem:[%s222 + $0x430] sm:$0xff]
        %v1246 = vld [vmem:[%s222 + $0x438] sm:$0xff]
        %v1247 = vld [vmem:[%s222 + $0x440] sm:$0xff]
        %v1248 = vld [vmem:[%s222 + $0x448] sm:$0xff]
        %v1249 = vld [vmem:[%s222 + $0x450] sm:$0xff]
        %v1250 = vld [vmem:[%s222 + $0x458] sm:$0xff]
        %v1251 = vld [vmem:[%s222 + $0x460] sm:$0xff]
        %v1252 = vld [vmem:[%s222 + $0x468] sm:$0xff]
        %v1253 = vld [vmem:[%s222 + $0x470] sm:$0xff]
        %v1254 = vld [vmem:[%s222 + $0x478] sm:$0xff]
        %v1255 = vld [vmem:[%s222 + $0x480] sm:$0xff]
        %v1256 = vld [vmem:[%s222 + $0x488] sm:$0xff]
        %v1257 = vld [vmem:[%s222 + $0x490] sm:$0xff]
        %v1258 = vld [vmem:[%s222 + $0x498] sm:$0xff]
        %v1259 = vld [vmem:[%s222 + $0x4a0] sm:$0xff]
        %v1260 = vld [vmem:[%s222 + $0x4a8] sm:$0xff]
        %v1261 = vld [vmem:[%s222 + $0x4b0] sm:$0xff]
        %v1262 = vld [vmem:[%s222 + $0x4b8] sm:$0xff]
        %v1263 = vld [vmem:[%s222 + $0x4c0] sm:$0xff]
        %v1264 = vld [vmem:[%s222 + $0x4c8] sm:$0xff]
        %v1265 = vld [vmem:[%s222 + $0x4d0] sm:$0xff]
        %v1266 = vld [vmem:[%s222 + $0x4d8] sm:$0xff]
        %v1267 = vld [vmem:[%s222 + $0x4e0] sm:$0xff]
        %v1268 = vld [vmem:[%s222 + $0x4e8] sm:$0xff]
        %v1269 = vld [vmem:[%s222 + $0x4f0] sm:$0xff]
        %v1270 = vld [vmem:[%s222 + $0x4f8] sm:$0xff]
        %v1271 = vld [vmem:[%s222 + $0x500] sm:$0xff]
        %v1272 = vld [vmem:[%s222 + $0x508] sm:$0xff]
        %v1273 = vld [vmem:[%s222 + $0x510] sm:$0xff]
        %v1274 = vld [vmem:[%s222 + $0x518] sm:$0xff]
        %v1275 = vld [vmem:[%s222 + $0x520] sm:$0xff]
        %v1276 = vld [vmem:[%s222 + $0x528] sm:$0xff]
        %v1277 = vld [vmem:[%s222 + $0x530] sm:$0xff]
        %v1278 = vld [vmem:[%s222 + $0x538] sm:$0xff]
        %v1279 = vld [vmem:[%s222 + $0x540] sm:$0xff]
        %v1280 = vld [vmem:[%s222 + $0x548] sm:$0xff]
        %v1281 = vld [vmem:[%s222 + $0x550] sm:$0xff]
        %v1282 = vld [vmem:[%s222 + $0x558] sm:$0xff]
        %v1283 = vld [vmem:[%s222 + $0x560] sm:$0xff]
        %v1284 = vld [vmem:[%s222 + $0x568] sm:$0xff]
        %v1285 = vld [vmem:[%s222 + $0x570] sm:$0xff]
        %v1286 = vld [vmem:[%s222 + $0x578] sm:$0xff]
        %v1287 = vld [vmem:[%s222 + $0x580] sm:$0xff]
        %v1288 = vld [vmem:[%s222 + $0x588] sm:$0xff]
        %v1289 = vld [vmem:[%s222 + $0x590] sm:$0xff]
        %v1290 = vld [vmem:[%s222 + $0x598] sm:$0xff]
        %v1291 = vld [vmem:[%s222 + $0x5a0] sm:$0xff]
        %v1292 = vld [vmem:[%s222 + $0x5a8] sm:$0xff]
        %v1293 = vld [vmem:[%s222 + $0x5b0] sm:$0xff]
        %v1294 = vld [vmem:[%s222 + $0x5b8] sm:$0xff]
        %v1295 = vld [vmem:[%s222 + $0x5c0] sm:$0xff]
        %v1296 = vld [vmem:[%s222 + $0x5c8] sm:$0xff]
        %v1297 = vld [vmem:[%s222 + $0x5d0] sm:$0xff]
        %v1298 = vld [vmem:[%s222 + $0x5d8] sm:$0xff]
        %v1299 = vld [vmem:[%s222 + $0x5e0] sm:$0xff]
        %v1300 = vld [vmem:[%s222 + $0x5e8] sm:$0xff]
        %v1301 = vld [vmem:[%s222 + $0x5f0] sm:$0xff]
        %v1302 = vld [vmem:[%s222 + $0x5f8] sm:$0xff]
        %v1303 = vld [vmem:[%s222 + $0x600] sm:$0xff]
        %v1304 = vld [vmem:[%s222 + $0x608] sm:$0xff]
        %v1305 = vld [vmem:[%s222 + $0x610] sm:$0xff]
        %v1306 = vld [vmem:[%s222 + $0x618] sm:$0xff]
        %v1307 = vld [vmem:[%s222 + $0x620] sm:$0xff]
        %v1308 = vld [vmem:[%s222 + $0x628] sm:$0xff]
        %v1309 = vld [vmem:[%s222 + $0x630] sm:$0xff]
        %v1310 = vld [vmem:[%s222 + $0x638] sm:$0xff]
        %v1311 = vld [vmem:[%s222 + $0x640] sm:$0xff]
        %v1312 = vld [vmem:[%s222 + $0x648] sm:$0xff]
        %v1313 = vld [vmem:[%s222 + $0x650] sm:$0xff]
        %v1314 = vld [vmem:[%s222 + $0x658] sm:$0xff]
        %v1315 = vld [vmem:[%s222 + $0x660] sm:$0xff]
        %v1316 = vld [vmem:[%s222 + $0x668] sm:$0xff]
        %v1317 = vld [vmem:[%s222 + $0x670] sm:$0xff]
        %v1318 = vld [vmem:[%s222 + $0x678] sm:$0xff]
        %v1319 = vld [vmem:[%s222 + $0x680] sm:$0xff]
        %v1320 = vld [vmem:[%s222 + $0x688] sm:$0xff]
        %v1321 = vld [vmem:[%s222 + $0x690] sm:$0xff]
        %v1322 = vld [vmem:[%s222 + $0x698] sm:$0xff]
        %v1323 = vld [vmem:[%s222 + $0x6a0] sm:$0xff]
        %v1324 = vld [vmem:[%s222 + $0x6a8] sm:$0xff]
        %v1325 = vld [vmem:[%s222 + $0x6b0] sm:$0xff]
        %v1326 = vld [vmem:[%s222 + $0x6b8] sm:$0xff]
        %v1327 = vld [vmem:[%s222 + $0x6c0] sm:$0xff]
        %v1328 = vld [vmem:[%s222 + $0x6c8] sm:$0xff]
        %v1329 = vld [vmem:[%s222 + $0x6d0] sm:$0xff]
        %v1330 = vld [vmem:[%s222 + $0x6d8] sm:$0xff]
        %v1331 = vld [vmem:[%s222 + $0x6e0] sm:$0xff]
        %v1332 = vld [vmem:[%s222 + $0x6e8] sm:$0xff]
        %v1333 = vld [vmem:[%s222 + $0x6f0] sm:$0xff]
        %v1334 = vld [vmem:[%s222 + $0x6f8] sm:$0xff]
        %v1335 = vld [vmem:[%s222 + $0x700] sm:$0xff]
        %v1336 = vld [vmem:[%s222 + $0x708] sm:$0xff]
        %v1337 = vld [vmem:[%s222 + $0x710] sm:$0xff]
        %v1338 = vld [vmem:[%s222 + $0x718] sm:$0xff]
        %v1339 = vld [vmem:[%s222 + $0x720] sm:$0xff]
        %v1340 = vld [vmem:[%s222 + $0x728] sm:$0xff]
        %v1341 = vld [vmem:[%s222 + $0x730] sm:$0xff]
        %v1342 = vld [vmem:[%s222 + $0x738] sm:$0xff]
        %v1343 = vld [vmem:[%s222 + $0x740] sm:$0xff]
        %v1344 = vld [vmem:[%s222 + $0x748] sm:$0xff]
        %v1345 = vld [vmem:[%s222 + $0x750] sm:$0xff]
        %v1346 = vld [vmem:[%s222 + $0x758] sm:$0xff]
        %v1347 = vld [vmem:[%s222 + $0x760] sm:$0xff]
        %v1348 = vld [vmem:[%s222 + $0x768] sm:$0xff]
        %v1349 = vld [vmem:[%s222 + $0x770] sm:$0xff]
        %v1350 = vld [vmem:[%s222 + $0x778] sm:$0xff]
        %v1351 = vld [vmem:[%s222 + $0x780] sm:$0xff]
        %v1352 = vld [vmem:[%s222 + $0x788] sm:$0xff]
        %v1353 = vld [vmem:[%s222 + $0x790] sm:$0xff]
        %v1354 = vld [vmem:[%s222 + $0x798] sm:$0xff]
        %v1355 = vld [vmem:[%s222 + $0x7a0] sm:$0xff]
        %v1356 = vld [vmem:[%s222 + $0x7a8] sm:$0xff]
        %v1357 = vld [vmem:[%s222 + $0x7b0] sm:$0xff]
        %v1358 = vld [vmem:[%s222 + $0x7b8] sm:$0xff]
        %v1359 = vld [vmem:[%s222 + $0x7c0] sm:$0xff]
        %v1360 = vld [vmem:[%s222 + $0x7c8] sm:$0xff]
        %v1361 = vld [vmem:[%s222 + $0x7d0] sm:$0xff]
        %v1362 = vld [vmem:[%s222 + $0x7d8] sm:$0xff]
        %v1363 = vld [vmem:[%s222 + $0x7e0] sm:$0xff]
        %v1364 = vld [vmem:[%s222 + $0x7e8] sm:$0xff]
        %v1365 = vld [vmem:[%s222 + $0x7f0] sm:$0xff]
        %v1366 = vld [vmem:[%s222 + $0x7f8] sm:$0xff]
        %v1367 = vpack.c.bf16 %v478, %v473
        %v1368 = vpack.c.bf16 %v488, %v483
        %v1369 = vpack.c.bf16 %v498, %v493
        %v1370 = vpack.c.bf16 %v508, %v503
        %v1371 = vpack.c.bf16 %v518, %v513
        %v1372 = vpack.c.bf16 %v528, %v523
        %v1373 = vpack.c.bf16 %v538, %v533
        %v1374 = vpack.c.bf16 %v548, %v543
        %v1375 = vpack.c.bf16 %v558, %v553
        %v1376 = vpack.c.bf16 %v568, %v563
        %v1377 = vpack.c.bf16 %v578, %v573
        %v1378 = vpack.c.bf16 %v588, %v583
        %v1379 = vpack.c.bf16 %v598, %v593
        %v1380 = vpack.c.bf16 %v608, %v603
        %v1381 = vpack.c.bf16 %v618, %v613
        %v1382 = vpack.c.bf16 %v628, %v623
        %v1383 = vpack.c.bf16 %v638, %v633
        %v1384 = vpack.c.bf16 %v648, %v643
        %v1385 = vpack.c.bf16 %v658, %v653
        %v1386 = vpack.c.bf16 %v668, %v663
        %v1387 = vpack.c.bf16 %v678, %v673
        %v1388 = vpack.c.bf16 %v688, %v683
        %v1389 = vpack.c.bf16 %v698, %v693
        %v1390 = vpack.c.bf16 %v708, %v703
        %v1391 = vpack.c.bf16 %v718, %v713
        %v1392 = vpack.c.bf16 %v728, %v723
        %v1393 = vpack.c.bf16 %v738, %v733
        %v1394 = vpack.c.bf16 %v748, %v743
        %v1395 = vpack.c.bf16 %v758, %v753
        %v1396 = vpack.c.bf16 %v768, %v763
        %v1397 = vpack.c.bf16 %v778, %v773
        %v1398 = vpack.c.bf16 %v788, %v783
        %v1399 = vpack.c.bf16 %v798, %v793
        %v1400 = vpack.c.bf16 %v808, %v803
        %v1401 = vpack.c.bf16 %v818, %v813
        %v1402 = vpack.c.bf16 %v828, %v823
        %v1403 = vpack.c.bf16 %v838, %v833
        %v1404 = vpack.c.bf16 %v848, %v843
        %v1405 = vpack.c.bf16 %v858, %v853
        %v1406 = vpack.c.bf16 %v868, %v863
        %v1407 = vpack.c.bf16 %v878, %v873
        %v1408 = vpack.c.bf16 %v888, %v883
        %v1409 = vpack.c.bf16 %v898, %v893
        %v1410 = vpack.c.bf16 %v908, %v903
        %v1411 = vpack.c.bf16 %v918, %v913
        %v1412 = vpack.c.bf16 %v928, %v923
        %v1413 = vpack.c.bf16 %v938, %v933
        %v1414 = vpack.c.bf16 %v948, %v943
        %v1415 = vpack.c.bf16 %v958, %v953
        %v1416 = vpack.c.bf16 %v968, %v963
        %v1417 = vpack.c.bf16 %v978, %v973
        %v1418 = vpack.c.bf16 %v988, %v983
        %v1419 = vpack.c.bf16 %v998, %v993
        %v1420 = vpack.c.bf16 %v1008, %v1003
        %v1421 = vpack.c.bf16 %v1018, %v1013
        %v1422 = vpack.c.bf16 %v1028, %v1023
        %v1423 = vpack.c.bf16 %v1038, %v1033
        %v1424 = vpack.c.bf16 %v1048, %v1043
        %v1425 = vpack.c.bf16 %v1058, %v1053
        %v1426 = vpack.c.bf16 %v1068, %v1063
        %v1427 = vpack.c.bf16 %v1078, %v1073
        %v1428 = vpack.c.bf16 %v1088, %v1083
        %v1429 = vpack.c.bf16 %v1098, %v1093
        %v1430 = vpack.c.bf16 %v1108, %v1103
        %v1431 = vld [vmem:[#allocation8] sm:$0x1]
        %v1433 = vlaneseq
        %v1434 = vshrl.u32 %v1433, 7
        %v1435 = vsub.s32 0, %v1434
        %v1436 = vrot.slane %v1431, %v1435
        %v1694 = vunpack.c.l.b16 %v1111
        %v1695 = vunpack.c.h.b16 %v1111
        %v1696 = vunpack.c.l.b16 %v1112
        %v1697 = vunpack.c.h.b16 %v1112
        %v1698 = vunpack.c.l.b16 %v1113
        %v1699 = vunpack.c.h.b16 %v1113
        %v1700 = vunpack.c.l.b16 %v1114
        %v1701 = vunpack.c.h.b16 %v1114
        %v1702 = vunpack.c.l.b16 %v1115
        %v1703 = vunpack.c.h.b16 %v1115
        %v1704 = vunpack.c.l.b16 %v1116
        %v1705 = vunpack.c.h.b16 %v1116
        %v1706 = vunpack.c.l.b16 %v1117
        %v1707 = vunpack.c.h.b16 %v1117
        %v1708 = vunpack.c.l.b16 %v1118
        %v1709 = vunpack.c.h.b16 %v1118
        %v1710 = vunpack.c.l.b16 %v1119
        %v1711 = vunpack.c.h.b16 %v1119
        %v1712 = vunpack.c.l.b16 %v1120
        %v1713 = vunpack.c.h.b16 %v1120
        %v1714 = vunpack.c.l.b16 %v1121
        %v1715 = vunpack.c.h.b16 %v1121
        %v1716 = vunpack.c.l.b16 %v1122
        %v1717 = vunpack.c.h.b16 %v1122
        %v1718 = vunpack.c.l.b16 %v1123
        %v1719 = vunpack.c.h.b16 %v1123
        %v1720 = vunpack.c.l.b16 %v1124
        %v1721 = vunpack.c.h.b16 %v1124
        %v1722 = vunpack.c.l.b16 %v1125
        %v1723 = vunpack.c.h.b16 %v1125
        %v1724 = vunpack.c.l.b16 %v1126
        %v1725 = vunpack.c.h.b16 %v1126
        %v1726 = vunpack.c.l.b16 %v1127
        %v1727 = vunpack.c.h.b16 %v1127
        %v1728 = vunpack.c.l.b16 %v1128
        %v1729 = vunpack.c.h.b16 %v1128
        %v1730 = vunpack.c.l.b16 %v1129
        %v1731 = vunpack.c.h.b16 %v1129
        %v1732 = vunpack.c.l.b16 %v1130
        %v1733 = vunpack.c.h.b16 %v1130
        %v1734 = vunpack.c.l.b16 %v1131
        %v1735 = vunpack.c.h.b16 %v1131
        %v1736 = vunpack.c.l.b16 %v1132
        %v1737 = vunpack.c.h.b16 %v1132
        %v1738 = vunpack.c.l.b16 %v1133
        %v1739 = vunpack.c.h.b16 %v1133
        %v1740 = vunpack.c.l.b16 %v1134
        %v1741 = vunpack.c.h.b16 %v1134
        %v1742 = vunpack.c.l.b16 %v1135
        %v1743 = vunpack.c.h.b16 %v1135
        %v1744 = vunpack.c.l.b16 %v1136
        %v1745 = vunpack.c.h.b16 %v1136
        %v1746 = vunpack.c.l.b16 %v1137
        %v1747 = vunpack.c.h.b16 %v1137
        %v1748 = vunpack.c.l.b16 %v1138
        %v1749 = vunpack.c.h.b16 %v1138
        %v1750 = vunpack.c.l.b16 %v1139
        %v1751 = vunpack.c.h.b16 %v1139
        %v1752 = vunpack.c.l.b16 %v1140
        %v1753 = vunpack.c.h.b16 %v1140
        %v1754 = vunpack.c.l.b16 %v1141
        %v1755 = vunpack.c.h.b16 %v1141
        %v1756 = vunpack.c.l.b16 %v1142
        %v1757 = vunpack.c.h.b16 %v1142
        %v1758 = vunpack.c.l.b16 %v1143
        %v1759 = vunpack.c.h.b16 %v1143
        %v1760 = vunpack.c.l.b16 %v1144
        %v1761 = vunpack.c.h.b16 %v1144
        %v1762 = vunpack.c.l.b16 %v1145
        %v1763 = vunpack.c.h.b16 %v1145
        %v1764 = vunpack.c.l.b16 %v1146
        %v1765 = vunpack.c.h.b16 %v1146
        %v1766 = vunpack.c.l.b16 %v1147
        %v1767 = vunpack.c.h.b16 %v1147
        %v1768 = vunpack.c.l.b16 %v1148
        %v1769 = vunpack.c.h.b16 %v1148
        %v1770 = vunpack.c.l.b16 %v1149
        %v1771 = vunpack.c.h.b16 %v1149
        %v1772 = vunpack.c.l.b16 %v1150
        %v1773 = vunpack.c.h.b16 %v1150
        %v1774 = vunpack.c.l.b16 %v1151
        %v1775 = vunpack.c.h.b16 %v1151
        %v1776 = vunpack.c.l.b16 %v1152
        %v1777 = vunpack.c.h.b16 %v1152
        %v1778 = vunpack.c.l.b16 %v1153
        %v1779 = vunpack.c.h.b16 %v1153
        %v1780 = vunpack.c.l.b16 %v1154
        %v1781 = vunpack.c.h.b16 %v1154
        %v1782 = vunpack.c.l.b16 %v1155
        %v1783 = vunpack.c.h.b16 %v1155
        %v1784 = vunpack.c.l.b16 %v1156
        %v1785 = vunpack.c.h.b16 %v1156
        %v1786 = vunpack.c.l.b16 %v1157
        %v1787 = vunpack.c.h.b16 %v1157
        %v1788 = vunpack.c.l.b16 %v1158
        %v1789 = vunpack.c.h.b16 %v1158
        %v1790 = vunpack.c.l.b16 %v1159
        %v1791 = vunpack.c.h.b16 %v1159
        %v1792 = vunpack.c.l.b16 %v1160
        %v1793 = vunpack.c.h.b16 %v1160
        %v1794 = vunpack.c.l.b16 %v1161
        %v1795 = vunpack.c.h.b16 %v1161
        %v1796 = vunpack.c.l.b16 %v1162
        %v1797 = vunpack.c.h.b16 %v1162
        %v1798 = vunpack.c.l.b16 %v1163
        %v1799 = vunpack.c.h.b16 %v1163
        %v1800 = vunpack.c.l.b16 %v1164
        %v1801 = vunpack.c.h.b16 %v1164
        %v1802 = vunpack.c.l.b16 %v1165
        %v1803 = vunpack.c.h.b16 %v1165
        %v1804 = vunpack.c.l.b16 %v1166
        %v1805 = vunpack.c.h.b16 %v1166
        %v1806 = vunpack.c.l.b16 %v1167
        %v1807 = vunpack.c.h.b16 %v1167
        %v1808 = vunpack.c.l.b16 %v1168
        %v1809 = vunpack.c.h.b16 %v1168
        %v1810 = vunpack.c.l.b16 %v1169
        %v1811 = vunpack.c.h.b16 %v1169
        %v1812 = vunpack.c.l.b16 %v1170
        %v1813 = vunpack.c.h.b16 %v1170
        %v1814 = vunpack.c.l.b16 %v1171
        %v1815 = vunpack.c.h.b16 %v1171
        %v1816 = vunpack.c.l.b16 %v1172
        %v1817 = vunpack.c.h.b16 %v1172
        %v1818 = vunpack.c.l.b16 %v1173
        %v1819 = vunpack.c.h.b16 %v1173
        %v1820 = vunpack.c.l.b16 %v1174
        %v1821 = vunpack.c.h.b16 %v1174
        %v1822 = vunpack.c.l.b16 %v1175
        %v1823 = vunpack.c.h.b16 %v1175
        %v1824 = vunpack.c.l.b16 %v1176
        %v1825 = vunpack.c.h.b16 %v1176
        %v1826 = vunpack.c.l.b16 %v1177
        %v1827 = vunpack.c.h.b16 %v1177
        %v1828 = vunpack.c.l.b16 %v1178
        %v1829 = vunpack.c.h.b16 %v1178
        %v1830 = vunpack.c.l.b16 %v1179
        %v1831 = vunpack.c.h.b16 %v1179
        %v1832 = vunpack.c.l.b16 %v1180
        %v1833 = vunpack.c.h.b16 %v1180
        %v1834 = vunpack.c.l.b16 %v1181
        %v1835 = vunpack.c.h.b16 %v1181
        %v1836 = vunpack.c.l.b16 %v1182
        %v1837 = vunpack.c.h.b16 %v1182
        %v1838 = vunpack.c.l.b16 %v1183
        %v1839 = vunpack.c.h.b16 %v1183
        %v1840 = vunpack.c.l.b16 %v1184
        %v1841 = vunpack.c.h.b16 %v1184
        %v1842 = vunpack.c.l.b16 %v1185
        %v1843 = vunpack.c.h.b16 %v1185
        %v1844 = vunpack.c.l.b16 %v1186
        %v1845 = vunpack.c.h.b16 %v1186
        %v1846 = vunpack.c.l.b16 %v1187
        %v1847 = vunpack.c.h.b16 %v1187
        %v1848 = vunpack.c.l.b16 %v1188
        %v1849 = vunpack.c.h.b16 %v1188
        %v1850 = vunpack.c.l.b16 %v1189
        %v1851 = vunpack.c.h.b16 %v1189
        %v1852 = vunpack.c.l.b16 %v1190
        %v1853 = vunpack.c.h.b16 %v1190
        %v1854 = vunpack.c.l.b16 %v1191
        %v1855 = vunpack.c.h.b16 %v1191
        %v1856 = vunpack.c.l.b16 %v1192
        %v1857 = vunpack.c.h.b16 %v1192
        %v1858 = vunpack.c.l.b16 %v1193
        %v1859 = vunpack.c.h.b16 %v1193
        %v1860 = vunpack.c.l.b16 %v1194
        %v1861 = vunpack.c.h.b16 %v1194
        %v1862 = vunpack.c.l.b16 %v1195
        %v1863 = vunpack.c.h.b16 %v1195
        %v1864 = vunpack.c.l.b16 %v1196
        %v1865 = vunpack.c.h.b16 %v1196
        %v1866 = vunpack.c.l.b16 %v1197
        %v1867 = vunpack.c.h.b16 %v1197
        %v1868 = vunpack.c.l.b16 %v1198
        %v1869 = vunpack.c.h.b16 %v1198
        %v1870 = vunpack.c.l.b16 %v1199
        %v1871 = vunpack.c.h.b16 %v1199
        %v1872 = vunpack.c.l.b16 %v1200
        %v1873 = vunpack.c.h.b16 %v1200
        %v1874 = vunpack.c.l.b16 %v1201
        %v1875 = vunpack.c.h.b16 %v1201
        %v1876 = vunpack.c.l.b16 %v1202
        %v1877 = vunpack.c.h.b16 %v1202
        %v1878 = vunpack.c.l.b16 %v1203
        %v1879 = vunpack.c.h.b16 %v1203
        %v1880 = vunpack.c.l.b16 %v1204
        %v1881 = vunpack.c.h.b16 %v1204
        %v1882 = vunpack.c.l.b16 %v1205
        %v1883 = vunpack.c.h.b16 %v1205
        %v1884 = vunpack.c.l.b16 %v1206
        %v1885 = vunpack.c.h.b16 %v1206
        %v1886 = vunpack.c.l.b16 %v1207
        %v1887 = vunpack.c.h.b16 %v1207
        %v1888 = vunpack.c.l.b16 %v1208
        %v1889 = vunpack.c.h.b16 %v1208
        %v1890 = vunpack.c.l.b16 %v1209
        %v1891 = vunpack.c.h.b16 %v1209
        %v1892 = vunpack.c.l.b16 %v1210
        %v1893 = vunpack.c.h.b16 %v1210
        %v1894 = vunpack.c.l.b16 %v1211
        %v1895 = vunpack.c.h.b16 %v1211
        %v1896 = vunpack.c.l.b16 %v1212
        %v1897 = vunpack.c.h.b16 %v1212
        %v1898 = vunpack.c.l.b16 %v1213
        %v1899 = vunpack.c.h.b16 %v1213
        %v1900 = vunpack.c.l.b16 %v1214
        %v1901 = vunpack.c.h.b16 %v1214
        %v1902 = vunpack.c.l.b16 %v1215
        %v1903 = vunpack.c.h.b16 %v1215
        %v1904 = vunpack.c.l.b16 %v1216
        %v1905 = vunpack.c.h.b16 %v1216
        %v1906 = vunpack.c.l.b16 %v1217
        %v1907 = vunpack.c.h.b16 %v1217
        %v1908 = vunpack.c.l.b16 %v1218
        %v1909 = vunpack.c.h.b16 %v1218
        %v1910 = vunpack.c.l.b16 %v1219
        %v1911 = vunpack.c.h.b16 %v1219
        %v1912 = vunpack.c.l.b16 %v1220
        %v1913 = vunpack.c.h.b16 %v1220
        %v1914 = vunpack.c.l.b16 %v1221
        %v1915 = vunpack.c.h.b16 %v1221
        %v1916 = vunpack.c.l.b16 %v1222
        %v1917 = vunpack.c.h.b16 %v1222
        %v1918 = vunpack.c.l.b16 %v1223
        %v1919 = vunpack.c.h.b16 %v1223
        %v1920 = vunpack.c.l.b16 %v1224
        %v1921 = vunpack.c.h.b16 %v1224
        %v1922 = vunpack.c.l.b16 %v1225
        %v1923 = vunpack.c.h.b16 %v1225
        %v1924 = vunpack.c.l.b16 %v1226
        %v1925 = vunpack.c.h.b16 %v1226
        %v1926 = vunpack.c.l.b16 %v1227
        %v1927 = vunpack.c.h.b16 %v1227
        %v1928 = vunpack.c.l.b16 %v1228
        %v1929 = vunpack.c.h.b16 %v1228
        %v1930 = vunpack.c.l.b16 %v1229
        %v1931 = vunpack.c.h.b16 %v1229
        %v1932 = vunpack.c.l.b16 %v1230
        %v1933 = vunpack.c.h.b16 %v1230
        %v1934 = vunpack.c.l.b16 %v1231
        %v1935 = vunpack.c.h.b16 %v1231
        %v1936 = vunpack.c.l.b16 %v1232
        %v1937 = vunpack.c.h.b16 %v1232
        %v1938 = vunpack.c.l.b16 %v1233
        %v1939 = vunpack.c.h.b16 %v1233
        %v1940 = vunpack.c.l.b16 %v1234
        %v1941 = vunpack.c.h.b16 %v1234
        %v1942 = vunpack.c.l.b16 %v1235
        %v1943 = vunpack.c.h.b16 %v1235
        %v1944 = vunpack.c.l.b16 %v1236
        %v1945 = vunpack.c.h.b16 %v1236
        %v1946 = vunpack.c.l.b16 %v1237
        %v1947 = vunpack.c.h.b16 %v1237
        %v1948 = vunpack.c.l.b16 %v1238
        %v1949 = vunpack.c.h.b16 %v1238
        %v1950 = vunpack.c.l.b16 %v1239
        %v1951 = vunpack.c.h.b16 %v1239
        %v1952 = vunpack.c.l.b16 %v1240
        %v1953 = vunpack.c.h.b16 %v1240
        %v1954 = vunpack.c.l.b16 %v1241
        %v1955 = vunpack.c.h.b16 %v1241
        %v1956 = vunpack.c.l.b16 %v1242
        %v1957 = vunpack.c.h.b16 %v1242
        %v1958 = vunpack.c.l.b16 %v1243
        %v1959 = vunpack.c.h.b16 %v1243
        %v1960 = vunpack.c.l.b16 %v1244
        %v1961 = vunpack.c.h.b16 %v1244
        %v1962 = vunpack.c.l.b16 %v1245
        %v1963 = vunpack.c.h.b16 %v1245
        %v1964 = vunpack.c.l.b16 %v1246
        %v1965 = vunpack.c.h.b16 %v1246
        %v1966 = vunpack.c.l.b16 %v1247
        %v1967 = vunpack.c.h.b16 %v1247
        %v1968 = vunpack.c.l.b16 %v1248
        %v1969 = vunpack.c.h.b16 %v1248
        %v1970 = vunpack.c.l.b16 %v1249
        %v1971 = vunpack.c.h.b16 %v1249
        %v1972 = vunpack.c.l.b16 %v1250
        %v1973 = vunpack.c.h.b16 %v1250
        %v1974 = vunpack.c.l.b16 %v1251
        %v1975 = vunpack.c.h.b16 %v1251
        %v1976 = vunpack.c.l.b16 %v1252
        %v1977 = vunpack.c.h.b16 %v1252
        %v1978 = vunpack.c.l.b16 %v1253
        %v1979 = vunpack.c.h.b16 %v1253
        %v1980 = vunpack.c.l.b16 %v1254
        %v1981 = vunpack.c.h.b16 %v1254
        %v1982 = vunpack.c.l.b16 %v1255
        %v1983 = vunpack.c.h.b16 %v1255
        %v1984 = vunpack.c.l.b16 %v1256
        %v1985 = vunpack.c.h.b16 %v1256
        %v1986 = vunpack.c.l.b16 %v1257
        %v1987 = vunpack.c.h.b16 %v1257
        %v1988 = vunpack.c.l.b16 %v1258
        %v1989 = vunpack.c.h.b16 %v1258
        %v1990 = vunpack.c.l.b16 %v1259
        %v1991 = vunpack.c.h.b16 %v1259
        %v1992 = vunpack.c.l.b16 %v1260
        %v1993 = vunpack.c.h.b16 %v1260
        %v1994 = vunpack.c.l.b16 %v1261
        %v1995 = vunpack.c.h.b16 %v1261
        %v1996 = vunpack.c.l.b16 %v1262
        %v1997 = vunpack.c.h.b16 %v1262
        %v1998 = vunpack.c.l.b16 %v1263
        %v1999 = vunpack.c.h.b16 %v1263
        %v2000 = vunpack.c.l.b16 %v1264
        %v2001 = vunpack.c.h.b16 %v1264
        %v2002 = vunpack.c.l.b16 %v1265
        %v2003 = vunpack.c.h.b16 %v1265
        %v2004 = vunpack.c.l.b16 %v1266
        %v2005 = vunpack.c.h.b16 %v1266
        %v2006 = vunpack.c.l.b16 %v1267
        %v2007 = vunpack.c.h.b16 %v1267
        %v2008 = vunpack.c.l.b16 %v1268
        %v2009 = vunpack.c.h.b16 %v1268
        %v2010 = vunpack.c.l.b16 %v1269
        %v2011 = vunpack.c.h.b16 %v1269
        %v2012 = vunpack.c.l.b16 %v1270
        %v2013 = vunpack.c.h.b16 %v1270
        %v2014 = vunpack.c.l.b16 %v1271
        %v2015 = vunpack.c.h.b16 %v1271
        %v2016 = vunpack.c.l.b16 %v1272
        %v2017 = vunpack.c.h.b16 %v1272
        %v2018 = vunpack.c.l.b16 %v1273
        %v2019 = vunpack.c.h.b16 %v1273
        %v2020 = vunpack.c.l.b16 %v1274
        %v2021 = vunpack.c.h.b16 %v1274
        %v2022 = vunpack.c.l.b16 %v1275
        %v2023 = vunpack.c.h.b16 %v1275
        %v2024 = vunpack.c.l.b16 %v1276
        %v2025 = vunpack.c.h.b16 %v1276
        %v2026 = vunpack.c.l.b16 %v1277
        %v2027 = vunpack.c.h.b16 %v1277
        %v2028 = vunpack.c.l.b16 %v1278
        %v2029 = vunpack.c.h.b16 %v1278
        %v2030 = vunpack.c.l.b16 %v1279
        %v2031 = vunpack.c.h.b16 %v1279
        %v2032 = vunpack.c.l.b16 %v1280
        %v2033 = vunpack.c.h.b16 %v1280
        %v2034 = vunpack.c.l.b16 %v1281
        %v2035 = vunpack.c.h.b16 %v1281
        %v2036 = vunpack.c.l.b16 %v1282
        %v2037 = vunpack.c.h.b16 %v1282
        %v2038 = vunpack.c.l.b16 %v1283
        %v2039 = vunpack.c.h.b16 %v1283
        %v2040 = vunpack.c.l.b16 %v1284
        %v2041 = vunpack.c.h.b16 %v1284
        %v2042 = vunpack.c.l.b16 %v1285
        %v2043 = vunpack.c.h.b16 %v1285
        %v2044 = vunpack.c.l.b16 %v1286
        %v2045 = vunpack.c.h.b16 %v1286
        %v2046 = vunpack.c.l.b16 %v1287
        %v2047 = vunpack.c.h.b16 %v1287
        %v2048 = vunpack.c.l.b16 %v1288
        %v2049 = vunpack.c.h.b16 %v1288
        %v2050 = vunpack.c.l.b16 %v1289
        %v2051 = vunpack.c.h.b16 %v1289
        %v2052 = vunpack.c.l.b16 %v1290
        %v2053 = vunpack.c.h.b16 %v1290
        %v2054 = vunpack.c.l.b16 %v1291
        %v2055 = vunpack.c.h.b16 %v1291
        %v2056 = vunpack.c.l.b16 %v1292
        %v2057 = vunpack.c.h.b16 %v1292
        %v2058 = vunpack.c.l.b16 %v1293
        %v2059 = vunpack.c.h.b16 %v1293
        %v2060 = vunpack.c.l.b16 %v1294
        %v2061 = vunpack.c.h.b16 %v1294
        %v2062 = vunpack.c.l.b16 %v1295
        %v2063 = vunpack.c.h.b16 %v1295
        %v2064 = vunpack.c.l.b16 %v1296
        %v2065 = vunpack.c.h.b16 %v1296
        %v2066 = vunpack.c.l.b16 %v1297
        %v2067 = vunpack.c.h.b16 %v1297
        %v2068 = vunpack.c.l.b16 %v1298
        %v2069 = vunpack.c.h.b16 %v1298
        %v2070 = vunpack.c.l.b16 %v1299
        %v2071 = vunpack.c.h.b16 %v1299
        %v2072 = vunpack.c.l.b16 %v1300
        %v2073 = vunpack.c.h.b16 %v1300
        %v2074 = vunpack.c.l.b16 %v1301
        %v2075 = vunpack.c.h.b16 %v1301
        %v2076 = vunpack.c.l.b16 %v1302
        %v2077 = vunpack.c.h.b16 %v1302
        %v2078 = vunpack.c.l.b16 %v1303
        %v2079 = vunpack.c.h.b16 %v1303
        %v2080 = vunpack.c.l.b16 %v1304
        %v2081 = vunpack.c.h.b16 %v1304
        %v2082 = vunpack.c.l.b16 %v1305
        %v2083 = vunpack.c.h.b16 %v1305
        %v2084 = vunpack.c.l.b16 %v1306
        %v2085 = vunpack.c.h.b16 %v1306
        %v2086 = vunpack.c.l.b16 %v1307
        %v2087 = vunpack.c.h.b16 %v1307
        %v2088 = vunpack.c.l.b16 %v1308
        %v2089 = vunpack.c.h.b16 %v1308
        %v2090 = vunpack.c.l.b16 %v1309
        %v2091 = vunpack.c.h.b16 %v1309
        %v2092 = vunpack.c.l.b16 %v1310
        %v2093 = vunpack.c.h.b16 %v1310
        %v2094 = vunpack.c.l.b16 %v1311
        %v2095 = vunpack.c.h.b16 %v1311
        %v2096 = vunpack.c.l.b16 %v1312
        %v2097 = vunpack.c.h.b16 %v1312
        %v2098 = vunpack.c.l.b16 %v1313
        %v2099 = vunpack.c.h.b16 %v1313
        %v2100 = vunpack.c.l.b16 %v1314
        %v2101 = vunpack.c.h.b16 %v1314
        %v2102 = vunpack.c.l.b16 %v1315
        %v2103 = vunpack.c.h.b16 %v1315
        %v2104 = vunpack.c.l.b16 %v1316
        %v2105 = vunpack.c.h.b16 %v1316
        %v2106 = vunpack.c.l.b16 %v1317
        %v2107 = vunpack.c.h.b16 %v1317
        %v2108 = vunpack.c.l.b16 %v1318
        %v2109 = vunpack.c.h.b16 %v1318
        %v2110 = vunpack.c.l.b16 %v1319
        %v2111 = vunpack.c.h.b16 %v1319
        %v2112 = vunpack.c.l.b16 %v1320
        %v2113 = vunpack.c.h.b16 %v1320
        %v2114 = vunpack.c.l.b16 %v1321
        %v2115 = vunpack.c.h.b16 %v1321
        %v2116 = vunpack.c.l.b16 %v1322
        %v2117 = vunpack.c.h.b16 %v1322
        %v2118 = vunpack.c.l.b16 %v1323
        %v2119 = vunpack.c.h.b16 %v1323
        %v2120 = vunpack.c.l.b16 %v1324
        %v2121 = vunpack.c.h.b16 %v1324
        %v2122 = vunpack.c.l.b16 %v1325
        %v2123 = vunpack.c.h.b16 %v1325
        %v2124 = vunpack.c.l.b16 %v1326
        %v2125 = vunpack.c.h.b16 %v1326
        %v2126 = vunpack.c.l.b16 %v1327
        %v2127 = vunpack.c.h.b16 %v1327
        %v2128 = vunpack.c.l.b16 %v1328
        %v2129 = vunpack.c.h.b16 %v1328
        %v2130 = vunpack.c.l.b16 %v1329
        %v2131 = vunpack.c.h.b16 %v1329
        %v2132 = vunpack.c.l.b16 %v1330
        %v2133 = vunpack.c.h.b16 %v1330
        %v2134 = vunpack.c.l.b16 %v1331
        %v2135 = vunpack.c.h.b16 %v1331
        %v2136 = vunpack.c.l.b16 %v1332
        %v2137 = vunpack.c.h.b16 %v1332
        %v2138 = vunpack.c.l.b16 %v1333
        %v2139 = vunpack.c.h.b16 %v1333
        %v2140 = vunpack.c.l.b16 %v1334
        %v2141 = vunpack.c.h.b16 %v1334
        %v2142 = vunpack.c.l.b16 %v1335
        %v2143 = vunpack.c.h.b16 %v1335
        %v2144 = vunpack.c.l.b16 %v1336
        %v2145 = vunpack.c.h.b16 %v1336
        %v2146 = vunpack.c.l.b16 %v1337
        %v2147 = vunpack.c.h.b16 %v1337
        %v2148 = vunpack.c.l.b16 %v1338
        %v2149 = vunpack.c.h.b16 %v1338
        %v2150 = vunpack.c.l.b16 %v1339
        %v2151 = vunpack.c.h.b16 %v1339
        %v2152 = vunpack.c.l.b16 %v1340
        %v2153 = vunpack.c.h.b16 %v1340
        %v2154 = vunpack.c.l.b16 %v1341
        %v2155 = vunpack.c.h.b16 %v1341
        %v2156 = vunpack.c.l.b16 %v1342
        %v2157 = vunpack.c.h.b16 %v1342
        %v2158 = vunpack.c.l.b16 %v1343
        %v2159 = vunpack.c.h.b16 %v1343
        %v2160 = vunpack.c.l.b16 %v1344
        %v2161 = vunpack.c.h.b16 %v1344
        %v2162 = vunpack.c.l.b16 %v1345
        %v2163 = vunpack.c.h.b16 %v1345
        %v2164 = vunpack.c.l.b16 %v1346
        %v2165 = vunpack.c.h.b16 %v1346
        %v2166 = vunpack.c.l.b16 %v1347
        %v2167 = vunpack.c.h.b16 %v1347
        %v2168 = vunpack.c.l.b16 %v1348
        %v2169 = vunpack.c.h.b16 %v1348
        %v2170 = vunpack.c.l.b16 %v1349
        %v2171 = vunpack.c.h.b16 %v1349
        %v2172 = vunpack.c.l.b16 %v1350
        %v2173 = vunpack.c.h.b16 %v1350
        %v2174 = vunpack.c.l.b16 %v1351
        %v2175 = vunpack.c.h.b16 %v1351
        %v2176 = vunpack.c.l.b16 %v1352
        %v2177 = vunpack.c.h.b16 %v1352
        %v2178 = vunpack.c.l.b16 %v1353
        %v2179 = vunpack.c.h.b16 %v1353
        %v2180 = vunpack.c.l.b16 %v1354
        %v2181 = vunpack.c.h.b16 %v1354
        %v2182 = vunpack.c.l.b16 %v1355
        %v2183 = vunpack.c.h.b16 %v1355
        %v2184 = vunpack.c.l.b16 %v1356
        %v2185 = vunpack.c.h.b16 %v1356
        %v2186 = vunpack.c.l.b16 %v1357
        %v2187 = vunpack.c.h.b16 %v1357
        %v2188 = vunpack.c.l.b16 %v1358
        %v2189 = vunpack.c.h.b16 %v1358
        %v2190 = vunpack.c.l.b16 %v1359
        %v2191 = vunpack.c.h.b16 %v1359
        %v2192 = vunpack.c.l.b16 %v1360
        %v2193 = vunpack.c.h.b16 %v1360
        %v2194 = vunpack.c.l.b16 %v1361
        %v2195 = vunpack.c.h.b16 %v1361
        %v2196 = vunpack.c.l.b16 %v1362
        %v2197 = vunpack.c.h.b16 %v1362
        %v2198 = vunpack.c.l.b16 %v1363
        %v2199 = vunpack.c.h.b16 %v1363
        %v2200 = vunpack.c.l.b16 %v1364
        %v2201 = vunpack.c.h.b16 %v1364
        %v2202 = vunpack.c.l.b16 %v1365
        %v2203 = vunpack.c.h.b16 %v1365
        %v2204 = vunpack.c.l.b16 %v1366
        %v2205 = vunpack.c.h.b16 %v1366
        %v2206 = vpack.c.b16 %v1702, %v1694
        %v2207 = vpack.c.b16 %v1703, %v1695
        %v2208 = vpack.c.b16 %v1704, %v1696
        %v2209 = vpack.c.b16 %v1705, %v1697
        %v2210 = vpack.c.b16 %v1706, %v1698
        %v2211 = vpack.c.b16 %v1707, %v1699
        %v2212 = vpack.c.b16 %v1708, %v1700
        %v2213 = vpack.c.b16 %v1709, %v1701
        %v2214 = vpack.c.b16 %v1718, %v1710
        %v2215 = vpack.c.b16 %v1719, %v1711
        %v2216 = vpack.c.b16 %v1720, %v1712
        %v2217 = vpack.c.b16 %v1721, %v1713
        %v2218 = vpack.c.b16 %v1722, %v1714
        %v2219 = vpack.c.b16 %v1723, %v1715
        %v2220 = vpack.c.b16 %v1724, %v1716
        %v2221 = vpack.c.b16 %v1725, %v1717
        %v2222 = vpack.c.b16 %v1734, %v1726
        %v2223 = vpack.c.b16 %v1735, %v1727
        %v2224 = vpack.c.b16 %v1736, %v1728
        %v2225 = vpack.c.b16 %v1737, %v1729
        %v2226 = vpack.c.b16 %v1738, %v1730
        %v2227 = vpack.c.b16 %v1739, %v1731
        %v2228 = vpack.c.b16 %v1740, %v1732
        %v2229 = vpack.c.b16 %v1741, %v1733
        %v2230 = vpack.c.b16 %v1750, %v1742
        %v2231 = vpack.c.b16 %v1751, %v1743
        %v2232 = vpack.c.b16 %v1752, %v1744
        %v2233 = vpack.c.b16 %v1753, %v1745
        %v2234 = vpack.c.b16 %v1754, %v1746
        %v2235 = vpack.c.b16 %v1755, %v1747
        %v2236 = vpack.c.b16 %v1756, %v1748
        %v2237 = vpack.c.b16 %v1757, %v1749
        %v2238 = vpack.c.b16 %v1766, %v1758
        %v2239 = vpack.c.b16 %v1767, %v1759
        %v2240 = vpack.c.b16 %v1768, %v1760
        %v2241 = vpack.c.b16 %v1769, %v1761
        %v2242 = vpack.c.b16 %v1770, %v1762
        %v2243 = vpack.c.b16 %v1771, %v1763
        %v2244 = vpack.c.b16 %v1772, %v1764
        %v2245 = vpack.c.b16 %v1773, %v1765
        %v2246 = vpack.c.b16 %v1782, %v1774
        %v2247 = vpack.c.b16 %v1783, %v1775
        %v2248 = vpack.c.b16 %v1784, %v1776
        %v2249 = vpack.c.b16 %v1785, %v1777
        %v2250 = vpack.c.b16 %v1786, %v1778
        %v2251 = vpack.c.b16 %v1787, %v1779
        %v2252 = vpack.c.b16 %v1788, %v1780
        %v2253 = vpack.c.b16 %v1789, %v1781
        %v2254 = vpack.c.b16 %v1798, %v1790
        %v2255 = vpack.c.b16 %v1799, %v1791
        %v2256 = vpack.c.b16 %v1800, %v1792
        %v2257 = vpack.c.b16 %v1801, %v1793
        %v2258 = vpack.c.b16 %v1802, %v1794
        %v2259 = vpack.c.b16 %v1803, %v1795
        %v2260 = vpack.c.b16 %v1804, %v1796
        %v2261 = vpack.c.b16 %v1805, %v1797
        %v2262 = vpack.c.b16 %v1814, %v1806
        %v2263 = vpack.c.b16 %v1815, %v1807
        %v2264 = vpack.c.b16 %v1816, %v1808
        %v2265 = vpack.c.b16 %v1817, %v1809
        %v2266 = vpack.c.b16 %v1818, %v1810
        %v2267 = vpack.c.b16 %v1819, %v1811
        %v2268 = vpack.c.b16 %v1820, %v1812
        %v2269 = vpack.c.b16 %v1821, %v1813
        %v2270 = vpack.c.b16 %v1830, %v1822
        %v2271 = vpack.c.b16 %v1831, %v1823
        %v2272 = vpack.c.b16 %v1832, %v1824
        %v2273 = vpack.c.b16 %v1833, %v1825
        %v2274 = vpack.c.b16 %v1834, %v1826
        %v2275 = vpack.c.b16 %v1835, %v1827
        %v2276 = vpack.c.b16 %v1836, %v1828
        %v2277 = vpack.c.b16 %v1837, %v1829
        %v2278 = vpack.c.b16 %v1846, %v1838
        %v2279 = vpack.c.b16 %v1847, %v1839
        %v2280 = vpack.c.b16 %v1848, %v1840
        %v2281 = vpack.c.b16 %v1849, %v1841
        %v2282 = vpack.c.b16 %v1850, %v1842
        %v2283 = vpack.c.b16 %v1851, %v1843
        %v2284 = vpack.c.b16 %v1852, %v1844
        %v2285 = vpack.c.b16 %v1853, %v1845
        %v2286 = vpack.c.b16 %v1862, %v1854
        %v2287 = vpack.c.b16 %v1863, %v1855
        %v2288 = vpack.c.b16 %v1864, %v1856
        %v2289 = vpack.c.b16 %v1865, %v1857
        %v2290 = vpack.c.b16 %v1866, %v1858
        %v2291 = vpack.c.b16 %v1867, %v1859
        %v2292 = vpack.c.b16 %v1868, %v1860
        %v2293 = vpack.c.b16 %v1869, %v1861
        %v2294 = vpack.c.b16 %v1878, %v1870
        %v2295 = vpack.c.b16 %v1879, %v1871
        %v2296 = vpack.c.b16 %v1880, %v1872
        %v2297 = vpack.c.b16 %v1881, %v1873
        %v2298 = vpack.c.b16 %v1882, %v1874
        %v2299 = vpack.c.b16 %v1883, %v1875
        %v2300 = vpack.c.b16 %v1884, %v1876
        %v2301 = vpack.c.b16 %v1885, %v1877
        %v2302 = vpack.c.b16 %v1894, %v1886
        %v2303 = vpack.c.b16 %v1895, %v1887
        %v2304 = vpack.c.b16 %v1896, %v1888
        %v2305 = vpack.c.b16 %v1897, %v1889
        %v2306 = vpack.c.b16 %v1898, %v1890
        %v2307 = vpack.c.b16 %v1899, %v1891
        %v2308 = vpack.c.b16 %v1900, %v1892
        %v2309 = vpack.c.b16 %v1901, %v1893
        %v2310 = vpack.c.b16 %v1910, %v1902
        %v2311 = vpack.c.b16 %v1911, %v1903
        %v2312 = vpack.c.b16 %v1912, %v1904
        %v2313 = vpack.c.b16 %v1913, %v1905
        %v2314 = vpack.c.b16 %v1914, %v1906
        %v2315 = vpack.c.b16 %v1915, %v1907
        %v2316 = vpack.c.b16 %v1916, %v1908
        %v2317 = vpack.c.b16 %v1917, %v1909
        %v2318 = vpack.c.b16 %v1926, %v1918
        %v2319 = vpack.c.b16 %v1927, %v1919
        %v2320 = vpack.c.b16 %v1928, %v1920
        %v2321 = vpack.c.b16 %v1929, %v1921
        %v2322 = vpack.c.b16 %v1930, %v1922
        %v2323 = vpack.c.b16 %v1931, %v1923
        %v2324 = vpack.c.b16 %v1932, %v1924
        %v2325 = vpack.c.b16 %v1933, %v1925
        %v2326 = vpack.c.b16 %v1942, %v1934
        %v2327 = vpack.c.b16 %v1943, %v1935
        %v2328 = vpack.c.b16 %v1944, %v1936
        %v2329 = vpack.c.b16 %v1945, %v1937
        %v2330 = vpack.c.b16 %v1946, %v1938
        %v2331 = vpack.c.b16 %v1947, %v1939
        %v2332 = vpack.c.b16 %v1948, %v1940
        %v2333 = vpack.c.b16 %v1949, %v1941
        %v2334 = vpack.c.b16 %v1958, %v1950
        %v2335 = vpack.c.b16 %v1959, %v1951
        %v2336 = vpack.c.b16 %v1960, %v1952
        %v2337 = vpack.c.b16 %v1961, %v1953
        %v2338 = vpack.c.b16 %v1962, %v1954
        %v2339 = vpack.c.b16 %v1963, %v1955
        %v2340 = vpack.c.b16 %v1964, %v1956
        %v2341 = vpack.c.b16 %v1965, %v1957
        %v2342 = vpack.c.b16 %v1974, %v1966
        %v2343 = vpack.c.b16 %v1975, %v1967
        %v2344 = vpack.c.b16 %v1976, %v1968
        %v2345 = vpack.c.b16 %v1977, %v1969
        %v2346 = vpack.c.b16 %v1978, %v1970
        %v2347 = vpack.c.b16 %v1979, %v1971
        %v2348 = vpack.c.b16 %v1980, %v1972
        %v2349 = vpack.c.b16 %v1981, %v1973
        %v2350 = vpack.c.b16 %v1990, %v1982
        %v2351 = vpack.c.b16 %v1991, %v1983
        %v2352 = vpack.c.b16 %v1992, %v1984
        %v2353 = vpack.c.b16 %v1993, %v1985
        %v2354 = vpack.c.b16 %v1994, %v1986
        %v2355 = vpack.c.b16 %v1995, %v1987
        %v2356 = vpack.c.b16 %v1996, %v1988
        %v2357 = vpack.c.b16 %v1997, %v1989
        %v2358 = vpack.c.b16 %v2006, %v1998
        %v2359 = vpack.c.b16 %v2007, %v1999
        %v2360 = vpack.c.b16 %v2008, %v2000
        %v2361 = vpack.c.b16 %v2009, %v2001
        %v2362 = vpack.c.b16 %v2010, %v2002
        %v2363 = vpack.c.b16 %v2011, %v2003
        %v2364 = vpack.c.b16 %v2012, %v2004
        %v2365 = vpack.c.b16 %v2013, %v2005
        %v2366 = vpack.c.b16 %v2022, %v2014
        %v2367 = vpack.c.b16 %v2023, %v2015
        %v2368 = vpack.c.b16 %v2024, %v2016
        %v2369 = vpack.c.b16 %v2025, %v2017
        %v2370 = vpack.c.b16 %v2026, %v2018
        %v2371 = vpack.c.b16 %v2027, %v2019
        %v2372 = vpack.c.b16 %v2028, %v2020
        %v2373 = vpack.c.b16 %v2029, %v2021
        %v2374 = vpack.c.b16 %v2038, %v2030
        %v2375 = vpack.c.b16 %v2039, %v2031
        %v2376 = vpack.c.b16 %v2040, %v2032
        %v2377 = vpack.c.b16 %v2041, %v2033
        %v2378 = vpack.c.b16 %v2042, %v2034
        %v2379 = vpack.c.b16 %v2043, %v2035
        %v2380 = vpack.c.b16 %v2044, %v2036
        %v2381 = vpack.c.b16 %v2045, %v2037
        %v2382 = vpack.c.b16 %v2054, %v2046
        %v2383 = vpack.c.b16 %v2055, %v2047
        %v2384 = vpack.c.b16 %v2056, %v2048
        %v2385 = vpack.c.b16 %v2057, %v2049
        %v2386 = vpack.c.b16 %v2058, %v2050
        %v2387 = vpack.c.b16 %v2059, %v2051
        %v2388 = vpack.c.b16 %v2060, %v2052
        %v2389 = vpack.c.b16 %v2061, %v2053
        %v2390 = vpack.c.b16 %v2070, %v2062
        %v2391 = vpack.c.b16 %v2071, %v2063
        %v2392 = vpack.c.b16 %v2072, %v2064
        %v2393 = vpack.c.b16 %v2073, %v2065
        %v2394 = vpack.c.b16 %v2074, %v2066
        %v2395 = vpack.c.b16 %v2075, %v2067
        %v2396 = vpack.c.b16 %v2076, %v2068
        %v2397 = vpack.c.b16 %v2077, %v2069
        %v2398 = vpack.c.b16 %v2086, %v2078
        %v2399 = vpack.c.b16 %v2087, %v2079
        %v2400 = vpack.c.b16 %v2088, %v2080
        %v2401 = vpack.c.b16 %v2089, %v2081
        %v2402 = vpack.c.b16 %v2090, %v2082
        %v2403 = vpack.c.b16 %v2091, %v2083
        %v2404 = vpack.c.b16 %v2092, %v2084
        %v2405 = vpack.c.b16 %v2093, %v2085
        %v2406 = vpack.c.b16 %v2102, %v2094
        %v2407 = vpack.c.b16 %v2103, %v2095
        %v2408 = vpack.c.b16 %v2104, %v2096
        %v2409 = vpack.c.b16 %v2105, %v2097
        %v2410 = vpack.c.b16 %v2106, %v2098
        %v2411 = vpack.c.b16 %v2107, %v2099
        %v2412 = vpack.c.b16 %v2108, %v2100
        %v2413 = vpack.c.b16 %v2109, %v2101
        %v2414 = vpack.c.b16 %v2118, %v2110
        %v2415 = vpack.c.b16 %v2119, %v2111
        %v2416 = vpack.c.b16 %v2120, %v2112
        %v2417 = vpack.c.b16 %v2121, %v2113
        %v2418 = vpack.c.b16 %v2122, %v2114
        %v2419 = vpack.c.b16 %v2123, %v2115
        %v2420 = vpack.c.b16 %v2124, %v2116
        %v2421 = vpack.c.b16 %v2125, %v2117
        %v2422 = vpack.c.b16 %v2134, %v2126
        %v2423 = vpack.c.b16 %v2135, %v2127
        %v2424 = vpack.c.b16 %v2136, %v2128
        %v2425 = vpack.c.b16 %v2137, %v2129
        %v2426 = vpack.c.b16 %v2138, %v2130
        %v2427 = vpack.c.b16 %v2139, %v2131
        %v2428 = vpack.c.b16 %v2140, %v2132
        %v2429 = vpack.c.b16 %v2141, %v2133
        %v2430 = vpack.c.b16 %v2150, %v2142
        %v2431 = vpack.c.b16 %v2151, %v2143
        %v2432 = vpack.c.b16 %v2152, %v2144
        %v2433 = vpack.c.b16 %v2153, %v2145
        %v2434 = vpack.c.b16 %v2154, %v2146
        %v2435 = vpack.c.b16 %v2155, %v2147
        %v2436 = vpack.c.b16 %v2156, %v2148
        %v2437 = vpack.c.b16 %v2157, %v2149
        %v2438 = vpack.c.b16 %v2166, %v2158
        %v2439 = vpack.c.b16 %v2167, %v2159
        %v2440 = vpack.c.b16 %v2168, %v2160
        %v2441 = vpack.c.b16 %v2169, %v2161
        %v2442 = vpack.c.b16 %v2170, %v2162
        %v2443 = vpack.c.b16 %v2171, %v2163
        %v2444 = vpack.c.b16 %v2172, %v2164
        %v2445 = vpack.c.b16 %v2173, %v2165
        %v2446 = vpack.c.b16 %v2182, %v2174
        %v2447 = vpack.c.b16 %v2183, %v2175
        %v2448 = vpack.c.b16 %v2184, %v2176
        %v2449 = vpack.c.b16 %v2185, %v2177
        %v2450 = vpack.c.b16 %v2186, %v2178
        %v2451 = vpack.c.b16 %v2187, %v2179
        %v2452 = vpack.c.b16 %v2188, %v2180
        %v2453 = vpack.c.b16 %v2189, %v2181
        %v2454 = vpack.c.b16 %v2198, %v2190
        %v2455 = vpack.c.b16 %v2199, %v2191
        %v2456 = vpack.c.b16 %v2200, %v2192
        %v2457 = vpack.c.b16 %v2201, %v2193
        %v2458 = vpack.c.b16 %v2202, %v2194
        %v2459 = vpack.c.b16 %v2203, %v2195
        %v2460 = vpack.c.b16 %v2204, %v2196
        %v2461 = vpack.c.b16 %v2205, %v2197
        %2718 = vmatprep.subr.bf16.mxu0 0
        %2719 = vmatpush1.bf16.msra.mxu0 %v1367
        %2720 = vmatprep.subr.bf16.mxu0 0
        %2721 = vmatpush1.bf16.msra.mxu0 %v1368
        %2722 = vmatprep.subr.bf16.mxu0 0
        %2723 = vmatpush1.bf16.msra.mxu0 %v1369
        %2724 = vmatprep.subr.bf16.mxu0 0
        %2725 = vmatpush1.bf16.msra.mxu0 %v1370
        %2726 = vmatprep.subr.bf16.mxu0 0
        %2727 = vmatpush1.bf16.msra.mxu0 %v1371
        %2728 = vmatprep.subr.bf16.mxu0 0
        %2729 = vmatpush1.bf16.msra.mxu0 %v1372
        %2730 = vmatprep.subr.bf16.mxu0 0
        %2731 = vmatpush1.bf16.msra.mxu0 %v1373
        %2732 = vmatprep.subr.bf16.mxu0 0
        %2733 = vmatpush1.bf16.msra.mxu0 %v1374
        %2734 = vmatprep.subr.bf16.mxu0 0
        %2735 = vmatpush1.bf16.msra.mxu0 %v1375
        %2736 = vmatprep.subr.bf16.mxu0 0
        %2737 = vmatpush1.bf16.msra.mxu0 %v1376
        %2738 = vmatprep.subr.bf16.mxu0 0
        %2739 = vmatpush1.bf16.msra.mxu0 %v1377
        %2740 = vmatprep.subr.bf16.mxu0 0
        %2741 = vmatpush1.bf16.msra.mxu0 %v1378
        %2742 = vmatprep.subr.bf16.mxu0 0
        %2743 = vmatpush1.bf16.msra.mxu0 %v1379
        %2744 = vmatprep.subr.bf16.mxu0 0
        %2745 = vmatpush1.bf16.msra.mxu0 %v1380
        %2746 = vmatprep.subr.bf16.mxu0 0
        %2747 = vmatpush1.bf16.msra.mxu0 %v1381
        %2748 = vmatprep.subr.bf16.mxu0 0
        %2749 = vmatpush1.bf16.msra.mxu0 %v1382
        %2750 = vmatprep.mubr.bf16.mxu0 %v2207
        %2751 = vmatmul.mubr.bf16.gmra.mrb[0].mxu0 %v2206
        %v2752 = vpop.f32.mrb[0].mxu0
        %v2753 = vadd.f32 %v1436, %v2752
        %v2754 = vpop.f32.mrb[0].mxu0
        %v2755 = vpop.f32.mrb[0].mxu0
        %v2756 = vadd.f32 %v1436, %v2755
        %v2757 = vpop.f32.mrb[0].mxu0
        %2758 = vmatprep.mubr.bf16.mxu0 %v2215
        %2759 = vmatmul.mubr.bf16.gmra.mrb[0].mxu0 %v2214
        %v2760 = vpop.f32.mrb[0].mxu0
        %v2761 = vadd.f32 %v1436, %v2760
        %v2762 = vpop.f32.mrb[0].mxu0
        %v2763 = vpop.f32.mrb[0].mxu0
        %v2764 = vadd.f32 %v1436, %v2763
        %v2765 = vpop.f32.mrb[0].mxu0
        %2766 = vmatprep.mubr.bf16.mxu0 %v2223
        %2767 = vmatmul.mubr.bf16.gmra.mrb[0].mxu0 %v2222
        %v2768 = vpop.f32.mrb[0].mxu0
        %v2769 = vadd.f32 %v1436, %v2768
        %v2770 = vpop.f32.mrb[0].mxu0
        %v2771 = vpop.f32.mrb[0].mxu0
        %v2772 = vadd.f32 %v1436, %v2771
        %v2773 = vpop.f32.mrb[0].mxu0
        %2774 = vmatprep.mubr.bf16.mxu0 %v2231
        %2775 = vmatmul.mubr.bf16.gmra.mrb[0].mxu0 %v2230
        %v2776 = vpop.f32.mrb[0].mxu0
        %v2777 = vadd.f32 %v1436, %v2776
        %v2778 = vpop.f32.mrb[0].mxu0
        %v2779 = vpop.f32.mrb[0].mxu0
        %v2780 = vadd.f32 %v1436, %v2779
        %v2781 = vpop.f32.mrb[0].mxu0
        %2782 = vmatprep.mubr.bf16.mxu0 %v2239
        %2783 = vmatmul.mubr.bf16.gmra.mrb[0].mxu0 %v2238
        %v2784 = vpop.f32.mrb[0].mxu0
        %v2785 = vadd.f32 %v1436, %v2784
        %v2786 = vpop.f32.mrb[0].mxu0
        %v2787 = vpop.f32.mrb[0].mxu0
        %v2788 = vadd.f32 %v1436, %v2787
        %v2789 = vpop.f32.mrb[0].mxu0
        %2790 = vmatprep.mubr.bf16.mxu0 %v2247
        %2791 = vmatmul.mubr.bf16.gmra.mrb[0].mxu0 %v2246
        %v2792 = vpop.f32.mrb[0].mxu0
        %v2793 = vadd.f32 %v1436, %v2792
        %v2794 = vpop.f32.mrb[0].mxu0
        %v2795 = vpop.f32.mrb[0].mxu0
        %v2796 = vadd.f32 %v1436, %v2795
        %v2797 = vpop.f32.mrb[0].mxu0
        %2798 = vmatprep.mubr.bf16.mxu0 %v2255
        %2799 = vmatmul.mubr.bf16.gmra.mrb[0].mxu0 %v2254
        %v2800 = vpop.f32.mrb[0].mxu0
        %v2801 = vadd.f32 %v1436, %v2800
        %v2802 = vpop.f32.mrb[0].mxu0
        %v2803 = vpop.f32.mrb[0].mxu0
        %v2804 = vadd.f32 %v1436, %v2803
        %v2805 = vpop.f32.mrb[0].mxu0
        %2806 = vmatprep.mubr.bf16.mxu0 %v2263
        %2807 = vmatmul.mubr.bf16.gmra.mrb[0].mxu0 %v2262
        %v2808 = vpop.f32.mrb[0].mxu0
        %v2809 = vadd.f32 %v1436, %v2808
        %v2810 = vpop.f32.mrb[0].mxu0
        %v2811 = vpop.f32.mrb[0].mxu0
        %v2812 = vadd.f32 %v1436, %v2811
        %v2813 = vpop.f32.mrb[0].mxu0
        %2814 = vmatprep.mubr.bf16.mxu0 %v2271
        %2815 = vmatmul.mubr.bf16.gmra.mrb[0].mxu0 %v2270
        %v2816 = vpop.f32.mrb[0].mxu0
        %v2817 = vadd.f32 %v1436, %v2816
        %v2818 = vpop.f32.mrb[0].mxu0
        %v2819 = vpop.f32.mrb[0].mxu0
        %v2820 = vadd.f32 %v1436, %v2819
        %v2821 = vpop.f32.mrb[0].mxu0
        %2822 = vmatprep.mubr.bf16.mxu0 %v2279
        %2823 = vmatmul.mubr.bf16.gmra.mrb[0].mxu0 %v2278
        %v2824 = vpop.f32.mrb[0].mxu0
        %v2825 = vadd.f32 %v1436, %v2824
        %v2826 = vpop.f32.mrb[0].mxu0
        %v2827 = vpop.f32.mrb[0].mxu0
        %v2828 = vadd.f32 %v1436, %v2827
        %v2829 = vpop.f32.mrb[0].mxu0
        %2830 = vmatprep.mubr.bf16.mxu0 %v2287
        %2831 = vmatmul.mubr.bf16.gmra.mrb[0].mxu0 %v2286
        %v2832 = vpop.f32.mrb[0].mxu0
        %v2833 = vadd.f32 %v1436, %v2832
        %v2834 = vpop.f32.mrb[0].mxu0
        %v2835 = vpop.f32.mrb[0].mxu0
        %v2836 = vadd.f32 %v1436, %v2835
        %v2837 = vpop.f32.mrb[0].mxu0
        %2838 = vmatprep.mubr.bf16.mxu0 %v2295
        %2839 = vmatmul.mubr.bf16.gmra.mrb[0].mxu0 %v2294
        %v2840 = vpop.f32.mrb[0].mxu0
        %v2841 = vadd.f32 %v1436, %v2840
        %v2842 = vpop.f32.mrb[0].mxu0
        %v2843 = vpop.f32.mrb[0].mxu0
        %v2844 = vadd.f32 %v1436, %v2843
        %v2845 = vpop.f32.mrb[0].mxu0
        %2846 = vmatprep.mubr.bf16.mxu0 %v2303
        %2847 = vmatmul.mubr.bf16.gmra.mrb[0].mxu0 %v2302
        %v2848 = vpop.f32.mrb[0].mxu0
        %v2849 = vadd.f32 %v1436, %v2848
        %v2850 = vpop.f32.mrb[0].mxu0
        %v2851 = vpop.f32.mrb[0].mxu0
        %v2852 = vadd.f32 %v1436, %v2851
        %v2853 = vpop.f32.mrb[0].mxu0
        %2854 = vmatprep.mubr.bf16.mxu0 %v2311
        %2855 = vmatmul.mubr.bf16.gmra.mrb[0].mxu0 %v2310
        %v2856 = vpop.f32.mrb[0].mxu0
        %v2857 = vadd.f32 %v1436, %v2856
        %v2858 = vpop.f32.mrb[0].mxu0
        %v2859 = vpop.f32.mrb[0].mxu0
        %v2860 = vadd.f32 %v1436, %v2859
        %v2861 = vpop.f32.mrb[0].mxu0
        %2862 = vmatprep.mubr.bf16.mxu0 %v2319
        %2863 = vmatmul.mubr.bf16.gmra.mrb[0].mxu0 %v2318
        %v2864 = vpop.f32.mrb[0].mxu0
        %v2865 = vadd.f32 %v1436, %v2864
        %v2866 = vpop.f32.mrb[0].mxu0
        %v2867 = vpop.f32.mrb[0].mxu0
        %v2868 = vadd.f32 %v1436, %v2867
        %v2869 = vpop.f32.mrb[0].mxu0
        %2870 = vmatprep.mubr.bf16.mxu0 %v2327
        %2871 = vmatmul.mubr.bf16.gmra.mrb[0].mxu0 %v2326
        %v2872 = vpop.f32.mrb[0].mxu0
        %v2873 = vadd.f32 %v1436, %v2872
        %v2874 = vpop.f32.mrb[0].mxu0
        %v2875 = vpop.f32.mrb[0].mxu0
        %v2876 = vadd.f32 %v1436, %v2875
        %v2877 = vpop.f32.mrb[0].mxu0
        %2878 = vmatprep.mubr.bf16.mxu0 %v2335
        %2879 = vmatmul.mubr.bf16.gmra.mrb[0].mxu0 %v2334
        %v2880 = vpop.f32.mrb[0].mxu0
        %v2881 = vadd.f32 %v1436, %v2880
        %v2882 = vpop.f32.mrb[0].mxu0
        %v2883 = vpop.f32.mrb[0].mxu0
        %v2884 = vadd.f32 %v1436, %v2883
        %v2885 = vpop.f32.mrb[0].mxu0
        %2886 = vmatprep.mubr.bf16.mxu0 %v2343
        %2887 = vmatmul.mubr.bf16.gmra.mrb[0].mxu0 %v2342
        %v2888 = vpop.f32.mrb[0].mxu0
        %v2889 = vadd.f32 %v1436, %v2888
        %v2890 = vpop.f32.mrb[0].mxu0
        %v2891 = vpop.f32.mrb[0].mxu0
        %v2892 = vadd.f32 %v1436, %v2891
        %v2893 = vpop.f32.mrb[0].mxu0
        %2894 = vmatprep.mubr.bf16.mxu0 %v2351
        %2895 = vmatmul.mubr.bf16.gmra.mrb[0].mxu0 %v2350
        %v2896 = vpop.f32.mrb[0].mxu0
        %v2897 = vadd.f32 %v1436, %v2896
        %v2898 = vpop.f32.mrb[0].mxu0
        %v2899 = vpop.f32.mrb[0].mxu0
        %v2900 = vadd.f32 %v1436, %v2899
        %v2901 = vpop.f32.mrb[0].mxu0
        %2902 = vmatprep.mubr.bf16.mxu0 %v2359
        %2903 = vmatmul.mubr.bf16.gmra.mrb[0].mxu0 %v2358
        %v2904 = vpop.f32.mrb[0].mxu0
        %v2905 = vadd.f32 %v1436, %v2904
        %v2906 = vpop.f32.mrb[0].mxu0
        %v2907 = vpop.f32.mrb[0].mxu0
        %v2908 = vadd.f32 %v1436, %v2907
        %v2909 = vpop.f32.mrb[0].mxu0
        %2910 = vmatprep.mubr.bf16.mxu0 %v2367
        %2911 = vmatmul.mubr.bf16.gmra.mrb[0].mxu0 %v2366
        %v2912 = vpop.f32.mrb[0].mxu0
        %v2913 = vadd.f32 %v1436, %v2912
        %v2914 = vpop.f32.mrb[0].mxu0
        %v2915 = vpop.f32.mrb[0].mxu0
        %v2916 = vadd.f32 %v1436, %v2915
        %v2917 = vpop.f32.mrb[0].mxu0
        %2918 = vmatprep.mubr.bf16.mxu0 %v2375
        %2919 = vmatmul.mubr.bf16.gmra.mrb[0].mxu0 %v2374
        %v2920 = vpop.f32.mrb[0].mxu0
        %v2921 = vadd.f32 %v1436, %v2920
        %v2922 = vpop.f32.mrb[0].mxu0
        %v2923 = vpop.f32.mrb[0].mxu0
        %v2924 = vadd.f32 %v1436, %v2923
        %v2925 = vpop.f32.mrb[0].mxu0
        %2926 = vmatprep.mubr.bf16.mxu0 %v2383
        %2927 = vmatmul.mubr.bf16.gmra.mrb[0].mxu0 %v2382
        %v2928 = vpop.f32.mrb[0].mxu0
        %v2929 = vadd.f32 %v1436, %v2928
        %v2930 = vpop.f32.mrb[0].mxu0
        %v2931 = vpop.f32.mrb[0].mxu0
        %v2932 = vadd.f32 %v1436, %v2931
        %v2933 = vpop.f32.mrb[0].mxu0
        %2934 = vmatprep.mubr.bf16.mxu0 %v2391
        %2935 = vmatmul.mubr.bf16.gmra.mrb[0].mxu0 %v2390
        %v2936 = vpop.f32.mrb[0].mxu0
        %v2937 = vadd.f32 %v1436, %v2936
        %v2938 = vpop.f32.mrb[0].mxu0
        %v2939 = vpop.f32.mrb[0].mxu0
        %v2940 = vadd.f32 %v1436, %v2939
        %v2941 = vpop.f32.mrb[0].mxu0
        %2942 = vmatprep.mubr.bf16.mxu0 %v2399
        %2943 = vmatmul.mubr.bf16.gmra.mrb[0].mxu0 %v2398
        %v2944 = vpop.f32.mrb[0].mxu0
        %v2945 = vadd.f32 %v1436, %v2944
        %v2946 = vpop.f32.mrb[0].mxu0
        %v2947 = vpop.f32.mrb[0].mxu0
        %v2948 = vadd.f32 %v1436, %v2947
        %v2949 = vpop.f32.mrb[0].mxu0
        %2950 = vmatprep.mubr.bf16.mxu0 %v2407
        %2951 = vmatmul.mubr.bf16.gmra.mrb[0].mxu0 %v2406
        %v2952 = vpop.f32.mrb[0].mxu0
        %v2953 = vadd.f32 %v1436, %v2952
        %v2954 = vpop.f32.mrb[0].mxu0
        %v2955 = vpop.f32.mrb[0].mxu0
        %v2956 = vadd.f32 %v1436, %v2955
        %v2957 = vpop.f32.mrb[0].mxu0
        %2958 = vmatprep.mubr.bf16.mxu0 %v2415
        %2959 = vmatmul.mubr.bf16.gmra.mrb[0].mxu0 %v2414
        %v2960 = vpop.f32.mrb[0].mxu0
        %v2961 = vadd.f32 %v1436, %v2960
        %v2962 = vpop.f32.mrb[0].mxu0
        %v2963 = vpop.f32.mrb[0].mxu0
        %v2964 = vadd.f32 %v1436, %v2963
        %v2965 = vpop.f32.mrb[0].mxu0
        %2966 = vmatprep.mubr.bf16.mxu0 %v2423
        %2967 = vmatmul.mubr.bf16.gmra.mrb[0].mxu0 %v2422
        %v2968 = vpop.f32.mrb[0].mxu0
        %v2969 = vadd.f32 %v1436, %v2968
        %v2970 = vpop.f32.mrb[0].mxu0
        %v2971 = vpop.f32.mrb[0].mxu0
        %v2972 = vadd.f32 %v1436, %v2971
        %v2973 = vpop.f32.mrb[0].mxu0
        %2974 = vmatprep.mubr.bf16.mxu0 %v2431
        %2975 = vmatmul.mubr.bf16.gmra.mrb[0].mxu0 %v2430
        %v2976 = vpop.f32.mrb[0].mxu0
        %v2977 = vadd.f32 %v1436, %v2976
        %v2978 = vpop.f32.mrb[0].mxu0
        %v2979 = vpop.f32.mrb[0].mxu0
        %v2980 = vadd.f32 %v1436, %v2979
        %v2981 = vpop.f32.mrb[0].mxu0
        %2982 = vmatprep.mubr.bf16.mxu0 %v2439
        %2983 = vmatmul.mubr.bf16.gmra.mrb[0].mxu0 %v2438
        %v2984 = vpop.f32.mrb[0].mxu0
        %v2985 = vadd.f32 %v1436, %v2984
        %v2986 = vpop.f32.mrb[0].mxu0
        %v2987 = vpop.f32.mrb[0].mxu0
        %v2988 = vadd.f32 %v1436, %v2987
        %v2989 = vpop.f32.mrb[0].mxu0
        %2990 = vmatprep.mubr.bf16.mxu0 %v2447
        %2991 = vmatmul.mubr.bf16.gmra.mrb[0].mxu0 %v2446
        %v2992 = vpop.f32.mrb[0].mxu0
        %v2993 = vadd.f32 %v1436, %v2992
        %v2994 = vpop.f32.mrb[0].mxu0
        %v2995 = vpop.f32.mrb[0].mxu0
        %v2996 = vadd.f32 %v1436, %v2995
        %v2997 = vpop.f32.mrb[0].mxu0
        %2998 = vmatprep.mubr.bf16.mxu0 %v2455
        %2999 = vmatmul.mubr.bf16.gmra.mrb[0].mxu0 %v2454
        %v3000 = vpop.f32.mrb[0].mxu0
        %v3001 = vadd.f32 %v1436, %v3000
        %v3002 = vpop.f32.mrb[0].mxu0
        %v3003 = vpop.f32.mrb[0].mxu0
        %v3004 = vadd.f32 %v1436, %v3003
        %v3005 = vpop.f32.mrb[0].mxu0
        %3006 = vdwg.mxu0
        %3007 = vmatprep.subr.bf16.mxu0 0
        %3008 = vmatpush1.bf16.msra.mxu0 %v1383
        %3009 = vmatprep.subr.bf16.mxu0 0
        %3010 = vmatpush1.bf16.msra.mxu0 %v1384
        %3011 = vmatprep.subr.bf16.mxu0 0
        %3012 = vmatpush1.bf16.msra.mxu0 %v1385
        %3013 = vmatprep.subr.bf16.mxu0 0
        %3014 = vmatpush1.bf16.msra.mxu0 %v1386
        %3015 = vmatprep.subr.bf16.mxu0 0
        %3016 = vmatpush1.bf16.msra.mxu0 %v1387
        %3017 = vmatprep.subr.bf16.mxu0 0
        %3018 = vmatpush1.bf16.msra.mxu0 %v1388
        %3019 = vmatprep.subr.bf16.mxu0 0
        %3020 = vmatpush1.bf16.msra.mxu0 %v1389
        %3021 = vmatprep.subr.bf16.mxu0 0
        %3022 = vmatpush1.bf16.msra.mxu0 %v1390
        %3023 = vmatprep.subr.bf16.mxu0 0
        %3024 = vmatpush1.bf16.msra.mxu0 %v1391
        %3025 = vmatprep.subr.bf16.mxu0 0
        %3026 = vmatpush1.bf16.msra.mxu0 %v1392
        %3027 = vmatprep.subr.bf16.mxu0 0
        %3028 = vmatpush1.bf16.msra.mxu0 %v1393
        %3029 = vmatprep.subr.bf16.mxu0 0
        %3030 = vmatpush1.bf16.msra.mxu0 %v1394
        %3031 = vmatprep.subr.bf16.mxu0 0
        %3032 = vmatpush1.bf16.msra.mxu0 %v1395
        %3033 = vmatprep.subr.bf16.mxu0 0
        %3034 = vmatpush1.bf16.msra.mxu0 %v1396
        %3035 = vmatprep.subr.bf16.mxu0 0
        %3036 = vmatpush1.bf16.msra.mxu0 %v1397
        %3037 = vmatprep.subr.bf16.mxu0 0
        %3038 = vmatpush1.bf16.msra.mxu0 %v1398
        %3039 = vmatprep.mubr.bf16.mxu0 %v2209
        %3040 = vmatmul.mubr.bf16.gmra.mrb[0].mxu0 %v2208
        %v3041 = vpop.f32.mrb[0].mxu0
        %v3042 = vadd.f32 %v2753, %v3041
        %v3043 = vpop.f32.mrb[0].mxu0
        %v3044 = vpop.f32.mrb[0].mxu0
        %v3045 = vadd.f32 %v2756, %v3044
        %v3046 = vpop.f32.mrb[0].mxu0
        %3047 = vmatprep.mubr.bf16.mxu0 %v2217
        %3048 = vmatmul.mubr.bf16.gmra.mrb[0].mxu0 %v2216
        %v3049 = vpop.f32.mrb[0].mxu0
        %v3050 = vadd.f32 %v2761, %v3049
        %v3051 = vpop.f32.mrb[0].mxu0
        %v3052 = vpop.f32.mrb[0].mxu0
        %v3053 = vadd.f32 %v2764, %v3052
        %v3054 = vpop.f32.mrb[0].mxu0
        %3055 = vmatprep.mubr.bf16.mxu0 %v2225
        %3056 = vmatmul.mubr.bf16.gmra.mrb[0].mxu0 %v2224
        %v3057 = vpop.f32.mrb[0].mxu0
        %v3058 = vadd.f32 %v2769, %v3057
        %v3059 = vpop.f32.mrb[0].mxu0
        %v3060 = vpop.f32.mrb[0].mxu0
        %v3061 = vadd.f32 %v2772, %v3060
        %v3062 = vpop.f32.mrb[0].mxu0
        %3063 = vmatprep.mubr.bf16.mxu0 %v2233
        %3064 = vmatmul.mubr.bf16.gmra.mrb[0].mxu0 %v2232
        %v3065 = vpop.f32.mrb[0].mxu0
        %v3066 = vadd.f32 %v2777, %v3065
        %v3067 = vpop.f32.mrb[0].mxu0
        %v3068 = vpop.f32.mrb[0].mxu0
        %v3069 = vadd.f32 %v2780, %v3068
        %v3070 = vpop.f32.mrb[0].mxu0
        %3071 = vmatprep.mubr.bf16.mxu0 %v2241
        %3072 = vmatmul.mubr.bf16.gmra.mrb[0].mxu0 %v2240
        %v3073 = vpop.f32.mrb[0].mxu0
        %v3074 = vadd.f32 %v2785, %v3073
        %v3075 = vpop.f32.mrb[0].mxu0
        %v3076 = vpop.f32.mrb[0].mxu0
        %v3077 = vadd.f32 %v2788, %v3076
        %v3078 = vpop.f32.mrb[0].mxu0
        %3079 = vmatprep.mubr.bf16.mxu0 %v2249
        %3080 = vmatmul.mubr.bf16.gmra.mrb[0].mxu0 %v2248
        %v3081 = vpop.f32.mrb[0].mxu0
        %v3082 = vadd.f32 %v2793, %v3081
        %v3083 = vpop.f32.mrb[0].mxu0
        %v3084 = vpop.f32.mrb[0].mxu0
        %v3085 = vadd.f32 %v2796, %v3084
        %v3086 = vpop.f32.mrb[0].mxu0
        %3087 = vmatprep.mubr.bf16.mxu0 %v2257
        %3088 = vmatmul.mubr.bf16.gmra.mrb[0].mxu0 %v2256
        %v3089 = vpop.f32.mrb[0].mxu0
        %v3090 = vadd.f32 %v2801, %v3089
        %v3091 = vpop.f32.mrb[0].mxu0
        %v3092 = vpop.f32.mrb[0].mxu0
        %v3093 = vadd.f32 %v2804, %v3092
        %v3094 = vpop.f32.mrb[0].mxu0
        %3095 = vmatprep.mubr.bf16.mxu0 %v2265
        %3096 = vmatmul.mubr.bf16.gmra.mrb[0].mxu0 %v2264
        %v3097 = vpop.f32.mrb[0].mxu0
        %v3098 = vadd.f32 %v2809, %v3097
        %v3099 = vpop.f32.mrb[0].mxu0
        %v3100 = vpop.f32.mrb[0].mxu0
        %v3101 = vadd.f32 %v2812, %v3100
        %v3102 = vpop.f32.mrb[0].mxu0
        %3103 = vmatprep.mubr.bf16.mxu0 %v2273
        %3104 = vmatmul.mubr.bf16.gmra.mrb[0].mxu0 %v2272
        %v3105 = vpop.f32.mrb[0].mxu0
        %v3106 = vadd.f32 %v2817, %v3105
        %v3107 = vpop.f32.mrb[0].mxu0
        %v3108 = vpop.f32.mrb[0].mxu0
        %v3109 = vadd.f32 %v2820, %v3108
        %v3110 = vpop.f32.mrb[0].mxu0
        %3111 = vmatprep.mubr.bf16.mxu0 %v2281
        %3112 = vmatmul.mubr.bf16.gmra.mrb[0].mxu0 %v2280
        %v3113 = vpop.f32.mrb[0].mxu0
        %v3114 = vadd.f32 %v2825, %v3113
        %v3115 = vpop.f32.mrb[0].mxu0
        %v3116 = vpop.f32.mrb[0].mxu0
        %v3117 = vadd.f32 %v2828, %v3116
        %v3118 = vpop.f32.mrb[0].mxu0
        %3119 = vmatprep.mubr.bf16.mxu0 %v2289
        %3120 = vmatmul.mubr.bf16.gmra.mrb[0].mxu0 %v2288
        %v3121 = vpop.f32.mrb[0].mxu0
        %v3122 = vadd.f32 %v2833, %v3121
        %v3123 = vpop.f32.mrb[0].mxu0
        %v3124 = vpop.f32.mrb[0].mxu0
        %v3125 = vadd.f32 %v2836, %v3124
        %v3126 = vpop.f32.mrb[0].mxu0
        %3127 = vmatprep.mubr.bf16.mxu0 %v2297
        %3128 = vmatmul.mubr.bf16.gmra.mrb[0].mxu0 %v2296
        %v3129 = vpop.f32.mrb[0].mxu0
        %v3130 = vadd.f32 %v2841, %v3129
        %v3131 = vpop.f32.mrb[0].mxu0
        %v3132 = vpop.f32.mrb[0].mxu0
        %v3133 = vadd.f32 %v2844, %v3132
        %v3134 = vpop.f32.mrb[0].mxu0
        %3135 = vmatprep.mubr.bf16.mxu0 %v2305
        %3136 = vmatmul.mubr.bf16.gmra.mrb[0].mxu0 %v2304
        %v3137 = vpop.f32.mrb[0].mxu0
        %v3138 = vadd.f32 %v2849, %v3137
        %v3139 = vpop.f32.mrb[0].mxu0
        %v3140 = vpop.f32.mrb[0].mxu0
        %v3141 = vadd.f32 %v2852, %v3140
        %v3142 = vpop.f32.mrb[0].mxu0
        %3143 = vmatprep.mubr.bf16.mxu0 %v2313
        %3144 = vmatmul.mubr.bf16.gmra.mrb[0].mxu0 %v2312
        %v3145 = vpop.f32.mrb[0].mxu0
        %v3146 = vadd.f32 %v2857, %v3145
        %v3147 = vpop.f32.mrb[0].mxu0
        %v3148 = vpop.f32.mrb[0].mxu0
        %v3149 = vadd.f32 %v2860, %v3148
        %v3150 = vpop.f32.mrb[0].mxu0
        %3151 = vmatprep.mubr.bf16.mxu0 %v2321
        %3152 = vmatmul.mubr.bf16.gmra.mrb[0].mxu0 %v2320
        %v3153 = vpop.f32.mrb[0].mxu0
        %v3154 = vadd.f32 %v2865, %v3153
        %v3155 = vpop.f32.mrb[0].mxu0
        %v3156 = vpop.f32.mrb[0].mxu0
        %v3157 = vadd.f32 %v2868, %v3156
        %v3158 = vpop.f32.mrb[0].mxu0
        %3159 = vmatprep.mubr.bf16.mxu0 %v2329
        %3160 = vmatmul.mubr.bf16.gmra.mrb[0].mxu0 %v2328
        %v3161 = vpop.f32.mrb[0].mxu0
        %v3162 = vadd.f32 %v2873, %v3161
        %v3163 = vpop.f32.mrb[0].mxu0
        %v3164 = vpop.f32.mrb[0].mxu0
        %v3165 = vadd.f32 %v2876, %v3164
        %v3166 = vpop.f32.mrb[0].mxu0
        %3167 = vmatprep.mubr.bf16.mxu0 %v2337
        %3168 = vmatmul.mubr.bf16.gmra.mrb[0].mxu0 %v2336
        %v3169 = vpop.f32.mrb[0].mxu0
        %v3170 = vadd.f32 %v2881, %v3169
        %v3171 = vpop.f32.mrb[0].mxu0
        %v3172 = vpop.f32.mrb[0].mxu0
        %v3173 = vadd.f32 %v2884, %v3172
        %v3174 = vpop.f32.mrb[0].mxu0
        %3175 = vmatprep.mubr.bf16.mxu0 %v2345
        %3176 = vmatmul.mubr.bf16.gmra.mrb[0].mxu0 %v2344
        %v3177 = vpop.f32.mrb[0].mxu0
        %v3178 = vadd.f32 %v2889, %v3177
        %v3179 = vpop.f32.mrb[0].mxu0
        %v3180 = vpop.f32.mrb[0].mxu0
        %v3181 = vadd.f32 %v2892, %v3180
        %v3182 = vpop.f32.mrb[0].mxu0
        %3183 = vmatprep.mubr.bf16.mxu0 %v2353
        %3184 = vmatmul.mubr.bf16.gmra.mrb[0].mxu0 %v2352
        %v3185 = vpop.f32.mrb[0].mxu0
        %v3186 = vadd.f32 %v2897, %v3185
        %v3187 = vpop.f32.mrb[0].mxu0
        %v3188 = vpop.f32.mrb[0].mxu0
        %v3189 = vadd.f32 %v2900, %v3188
        %v3190 = vpop.f32.mrb[0].mxu0
        %3191 = vmatprep.mubr.bf16.mxu0 %v2361
        %3192 = vmatmul.mubr.bf16.gmra.mrb[0].mxu0 %v2360
        %v3193 = vpop.f32.mrb[0].mxu0
        %v3194 = vadd.f32 %v2905, %v3193
        %v3195 = vpop.f32.mrb[0].mxu0
        %v3196 = vpop.f32.mrb[0].mxu0
        %v3197 = vadd.f32 %v2908, %v3196
        %v3198 = vpop.f32.mrb[0].mxu0
        %3199 = vmatprep.mubr.bf16.mxu0 %v2369
        %3200 = vmatmul.mubr.bf16.gmra.mrb[0].mxu0 %v2368
        %v3201 = vpop.f32.mrb[0].mxu0
        %v3202 = vadd.f32 %v2913, %v3201
        %v3203 = vpop.f32.mrb[0].mxu0
        %v3204 = vpop.f32.mrb[0].mxu0
        %v3205 = vadd.f32 %v2916, %v3204
        %v3206 = vpop.f32.mrb[0].mxu0
        %3207 = vmatprep.mubr.bf16.mxu0 %v2377
        %3208 = vmatmul.mubr.bf16.gmra.mrb[0].mxu0 %v2376
        %v3209 = vpop.f32.mrb[0].mxu0
        %v3210 = vadd.f32 %v2921, %v3209
        %v3211 = vpop.f32.mrb[0].mxu0
        %v3212 = vpop.f32.mrb[0].mxu0
        %v3213 = vadd.f32 %v2924, %v3212
        %v3214 = vpop.f32.mrb[0].mxu0
        %3215 = vmatprep.mubr.bf16.mxu0 %v2385
        %3216 = vmatmul.mubr.bf16.gmra.mrb[0].mxu0 %v2384
        %v3217 = vpop.f32.mrb[0].mxu0
        %v3218 = vadd.f32 %v2929, %v3217
        %v3219 = vpop.f32.mrb[0].mxu0
        %v3220 = vpop.f32.mrb[0].mxu0
        %v3221 = vadd.f32 %v2932, %v3220
        %v3222 = vpop.f32.mrb[0].mxu0
        %3223 = vmatprep.mubr.bf16.mxu0 %v2393
        %3224 = vmatmul.mubr.bf16.gmra.mrb[0].mxu0 %v2392
        %v3225 = vpop.f32.mrb[0].mxu0
        %v3226 = vadd.f32 %v2937, %v3225
        %v3227 = vpop.f32.mrb[0].mxu0
        %v3228 = vpop.f32.mrb[0].mxu0
        %v3229 = vadd.f32 %v2940, %v3228
        %v3230 = vpop.f32.mrb[0].mxu0
        %3231 = vmatprep.mubr.bf16.mxu0 %v2401
        %3232 = vmatmul.mubr.bf16.gmra.mrb[0].mxu0 %v2400
        %v3233 = vpop.f32.mrb[0].mxu0
        %v3234 = vadd.f32 %v2945, %v3233
        %v3235 = vpop.f32.mrb[0].mxu0
        %v3236 = vpop.f32.mrb[0].mxu0
        %v3237 = vadd.f32 %v2948, %v3236
        %v3238 = vpop.f32.mrb[0].mxu0
        %3239 = vmatprep.mubr.bf16.mxu0 %v2409
        %3240 = vmatmul.mubr.bf16.gmra.mrb[0].mxu0 %v2408
        %v3241 = vpop.f32.mrb[0].mxu0
        %v3242 = vadd.f32 %v2953, %v3241
        %v3243 = vpop.f32.mrb[0].mxu0
        %v3244 = vpop.f32.mrb[0].mxu0
        %v3245 = vadd.f32 %v2956, %v3244
        %v3246 = vpop.f32.mrb[0].mxu0
        %3247 = vmatprep.mubr.bf16.mxu0 %v2417
        %3248 = vmatmul.mubr.bf16.gmra.mrb[0].mxu0 %v2416
        %v3249 = vpop.f32.mrb[0].mxu0
        %v3250 = vadd.f32 %v2961, %v3249
        %v3251 = vpop.f32.mrb[0].mxu0
        %v3252 = vpop.f32.mrb[0].mxu0
        %v3253 = vadd.f32 %v2964, %v3252
        %v3254 = vpop.f32.mrb[0].mxu0
        %3255 = vmatprep.mubr.bf16.mxu0 %v2425
        %3256 = vmatmul.mubr.bf16.gmra.mrb[0].mxu0 %v2424
        %v3257 = vpop.f32.mrb[0].mxu0
        %v3258 = vadd.f32 %v2969, %v3257
        %v3259 = vpop.f32.mrb[0].mxu0
        %v3260 = vpop.f32.mrb[0].mxu0
        %v3261 = vadd.f32 %v2972, %v3260
        %v3262 = vpop.f32.mrb[0].mxu0
        %3263 = vmatprep.mubr.bf16.mxu0 %v2433
        %3264 = vmatmul.mubr.bf16.gmra.mrb[0].mxu0 %v2432
        %v3265 = vpop.f32.mrb[0].mxu0
        %v3266 = vadd.f32 %v2977, %v3265
        %v3267 = vpop.f32.mrb[0].mxu0
        %v3268 = vpop.f32.mrb[0].mxu0
        %v3269 = vadd.f32 %v2980, %v3268
        %v3270 = vpop.f32.mrb[0].mxu0
        %3271 = vmatprep.mubr.bf16.mxu0 %v2441
        %3272 = vmatmul.mubr.bf16.gmra.mrb[0].mxu0 %v2440
        %v3273 = vpop.f32.mrb[0].mxu0
        %v3274 = vadd.f32 %v2985, %v3273
        %v3275 = vpop.f32.mrb[0].mxu0
        %v3276 = vpop.f32.mrb[0].mxu0
        %v3277 = vadd.f32 %v2988, %v3276
        %v3278 = vpop.f32.mrb[0].mxu0
        %3279 = vmatprep.mubr.bf16.mxu0 %v2449
        %3280 = vmatmul.mubr.bf16.gmra.mrb[0].mxu0 %v2448
        %v3281 = vpop.f32.mrb[0].mxu0
        %v3282 = vadd.f32 %v2993, %v3281
        %v3283 = vpop.f32.mrb[0].mxu0
        %v3284 = vpop.f32.mrb[0].mxu0
        %v3285 = vadd.f32 %v2996, %v3284
        %v3286 = vpop.f32.mrb[0].mxu0
        %3287 = vmatprep.mubr.bf16.mxu0 %v2457
        %3288 = vmatmul.mubr.bf16.gmra.mrb[0].mxu0 %v2456
        %v3289 = vpop.f32.mrb[0].mxu0
        %v3290 = vadd.f32 %v3001, %v3289
        %v3291 = vpop.f32.mrb[0].mxu0
        %v3292 = vpop.f32.mrb[0].mxu0
        %v3293 = vadd.f32 %v3004, %v3292
        %v3294 = vpop.f32.mrb[0].mxu0
        %3295 = vdwg.mxu0
        %3296 = vmatprep.subr.bf16.mxu0 0
        %3297 = vmatpush1.bf16.msra.mxu0 %v1399
        %3298 = vmatprep.subr.bf16.mxu0 0
        %3299 = vmatpush1.bf16.msra.mxu0 %v1400
        %3300 = vmatprep.subr.bf16.mxu0 0
        %3301 = vmatpush1.bf16.msra.mxu0 %v1401
        %3302 = vmatprep.subr.bf16.mxu0 0
        %3303 = vmatpush1.bf16.msra.mxu0 %v1402
        %3304 = vmatprep.subr.bf16.mxu0 0
        %3305 = vmatpush1.bf16.msra.mxu0 %v1403
        %3306 = vmatprep.subr.bf16.mxu0 0
        %3307 = vmatpush1.bf16.msra.mxu0 %v1404
        %3308 = vmatprep.subr.bf16.mxu0 0
        %3309 = vmatpush1.bf16.msra.mxu0 %v1405
        %3310 = vmatprep.subr.bf16.mxu0 0
        %3311 = vmatpush1.bf16.msra.mxu0 %v1406
        %3312 = vmatprep.subr.bf16.mxu0 0
        %3313 = vmatpush1.bf16.msra.mxu0 %v1407
        %3314 = vmatprep.subr.bf16.mxu0 0
        %3315 = vmatpush1.bf16.msra.mxu0 %v1408
        %3316 = vmatprep.subr.bf16.mxu0 0
        %3317 = vmatpush1.bf16.msra.mxu0 %v1409
        %3318 = vmatprep.subr.bf16.mxu0 0
        %3319 = vmatpush1.bf16.msra.mxu0 %v1410
        %3320 = vmatprep.subr.bf16.mxu0 0
        %3321 = vmatpush1.bf16.msra.mxu0 %v1411
        %3322 = vmatprep.subr.bf16.mxu0 0
        %3323 = vmatpush1.bf16.msra.mxu0 %v1412
        %3324 = vmatprep.subr.bf16.mxu0 0
        %3325 = vmatpush1.bf16.msra.mxu0 %v1413
        %3326 = vmatprep.subr.bf16.mxu0 0
        %3327 = vmatpush1.bf16.msra.mxu0 %v1414
        %3328 = vmatprep.mubr.bf16.mxu0 %v2211
        %3329 = vmatmul.mubr.bf16.gmra.mrb[0].mxu0 %v2210
        %v3330 = vpop.f32.mrb[0].mxu0
        %v3331 = vadd.f32 %v3042, %v3330
        %v3332 = vpop.f32.mrb[0].mxu0
        %v3333 = vpop.f32.mrb[0].mxu0
        %v3334 = vadd.f32 %v3045, %v3333
        %v3335 = vpop.f32.mrb[0].mxu0
        %3336 = vmatprep.mubr.bf16.mxu0 %v2219
        %3337 = vmatmul.mubr.bf16.gmra.mrb[0].mxu0 %v2218
        %v3338 = vpop.f32.mrb[0].mxu0
        %v3339 = vadd.f32 %v3050, %v3338
        %v3340 = vpop.f32.mrb[0].mxu0
        %v3341 = vpop.f32.mrb[0].mxu0
        %v3342 = vadd.f32 %v3053, %v3341
        %v3343 = vpop.f32.mrb[0].mxu0
        %3344 = vmatprep.mubr.bf16.mxu0 %v2227
        %3345 = vmatmul.mubr.bf16.gmra.mrb[0].mxu0 %v2226
        %v3346 = vpop.f32.mrb[0].mxu0
        %v3347 = vadd.f32 %v3058, %v3346
        %v3348 = vpop.f32.mrb[0].mxu0
        %v3349 = vpop.f32.mrb[0].mxu0
        %v3350 = vadd.f32 %v3061, %v3349
        %v3351 = vpop.f32.mrb[0].mxu0
        %3352 = vmatprep.mubr.bf16.mxu0 %v2235
        %3353 = vmatmul.mubr.bf16.gmra.mrb[0].mxu0 %v2234
        %v3354 = vpop.f32.mrb[0].mxu0
        %v3355 = vadd.f32 %v3066, %v3354
        %v3356 = vpop.f32.mrb[0].mxu0
        %v3357 = vpop.f32.mrb[0].mxu0
        %v3358 = vadd.f32 %v3069, %v3357
        %v3359 = vpop.f32.mrb[0].mxu0
        %3360 = vmatprep.mubr.bf16.mxu0 %v2243
        %3361 = vmatmul.mubr.bf16.gmra.mrb[0].mxu0 %v2242
        %v3362 = vpop.f32.mrb[0].mxu0
        %v3363 = vadd.f32 %v3074, %v3362
        %v3364 = vpop.f32.mrb[0].mxu0
        %v3365 = vpop.f32.mrb[0].mxu0
        %v3366 = vadd.f32 %v3077, %v3365
        %v3367 = vpop.f32.mrb[0].mxu0
        %3368 = vmatprep.mubr.bf16.mxu0 %v2251
        %3369 = vmatmul.mubr.bf16.gmra.mrb[0].mxu0 %v2250
        %v3370 = vpop.f32.mrb[0].mxu0
        %v3371 = vadd.f32 %v3082, %v3370
        %v3372 = vpop.f32.mrb[0].mxu0
        %v3373 = vpop.f32.mrb[0].mxu0
        %v3374 = vadd.f32 %v3085, %v3373
        %v3375 = vpop.f32.mrb[0].mxu0
        %3376 = vmatprep.mubr.bf16.mxu0 %v2259
        %3377 = vmatmul.mubr.bf16.gmra.mrb[0].mxu0 %v2258
        %v3378 = vpop.f32.mrb[0].mxu0
        %v3379 = vadd.f32 %v3090, %v3378
        %v3380 = vpop.f32.mrb[0].mxu0
        %v3381 = vpop.f32.mrb[0].mxu0
        %v3382 = vadd.f32 %v3093, %v3381
        %v3383 = vpop.f32.mrb[0].mxu0
        %3384 = vmatprep.mubr.bf16.mxu0 %v2267
        %3385 = vmatmul.mubr.bf16.gmra.mrb[0].mxu0 %v2266
        %v3386 = vpop.f32.mrb[0].mxu0
        %v3387 = vadd.f32 %v3098, %v3386
        %v3388 = vpop.f32.mrb[0].mxu0
        %v3389 = vpop.f32.mrb[0].mxu0
        %v3390 = vadd.f32 %v3101, %v3389
        %v3391 = vpop.f32.mrb[0].mxu0
        %3392 = vmatprep.mubr.bf16.mxu0 %v2275
        %3393 = vmatmul.mubr.bf16.gmra.mrb[0].mxu0 %v2274
        %v3394 = vpop.f32.mrb[0].mxu0
        %v3395 = vadd.f32 %v3106, %v3394
        %v3396 = vpop.f32.mrb[0].mxu0
        %v3397 = vpop.f32.mrb[0].mxu0
        %v3398 = vadd.f32 %v3109, %v3397
        %v3399 = vpop.f32.mrb[0].mxu0
        %3400 = vmatprep.mubr.bf16.mxu0 %v2283
        %3401 = vmatmul.mubr.bf16.gmra.mrb[0].mxu0 %v2282
        %v3402 = vpop.f32.mrb[0].mxu0
        %v3403 = vadd.f32 %v3114, %v3402
        %v3404 = vpop.f32.mrb[0].mxu0
        %v3405 = vpop.f32.mrb[0].mxu0
        %v3406 = vadd.f32 %v3117, %v3405
        %v3407 = vpop.f32.mrb[0].mxu0
        %3408 = vmatprep.mubr.bf16.mxu0 %v2291
        %3409 = vmatmul.mubr.bf16.gmra.mrb[0].mxu0 %v2290
        %v3410 = vpop.f32.mrb[0].mxu0
        %v3411 = vadd.f32 %v3122, %v3410
        %v3412 = vpop.f32.mrb[0].mxu0
        %v3413 = vpop.f32.mrb[0].mxu0
        %v3414 = vadd.f32 %v3125, %v3413
        %v3415 = vpop.f32.mrb[0].mxu0
        %3416 = vmatprep.mubr.bf16.mxu0 %v2299
        %3417 = vmatmul.mubr.bf16.gmra.mrb[0].mxu0 %v2298
        %v3418 = vpop.f32.mrb[0].mxu0
        %v3419 = vadd.f32 %v3130, %v3418
        %v3420 = vpop.f32.mrb[0].mxu0
        %v3421 = vpop.f32.mrb[0].mxu0
        %v3422 = vadd.f32 %v3133, %v3421
        %v3423 = vpop.f32.mrb[0].mxu0
        %3424 = vmatprep.mubr.bf16.mxu0 %v2307
        %3425 = vmatmul.mubr.bf16.gmra.mrb[0].mxu0 %v2306
        %v3426 = vpop.f32.mrb[0].mxu0
        %v3427 = vadd.f32 %v3138, %v3426
        %v3428 = vpop.f32.mrb[0].mxu0
        %v3429 = vpop.f32.mrb[0].mxu0
        %v3430 = vadd.f32 %v3141, %v3429
        %v3431 = vpop.f32.mrb[0].mxu0
        %3432 = vmatprep.mubr.bf16.mxu0 %v2315
        %3433 = vmatmul.mubr.bf16.gmra.mrb[0].mxu0 %v2314
        %v3434 = vpop.f32.mrb[0].mxu0
        %v3435 = vadd.f32 %v3146, %v3434
        %v3436 = vpop.f32.mrb[0].mxu0
        %v3437 = vpop.f32.mrb[0].mxu0
        %v3438 = vadd.f32 %v3149, %v3437
        %v3439 = vpop.f32.mrb[0].mxu0
        %3440 = vmatprep.mubr.bf16.mxu0 %v2323
        %3441 = vmatmul.mubr.bf16.gmra.mrb[0].mxu0 %v2322
        %v3442 = vpop.f32.mrb[0].mxu0
        %v3443 = vadd.f32 %v3154, %v3442
        %v3444 = vpop.f32.mrb[0].mxu0
        %v3445 = vpop.f32.mrb[0].mxu0
        %v3446 = vadd.f32 %v3157, %v3445
        %v3447 = vpop.f32.mrb[0].mxu0
        %3448 = vmatprep.mubr.bf16.mxu0 %v2331
        %3449 = vmatmul.mubr.bf16.gmra.mrb[0].mxu0 %v2330
        %v3450 = vpop.f32.mrb[0].mxu0
        %v3451 = vadd.f32 %v3162, %v3450
        %v3452 = vpop.f32.mrb[0].mxu0
        %v3453 = vpop.f32.mrb[0].mxu0
        %v3454 = vadd.f32 %v3165, %v3453
        %v3455 = vpop.f32.mrb[0].mxu0
        %3456 = vmatprep.mubr.bf16.mxu0 %v2339
        %3457 = vmatmul.mubr.bf16.gmra.mrb[0].mxu0 %v2338
        %v3458 = vpop.f32.mrb[0].mxu0
        %v3459 = vadd.f32 %v3170, %v3458
        %v3460 = vpop.f32.mrb[0].mxu0
        %v3461 = vpop.f32.mrb[0].mxu0
        %v3462 = vadd.f32 %v3173, %v3461
        %v3463 = vpop.f32.mrb[0].mxu0
        %3464 = vmatprep.mubr.bf16.mxu0 %v2347
        %3465 = vmatmul.mubr.bf16.gmra.mrb[0].mxu0 %v2346
        %v3466 = vpop.f32.mrb[0].mxu0
        %v3467 = vadd.f32 %v3178, %v3466
        %v3468 = vpop.f32.mrb[0].mxu0
        %v3469 = vpop.f32.mrb[0].mxu0
        %v3470 = vadd.f32 %v3181, %v3469
        %v3471 = vpop.f32.mrb[0].mxu0
        %3472 = vmatprep.mubr.bf16.mxu0 %v2355
        %3473 = vmatmul.mubr.bf16.gmra.mrb[0].mxu0 %v2354
        %v3474 = vpop.f32.mrb[0].mxu0
        %v3475 = vadd.f32 %v3186, %v3474
        %v3476 = vpop.f32.mrb[0].mxu0
        %v3477 = vpop.f32.mrb[0].mxu0
        %v3478 = vadd.f32 %v3189, %v3477
        %v3479 = vpop.f32.mrb[0].mxu0
        %3480 = vmatprep.mubr.bf16.mxu0 %v2363
        %3481 = vmatmul.mubr.bf16.gmra.mrb[0].mxu0 %v2362
        %v3482 = vpop.f32.mrb[0].mxu0
        %v3483 = vadd.f32 %v3194, %v3482
        %v3484 = vpop.f32.mrb[0].mxu0
        %v3485 = vpop.f32.mrb[0].mxu0
        %v3486 = vadd.f32 %v3197, %v3485
        %v3487 = vpop.f32.mrb[0].mxu0
        %3488 = vmatprep.mubr.bf16.mxu0 %v2371
        %3489 = vmatmul.mubr.bf16.gmra.mrb[0].mxu0 %v2370
        %v3490 = vpop.f32.mrb[0].mxu0
        %v3491 = vadd.f32 %v3202, %v3490
        %v3492 = vpop.f32.mrb[0].mxu0
        %v3493 = vpop.f32.mrb[0].mxu0
        %v3494 = vadd.f32 %v3205, %v3493
        %v3495 = vpop.f32.mrb[0].mxu0
        %3496 = vmatprep.mubr.bf16.mxu0 %v2379
        %3497 = vmatmul.mubr.bf16.gmra.mrb[0].mxu0 %v2378
        %v3498 = vpop.f32.mrb[0].mxu0
        %v3499 = vadd.f32 %v3210, %v3498
        %v3500 = vpop.f32.mrb[0].mxu0
        %v3501 = vpop.f32.mrb[0].mxu0
        %v3502 = vadd.f32 %v3213, %v3501
        %v3503 = vpop.f32.mrb[0].mxu0
        %3504 = vmatprep.mubr.bf16.mxu0 %v2387
        %3505 = vmatmul.mubr.bf16.gmra.mrb[0].mxu0 %v2386
        %v3506 = vpop.f32.mrb[0].mxu0
        %v3507 = vadd.f32 %v3218, %v3506
        %v3508 = vpop.f32.mrb[0].mxu0
        %v3509 = vpop.f32.mrb[0].mxu0
        %v3510 = vadd.f32 %v3221, %v3509
        %v3511 = vpop.f32.mrb[0].mxu0
        %3512 = vmatprep.mubr.bf16.mxu0 %v2395
        %3513 = vmatmul.mubr.bf16.gmra.mrb[0].mxu0 %v2394
        %v3514 = vpop.f32.mrb[0].mxu0
        %v3515 = vadd.f32 %v3226, %v3514
        %v3516 = vpop.f32.mrb[0].mxu0
        %v3517 = vpop.f32.mrb[0].mxu0
        %v3518 = vadd.f32 %v3229, %v3517
        %v3519 = vpop.f32.mrb[0].mxu0
        %3520 = vmatprep.mubr.bf16.mxu0 %v2403
        %3521 = vmatmul.mubr.bf16.gmra.mrb[0].mxu0 %v2402
        %v3522 = vpop.f32.mrb[0].mxu0
        %v3523 = vadd.f32 %v3234, %v3522
        %v3524 = vpop.f32.mrb[0].mxu0
        %v3525 = vpop.f32.mrb[0].mxu0
        %v3526 = vadd.f32 %v3237, %v3525
        %v3527 = vpop.f32.mrb[0].mxu0
        %3528 = vmatprep.mubr.bf16.mxu0 %v2411
        %3529 = vmatmul.mubr.bf16.gmra.mrb[0].mxu0 %v2410
        %v3530 = vpop.f32.mrb[0].mxu0
        %v3531 = vadd.f32 %v3242, %v3530
        %v3532 = vpop.f32.mrb[0].mxu0
        %v3533 = vpop.f32.mrb[0].mxu0
        %v3534 = vadd.f32 %v3245, %v3533
        %v3535 = vpop.f32.mrb[0].mxu0
        %3536 = vmatprep.mubr.bf16.mxu0 %v2419
        %3537 = vmatmul.mubr.bf16.gmra.mrb[0].mxu0 %v2418
        %v3538 = vpop.f32.mrb[0].mxu0
        %v3539 = vadd.f32 %v3250, %v3538
        %v3540 = vpop.f32.mrb[0].mxu0
        %v3541 = vpop.f32.mrb[0].mxu0
        %v3542 = vadd.f32 %v3253, %v3541
        %v3543 = vpop.f32.mrb[0].mxu0
        %3544 = vmatprep.mubr.bf16.mxu0 %v2427
        %3545 = vmatmul.mubr.bf16.gmra.mrb[0].mxu0 %v2426
        %v3546 = vpop.f32.mrb[0].mxu0
        %v3547 = vadd.f32 %v3258, %v3546
        %v3548 = vpop.f32.mrb[0].mxu0
        %v3549 = vpop.f32.mrb[0].mxu0
        %v3550 = vadd.f32 %v3261, %v3549
        %v3551 = vpop.f32.mrb[0].mxu0
        %3552 = vmatprep.mubr.bf16.mxu0 %v2435
        %3553 = vmatmul.mubr.bf16.gmra.mrb[0].mxu0 %v2434
        %v3554 = vpop.f32.mrb[0].mxu0
        %v3555 = vadd.f32 %v3266, %v3554
        %v3556 = vpop.f32.mrb[0].mxu0
        %v3557 = vpop.f32.mrb[0].mxu0
        %v3558 = vadd.f32 %v3269, %v3557
        %v3559 = vpop.f32.mrb[0].mxu0
        %3560 = vmatprep.mubr.bf16.mxu0 %v2443
        %3561 = vmatmul.mubr.bf16.gmra.mrb[0].mxu0 %v2442
        %v3562 = vpop.f32.mrb[0].mxu0
        %v3563 = vadd.f32 %v3274, %v3562
        %v3564 = vpop.f32.mrb[0].mxu0
        %v3565 = vpop.f32.mrb[0].mxu0
        %v3566 = vadd.f32 %v3277, %v3565
        %v3567 = vpop.f32.mrb[0].mxu0
        %3568 = vmatprep.mubr.bf16.mxu0 %v2451
        %3569 = vmatmul.mubr.bf16.gmra.mrb[0].mxu0 %v2450
        %v3570 = vpop.f32.mrb[0].mxu0
        %v3571 = vadd.f32 %v3282, %v3570
        %v3572 = vpop.f32.mrb[0].mxu0
        %v3573 = vpop.f32.mrb[0].mxu0
        %v3574 = vadd.f32 %v3285, %v3573
        %v3575 = vpop.f32.mrb[0].mxu0
        %3576 = vmatprep.mubr.bf16.mxu0 %v2459
        %3577 = vmatmul.mubr.bf16.gmra.mrb[0].mxu0 %v2458
        %v3578 = vpop.f32.mrb[0].mxu0
        %v3579 = vadd.f32 %v3290, %v3578
        %v3580 = vpop.f32.mrb[0].mxu0
        %v3581 = vpop.f32.mrb[0].mxu0
        %v3582 = vadd.f32 %v3293, %v3581
        %v3583 = vpop.f32.mrb[0].mxu0
        %3584 = vdwg.mxu0
        %3585 = vmatprep.subr.bf16.mxu0 0
        %3586 = vmatpush1.bf16.msra.mxu0 %v1415
        %3587 = vmatprep.subr.bf16.mxu0 0
        %3588 = vmatpush1.bf16.msra.mxu0 %v1416
        %3589 = vmatprep.subr.bf16.mxu0 0
        %3590 = vmatpush1.bf16.msra.mxu0 %v1417
        %3591 = vmatprep.subr.bf16.mxu0 0
        %3592 = vmatpush1.bf16.msra.mxu0 %v1418
        %3593 = vmatprep.subr.bf16.mxu0 0
        %3594 = vmatpush1.bf16.msra.mxu0 %v1419
        %3595 = vmatprep.subr.bf16.mxu0 0
        %3596 = vmatpush1.bf16.msra.mxu0 %v1420
        %3597 = vmatprep.subr.bf16.mxu0 0
        %3598 = vmatpush1.bf16.msra.mxu0 %v1421
        %3599 = vmatprep.subr.bf16.mxu0 0
        %3600 = vmatpush1.bf16.msra.mxu0 %v1422
        %3601 = vmatprep.subr.bf16.mxu0 0
        %3602 = vmatpush1.bf16.msra.mxu0 %v1423
        %3603 = vmatprep.subr.bf16.mxu0 0
        %3604 = vmatpush1.bf16.msra.mxu0 %v1424
        %3605 = vmatprep.subr.bf16.mxu0 0
        %3606 = vmatpush1.bf16.msra.mxu0 %v1425
        %3607 = vmatprep.subr.bf16.mxu0 0
        %3608 = vmatpush1.bf16.msra.mxu0 %v1426
        %3609 = vmatprep.subr.bf16.mxu0 0
        %3610 = vmatpush1.bf16.msra.mxu0 %v1427
        %3611 = vmatprep.subr.bf16.mxu0 0
        %3612 = vmatpush1.bf16.msra.mxu0 %v1428
        %3613 = vmatprep.subr.bf16.mxu0 0
        %3614 = vmatpush1.bf16.msra.mxu0 %v1429
        %3615 = vmatprep.subr.bf16.mxu0 0
        %3616 = vmatpush1.bf16.msra.mxu0 %v1430
        %3617 = vmatprep.mubr.bf16.mxu0 %v2213
        %3618 = vmatmul.mubr.bf16.gmra.mrb[0].mxu0 %v2212
        %v3619 = vpop.f32.mrb[0].mxu0
        %v3620 = vadd.f32 %v3331, %v3619
        %v3621 = vpop.f32.mrb[0].mxu0
        %v3622 = vpop.f32.mrb[0].mxu0
        %v3623 = vadd.f32 %v3334, %v3622
        %v3624 = vpop.f32.mrb[0].mxu0
        %3625 = vmatprep.mubr.bf16.mxu0 %v2221
        %3626 = vmatmul.mubr.bf16.gmra.mrb[0].mxu0 %v2220
        %v3627 = vpop.f32.mrb[0].mxu0
        %v3628 = vadd.f32 %v3339, %v3627
        %v3629 = vpop.f32.mrb[0].mxu0
        %v3630 = vpop.f32.mrb[0].mxu0
        %v3631 = vadd.f32 %v3342, %v3630
        %v3632 = vpop.f32.mrb[0].mxu0
        %3633 = vmatprep.mubr.bf16.mxu0 %v2229
        %3634 = vmatmul.mubr.bf16.gmra.mrb[0].mxu0 %v2228
        %v3635 = vpop.f32.mrb[0].mxu0
        %v3636 = vadd.f32 %v3347, %v3635
        %v3637 = vpop.f32.mrb[0].mxu0
        %v3638 = vpop.f32.mrb[0].mxu0
        %v3639 = vadd.f32 %v3350, %v3638
        %v3640 = vpop.f32.mrb[0].mxu0
        %3641 = vmatprep.mubr.bf16.mxu0 %v2237
        %3642 = vmatmul.mubr.bf16.gmra.mrb[0].mxu0 %v2236
        %v3643 = vpop.f32.mrb[0].mxu0
        %v3644 = vadd.f32 %v3355, %v3643
        %v3645 = vpop.f32.mrb[0].mxu0
        %v3646 = vpop.f32.mrb[0].mxu0
        %v3647 = vadd.f32 %v3358, %v3646
        %v3648 = vpop.f32.mrb[0].mxu0
        %3649 = vmatprep.mubr.bf16.mxu0 %v2245
        %3650 = vmatmul.mubr.bf16.gmra.mrb[0].mxu0 %v2244
        %v3651 = vpop.f32.mrb[0].mxu0
        %v3652 = vadd.f32 %v3363, %v3651
        %v3653 = vpop.f32.mrb[0].mxu0
        %v3654 = vpop.f32.mrb[0].mxu0
        %v3655 = vadd.f32 %v3366, %v3654
        %v3656 = vpop.f32.mrb[0].mxu0
        %3657 = vmatprep.mubr.bf16.mxu0 %v2253
        %3658 = vmatmul.mubr.bf16.gmra.mrb[0].mxu0 %v2252
        %v3659 = vpop.f32.mrb[0].mxu0
        %v3660 = vadd.f32 %v3371, %v3659
        %v3661 = vpop.f32.mrb[0].mxu0
        %v3662 = vpop.f32.mrb[0].mxu0
        %v3663 = vadd.f32 %v3374, %v3662
        %v3664 = vpop.f32.mrb[0].mxu0
        %3665 = vmatprep.mubr.bf16.mxu0 %v2261
        %3666 = vmatmul.mubr.bf16.gmra.mrb[0].mxu0 %v2260
        %v3667 = vpop.f32.mrb[0].mxu0
        %v3668 = vadd.f32 %v3379, %v3667
        %v3669 = vpop.f32.mrb[0].mxu0
        %v3670 = vpop.f32.mrb[0].mxu0
        %v3671 = vadd.f32 %v3382, %v3670
        %v3672 = vpop.f32.mrb[0].mxu0
        %3673 = vmatprep.mubr.bf16.mxu0 %v2269
        %3674 = vmatmul.mubr.bf16.gmra.mrb[0].mxu0 %v2268
        %v3675 = vpop.f32.mrb[0].mxu0
        %v3676 = vadd.f32 %v3387, %v3675
        %v3677 = vpop.f32.mrb[0].mxu0
        %v3678 = vpop.f32.mrb[0].mxu0
        %v3679 = vadd.f32 %v3390, %v3678
        %v3680 = vpop.f32.mrb[0].mxu0
        %3681 = vmatprep.mubr.bf16.mxu0 %v2277
        %3682 = vmatmul.mubr.bf16.gmra.mrb[0].mxu0 %v2276
        %v3683 = vpop.f32.mrb[0].mxu0
        %v3684 = vadd.f32 %v3395, %v3683
        %v3685 = vpop.f32.mrb[0].mxu0
        %v3686 = vpop.f32.mrb[0].mxu0
        %v3687 = vadd.f32 %v3398, %v3686
        %v3688 = vpop.f32.mrb[0].mxu0
        %3689 = vmatprep.mubr.bf16.mxu0 %v2285
        %3690 = vmatmul.mubr.bf16.gmra.mrb[0].mxu0 %v2284
        %v3691 = vpop.f32.mrb[0].mxu0
        %v3692 = vadd.f32 %v3403, %v3691
        %v3693 = vpop.f32.mrb[0].mxu0
        %v3694 = vpop.f32.mrb[0].mxu0
        %v3695 = vadd.f32 %v3406, %v3694
        %v3696 = vpop.f32.mrb[0].mxu0
        %3697 = vmatprep.mubr.bf16.mxu0 %v2293
        %3698 = vmatmul.mubr.bf16.gmra.mrb[0].mxu0 %v2292
        %v3699 = vpop.f32.mrb[0].mxu0
        %v3700 = vadd.f32 %v3411, %v3699
        %v3701 = vpop.f32.mrb[0].mxu0
        %v3702 = vpop.f32.mrb[0].mxu0
        %v3703 = vadd.f32 %v3414, %v3702
        %v3704 = vpop.f32.mrb[0].mxu0
        %3705 = vmatprep.mubr.bf16.mxu0 %v2301
        %3706 = vmatmul.mubr.bf16.gmra.mrb[0].mxu0 %v2300
        %v3707 = vpop.f32.mrb[0].mxu0
        %v3708 = vadd.f32 %v3419, %v3707
        %v3709 = vpop.f32.mrb[0].mxu0
        %v3710 = vpop.f32.mrb[0].mxu0
        %v3711 = vadd.f32 %v3422, %v3710
        %v3712 = vpop.f32.mrb[0].mxu0
        %3713 = vmatprep.mubr.bf16.mxu0 %v2309
        %3714 = vmatmul.mubr.bf16.gmra.mrb[0].mxu0 %v2308
        %v3715 = vpop.f32.mrb[0].mxu0
        %v3716 = vadd.f32 %v3427, %v3715
        %v3717 = vpop.f32.mrb[0].mxu0
        %v3718 = vpop.f32.mrb[0].mxu0
        %v3719 = vadd.f32 %v3430, %v3718
        %v3720 = vpop.f32.mrb[0].mxu0
        %3721 = vmatprep.mubr.bf16.mxu0 %v2317
        %3722 = vmatmul.mubr.bf16.gmra.mrb[0].mxu0 %v2316
        %v3723 = vpop.f32.mrb[0].mxu0
        %v3724 = vadd.f32 %v3435, %v3723
        %v3725 = vpop.f32.mrb[0].mxu0
        %v3726 = vpop.f32.mrb[0].mxu0
        %v3727 = vadd.f32 %v3438, %v3726
        %v3728 = vpop.f32.mrb[0].mxu0
        %3729 = vmatprep.mubr.bf16.mxu0 %v2325
        %3730 = vmatmul.mubr.bf16.gmra.mrb[0].mxu0 %v2324
        %v3731 = vpop.f32.mrb[0].mxu0
        %v3732 = vadd.f32 %v3443, %v3731
        %v3733 = vpop.f32.mrb[0].mxu0
        %v3734 = vpop.f32.mrb[0].mxu0
        %v3735 = vadd.f32 %v3446, %v3734
        %v3736 = vpop.f32.mrb[0].mxu0
        %3737 = vmatprep.mubr.bf16.mxu0 %v2333
        %3738 = vmatmul.mubr.bf16.gmra.mrb[0].mxu0 %v2332
        %v3739 = vpop.f32.mrb[0].mxu0
        %v3740 = vadd.f32 %v3451, %v3739
        %v3741 = vpop.f32.mrb[0].mxu0
        %v3742 = vpop.f32.mrb[0].mxu0
        %v3743 = vadd.f32 %v3454, %v3742
        %v3744 = vpop.f32.mrb[0].mxu0
        %3745 = vmatprep.mubr.bf16.mxu0 %v2341
        %3746 = vmatmul.mubr.bf16.gmra.mrb[0].mxu0 %v2340
        %v3747 = vpop.f32.mrb[0].mxu0
        %v3748 = vadd.f32 %v3459, %v3747
        %v3749 = vpop.f32.mrb[0].mxu0
        %v3750 = vpop.f32.mrb[0].mxu0
        %v3751 = vadd.f32 %v3462, %v3750
        %v3752 = vpop.f32.mrb[0].mxu0
        %3753 = vmatprep.mubr.bf16.mxu0 %v2349
        %3754 = vmatmul.mubr.bf16.gmra.mrb[0].mxu0 %v2348
        %v3755 = vpop.f32.mrb[0].mxu0
        %v3756 = vadd.f32 %v3467, %v3755
        %v3757 = vpop.f32.mrb[0].mxu0
        %v3758 = vpop.f32.mrb[0].mxu0
        %v3759 = vadd.f32 %v3470, %v3758
        %v3760 = vpop.f32.mrb[0].mxu0
        %3761 = vmatprep.mubr.bf16.mxu0 %v2357
        %3762 = vmatmul.mubr.bf16.gmra.mrb[0].mxu0 %v2356
        %v3763 = vpop.f32.mrb[0].mxu0
        %v3764 = vadd.f32 %v3475, %v3763
        %v3765 = vpop.f32.mrb[0].mxu0
        %v3766 = vpop.f32.mrb[0].mxu0
        %v3767 = vadd.f32 %v3478, %v3766
        %v3768 = vpop.f32.mrb[0].mxu0
        %3769 = vmatprep.mubr.bf16.mxu0 %v2365
        %3770 = vmatmul.mubr.bf16.gmra.mrb[0].mxu0 %v2364
        %v3771 = vpop.f32.mrb[0].mxu0
        %v3772 = vadd.f32 %v3483, %v3771
        %v3773 = vpop.f32.mrb[0].mxu0
        %v3774 = vpop.f32.mrb[0].mxu0
        %v3775 = vadd.f32 %v3486, %v3774
        %v3776 = vpop.f32.mrb[0].mxu0
        %3777 = vmatprep.mubr.bf16.mxu0 %v2373
        %3778 = vmatmul.mubr.bf16.gmra.mrb[0].mxu0 %v2372
        %v3779 = vpop.f32.mrb[0].mxu0
        %v3780 = vadd.f32 %v3491, %v3779
        %v3781 = vpop.f32.mrb[0].mxu0
        %v3782 = vpop.f32.mrb[0].mxu0
        %v3783 = vadd.f32 %v3494, %v3782
        %v3784 = vpop.f32.mrb[0].mxu0
        %3785 = vmatprep.mubr.bf16.mxu0 %v2381
        %3786 = vmatmul.mubr.bf16.gmra.mrb[0].mxu0 %v2380
        %v3787 = vpop.f32.mrb[0].mxu0
        %v3788 = vadd.f32 %v3499, %v3787
        %v3789 = vpop.f32.mrb[0].mxu0
        %v3790 = vpop.f32.mrb[0].mxu0
        %v3791 = vadd.f32 %v3502, %v3790
        %v3792 = vpop.f32.mrb[0].mxu0
        %3793 = vmatprep.mubr.bf16.mxu0 %v2389
        %3794 = vmatmul.mubr.bf16.gmra.mrb[0].mxu0 %v2388
        %v3795 = vpop.f32.mrb[0].mxu0
        %v3796 = vadd.f32 %v3507, %v3795
        %v3797 = vpop.f32.mrb[0].mxu0
        %v3798 = vpop.f32.mrb[0].mxu0
        %v3799 = vadd.f32 %v3510, %v3798
        %v3800 = vpop.f32.mrb[0].mxu0
        %3801 = vmatprep.mubr.bf16.mxu0 %v2397
        %3802 = vmatmul.mubr.bf16.gmra.mrb[0].mxu0 %v2396
        %v3803 = vpop.f32.mrb[0].mxu0
        %v3804 = vadd.f32 %v3515, %v3803
        %v3805 = vpop.f32.mrb[0].mxu0
        %v3806 = vpop.f32.mrb[0].mxu0
        %v3807 = vadd.f32 %v3518, %v3806
        %v3808 = vpop.f32.mrb[0].mxu0
        %3809 = vmatprep.mubr.bf16.mxu0 %v2405
        %3810 = vmatmul.mubr.bf16.gmra.mrb[0].mxu0 %v2404
        %v3811 = vpop.f32.mrb[0].mxu0
        %v3812 = vadd.f32 %v3523, %v3811
        %v3813 = vpop.f32.mrb[0].mxu0
        %v3814 = vpop.f32.mrb[0].mxu0
        %v3815 = vadd.f32 %v3526, %v3814
        %v3816 = vpop.f32.mrb[0].mxu0
        %3817 = vmatprep.mubr.bf16.mxu0 %v2413
        %3818 = vmatmul.mubr.bf16.gmra.mrb[0].mxu0 %v2412
        %v3819 = vpop.f32.mrb[0].mxu0
        %v3820 = vadd.f32 %v3531, %v3819
        %v3821 = vpop.f32.mrb[0].mxu0
        %v3822 = vpop.f32.mrb[0].mxu0
        %v3823 = vadd.f32 %v3534, %v3822
        %v3824 = vpop.f32.mrb[0].mxu0
        %3825 = vmatprep.mubr.bf16.mxu0 %v2421
        %3826 = vmatmul.mubr.bf16.gmra.mrb[0].mxu0 %v2420
        %v3827 = vpop.f32.mrb[0].mxu0
        %v3828 = vadd.f32 %v3539, %v3827
        %v3829 = vpop.f32.mrb[0].mxu0
        %v3830 = vpop.f32.mrb[0].mxu0
        %v3831 = vadd.f32 %v3542, %v3830
        %v3832 = vpop.f32.mrb[0].mxu0
        %3833 = vmatprep.mubr.bf16.mxu0 %v2429
        %3834 = vmatmul.mubr.bf16.gmra.mrb[0].mxu0 %v2428
        %v3835 = vpop.f32.mrb[0].mxu0
        %v3836 = vadd.f32 %v3547, %v3835
        %v3837 = vpop.f32.mrb[0].mxu0
        %v3838 = vpop.f32.mrb[0].mxu0
        %v3839 = vadd.f32 %v3550, %v3838
        %v3840 = vpop.f32.mrb[0].mxu0
        %3841 = vmatprep.mubr.bf16.mxu0 %v2437
        %3842 = vmatmul.mubr.bf16.gmra.mrb[0].mxu0 %v2436
        %v3843 = vpop.f32.mrb[0].mxu0
        %v3844 = vadd.f32 %v3555, %v3843
        %v3845 = vpop.f32.mrb[0].mxu0
        %v3846 = vpop.f32.mrb[0].mxu0
        %v3847 = vadd.f32 %v3558, %v3846
        %v3848 = vpop.f32.mrb[0].mxu0
        %3849 = vmatprep.mubr.bf16.mxu0 %v2445
        %3850 = vmatmul.mubr.bf16.gmra.mrb[0].mxu0 %v2444
        %v3851 = vpop.f32.mrb[0].mxu0
        %v3852 = vadd.f32 %v3563, %v3851
        %v3853 = vpop.f32.mrb[0].mxu0
        %v3854 = vpop.f32.mrb[0].mxu0
        %v3855 = vadd.f32 %v3566, %v3854
        %v3856 = vpop.f32.mrb[0].mxu0
        %3857 = vmatprep.mubr.bf16.mxu0 %v2453
        %3858 = vmatmul.mubr.bf16.gmra.mrb[0].mxu0 %v2452
        %v3859 = vpop.f32.mrb[0].mxu0
        %v3860 = vadd.f32 %v3571, %v3859
        %v3861 = vpop.f32.mrb[0].mxu0
        %v3862 = vpop.f32.mrb[0].mxu0
        %v3863 = vadd.f32 %v3574, %v3862
        %v3864 = vpop.f32.mrb[0].mxu0
        %3865 = vmatprep.mubr.bf16.mxu0 %v2461
        %3866 = vmatmul.mubr.bf16.gmra.mrb[0].mxu0 %v2460
        %v3867 = vpop.f32.mrb[0].mxu0
        %v3868 = vadd.f32 %v3579, %v3867
        %v3869 = vpop.f32.mrb[0].mxu0
        %v3870 = vpop.f32.mrb[0].mxu0
        %v3871 = vadd.f32 %v3582, %v3870
        %v3872 = vpop.f32.mrb[0].mxu0
        %3873 = vdwg.mxu0
        %v3874 = vmax.f32 %v3620, 0.0
        %v3875 = vmax.f32 %v3623, 0.0
        %v3876 = vmax.f32 %v3628, 0.0
        %v3877 = vmax.f32 %v3631, 0.0
        %v3878 = vmax.f32 %v3636, 0.0
        %v3879 = vmax.f32 %v3639, 0.0
        %v3880 = vmax.f32 %v3644, 0.0
        %v3881 = vmax.f32 %v3647, 0.0
        %v3882 = vmax.f32 %v3652, 0.0
        %v3883 = vmax.f32 %v3655, 0.0
        %v3884 = vmax.f32 %v3660, 0.0
        %v3885 = vmax.f32 %v3663, 0.0
        %v3886 = vmax.f32 %v3668, 0.0
        %v3887 = vmax.f32 %v3671, 0.0
        %v3888 = vmax.f32 %v3676, 0.0
        %v3889 = vmax.f32 %v3679, 0.0
        %v3890 = vmax.f32 %v3684, 0.0
        %v3891 = vmax.f32 %v3687, 0.0
        %v3892 = vmax.f32 %v3692, 0.0
        %v3893 = vmax.f32 %v3695, 0.0
        %v3894 = vmax.f32 %v3700, 0.0
        %v3895 = vmax.f32 %v3703, 0.0
        %v3896 = vmax.f32 %v3708, 0.0
        %v3897 = vmax.f32 %v3711, 0.0
        %v3898 = vmax.f32 %v3716, 0.0
        %v3899 = vmax.f32 %v3719, 0.0
        %v3900 = vmax.f32 %v3724, 0.0
        %v3901 = vmax.f32 %v3727, 0.0
        %v3902 = vmax.f32 %v3732, 0.0
        %v3903 = vmax.f32 %v3735, 0.0
        %v3904 = vmax.f32 %v3740, 0.0
        %v3905 = vmax.f32 %v3743, 0.0
        %v3906 = vmax.f32 %v3748, 0.0
        %v3907 = vmax.f32 %v3751, 0.0
        %v3908 = vmax.f32 %v3756, 0.0
        %v3909 = vmax.f32 %v3759, 0.0
        %v3910 = vmax.f32 %v3764, 0.0
        %v3911 = vmax.f32 %v3767, 0.0
        %v3912 = vmax.f32 %v3772, 0.0
        %v3913 = vmax.f32 %v3775, 0.0
        %v3914 = vmax.f32 %v3780, 0.0
        %v3915 = vmax.f32 %v3783, 0.0
        %v3916 = vmax.f32 %v3788, 0.0
        %v3917 = vmax.f32 %v3791, 0.0
        %v3918 = vmax.f32 %v3796, 0.0
        %v3919 = vmax.f32 %v3799, 0.0
        %v3920 = vmax.f32 %v3804, 0.0
        %v3921 = vmax.f32 %v3807, 0.0
        %v3922 = vmax.f32 %v3812, 0.0
        %v3923 = vmax.f32 %v3815, 0.0
        %v3924 = vmax.f32 %v3820, 0.0
        %v3925 = vmax.f32 %v3823, 0.0
        %v3926 = vmax.f32 %v3828, 0.0
        %v3927 = vmax.f32 %v3831, 0.0
        %v3928 = vmax.f32 %v3836, 0.0
        %v3929 = vmax.f32 %v3839, 0.0
        %v3930 = vmax.f32 %v3844, 0.0
        %v3931 = vmax.f32 %v3847, 0.0
        %v3932 = vmax.f32 %v3852, 0.0
        %v3933 = vmax.f32 %v3855, 0.0
        %v3934 = vmax.f32 %v3860, 0.0
        %v3935 = vmax.f32 %v3863, 0.0
        %v3936 = vmax.f32 %v3868, 0.0
        %v3937 = vmax.f32 %v3871, 0.0
        %3938 = vst [vmem:[%s258] sm:$0xff] %v3874
        %3939 = vst [vmem:[%s258 + $0x8] sm:$0xff] %v3875
        %3940 = vst [vmem:[%s258 + $0x10] sm:$0xff] %v3876
        %3941 = vst [vmem:[%s258 + $0x18] sm:$0xff] %v3877
        %3942 = vst [vmem:[%s258 + $0x20] sm:$0xff] %v3878
        %3943 = vst [vmem:[%s258 + $0x28] sm:$0xff] %v3879
        %3944 = vst [vmem:[%s258 + $0x30] sm:$0xff] %v3880
        %3945 = vst [vmem:[%s258 + $0x38] sm:$0xff] %v3881
        %3946 = vst [vmem:[%s258 + $0x40] sm:$0xff] %v3882
        %3947 = vst [vmem:[%s258 + $0x48] sm:$0xff] %v3883
        %3948 = vst [vmem:[%s258 + $0x50] sm:$0xff] %v3884
        %3949 = vst [vmem:[%s258 + $0x58] sm:$0xff] %v3885
        %3950 = vst [vmem:[%s258 + $0x60] sm:$0xff] %v3886
        %3951 = vst [vmem:[%s258 + $0x68] sm:$0xff] %v3887
        %3952 = vst [vmem:[%s258 + $0x70] sm:$0xff] %v3888
        %3953 = vst [vmem:[%s258 + $0x78] sm:$0xff] %v3889
        %3954 = vst [vmem:[%s258 + $0x80] sm:$0xff] %v3890
        %3955 = vst [vmem:[%s258 + $0x88] sm:$0xff] %v3891
        %3956 = vst [vmem:[%s258 + $0x90] sm:$0xff] %v3892
        %3957 = vst [vmem:[%s258 + $0x98] sm:$0xff] %v3893
        %3958 = vst [vmem:[%s258 + $0xa0] sm:$0xff] %v3894
        %3959 = vst [vmem:[%s258 + $0xa8] sm:$0xff] %v3895
        %3960 = vst [vmem:[%s258 + $0xb0] sm:$0xff] %v3896
        %3961 = vst [vmem:[%s258 + $0xb8] sm:$0xff] %v3897
        %3962 = vst [vmem:[%s258 + $0xc0] sm:$0xff] %v3898
        %3963 = vst [vmem:[%s258 + $0xc8] sm:$0xff] %v3899
        %3964 = vst [vmem:[%s258 + $0xd0] sm:$0xff] %v3900
        %3965 = vst [vmem:[%s258 + $0xd8] sm:$0xff] %v3901
        %3966 = vst [vmem:[%s258 + $0xe0] sm:$0xff] %v3902
        %3967 = vst [vmem:[%s258 + $0xe8] sm:$0xff] %v3903
        %3968 = vst [vmem:[%s258 + $0xf0] sm:$0xff] %v3904
        %3969 = vst [vmem:[%s258 + $0xf8] sm:$0xff] %v3905
        %3970 = vst [vmem:[%s258 + $0x100] sm:$0xff] %v3906
        %3971 = vst [vmem:[%s258 + $0x108] sm:$0xff] %v3907
        %3972 = vst [vmem:[%s258 + $0x110] sm:$0xff] %v3908
        %3973 = vst [vmem:[%s258 + $0x118] sm:$0xff] %v3909
        %3974 = vst [vmem:[%s258 + $0x120] sm:$0xff] %v3910
        %3975 = vst [vmem:[%s258 + $0x128] sm:$0xff] %v3911
        %3976 = vst [vmem:[%s258 + $0x130] sm:$0xff] %v3912
        %3977 = vst [vmem:[%s258 + $0x138] sm:$0xff] %v3913
        %3978 = vst [vmem:[%s258 + $0x140] sm:$0xff] %v3914
        %3979 = vst [vmem:[%s258 + $0x148] sm:$0xff] %v3915
        %3980 = vst [vmem:[%s258 + $0x150] sm:$0xff] %v3916
        %3981 = vst [vmem:[%s258 + $0x158] sm:$0xff] %v3917
        %3982 = vst [vmem:[%s258 + $0x160] sm:$0xff] %v3918
        %3983 = vst [vmem:[%s258 + $0x168] sm:$0xff] %v3919
        %3984 = vst [vmem:[%s258 + $0x170] sm:$0xff] %v3920
        %3985 = vst [vmem:[%s258 + $0x178] sm:$0xff] %v3921
        %3986 = vst [vmem:[%s258 + $0x180] sm:$0xff] %v3922
        %3987 = vst [vmem:[%s258 + $0x188] sm:$0xff] %v3923
        %3988 = vst [vmem:[%s258 + $0x190] sm:$0xff] %v3924
        %3989 = vst [vmem:[%s258 + $0x198] sm:$0xff] %v3925
        %3990 = vst [vmem:[%s258 + $0x1a0] sm:$0xff] %v3926
        %3991 = vst [vmem:[%s258 + $0x1a8] sm:$0xff] %v3927
        %3992 = vst [vmem:[%s258 + $0x1b0] sm:$0xff] %v3928
        %3993 = vst [vmem:[%s258 + $0x1b8] sm:$0xff] %v3929
        %3994 = vst [vmem:[%s258 + $0x1c0] sm:$0xff] %v3930
        %3995 = vst [vmem:[%s258 + $0x1c8] sm:$0xff] %v3931
        %3996 = vst [vmem:[%s258 + $0x1d0] sm:$0xff] %v3932
        %3997 = vst [vmem:[%s258 + $0x1d8] sm:$0xff] %v3933
        %3998 = vst [vmem:[%s258 + $0x1e0] sm:$0xff] %v3934
        %3999 = vst [vmem:[%s258 + $0x1e8] sm:$0xff] %v3935
        %4000 = vst [vmem:[%s258 + $0x1f0] sm:$0xff] %v3936
        %4001 = vst [vmem:[%s258 + $0x1f8] sm:$0xff] %v3937
        %s4002 = sand.u32 %s120, 1
        %s4003 = scalar_lea.sflag [#allocation4], %s4002
        %s4004 = sand.u32 %s120, 1
        %s4005 = smul.addr %s4004, 512
        %s4006 = scalar_lea.vmem [#allocation10], %s4005
        // Predicated region
        $region53: #{tpu_custom_call.1} parent=35 // pred_check
          %p4007 = pneg %p130
        $region54: #{tpu_custom_call.1} parent=35 // pred_check_branch
          %4009 = sbr.rel (%p4007) target = $region56
        $region55: #{tpu_custom_call.1} parent=35 // pred_region
          %s4010 = smul.u32 64, %s23
          %s4012 = ssub.s32 8192, 8192
          %4013 = vsyncadd %s4003, %s4012
          %s4014 = smul.addr %s4010, 128
          %s4015 = scalar_lea.hbm %s4, %s4014
          %s4016 = sshll.u32 %s4006, 4
          %s4017 = int_to_ptr.vmem [resolvable:$true] %s4016
          %4022 = dma.vmem_to_hbm [thread:$0]  %s4017, 8192, %s4015, %s4003, 128, 128, 8
        $region56: #{tpu_custom_call.1} parent=35 // pred_fallthru
          _
      $region36: #{tpu_custom_call.1} parent=5 // pred_fallthru
        _
      %p4023 = scmp.le.s32.totalorder 2, %s18
      // Predicated region
      $region57: #{tpu_custom_call.1} parent=5 // pred_check
        %p4024 = pneg %p4023
      $region58: #{tpu_custom_call.1} parent=5 // pred_check_branch
        %4026 = sbr.rel (%p4024) target = $region60
      $region59: #{tpu_custom_call.1} parent=5 // pred_region
        %s4027 = ssub.s32 %s18, 2
        // Predicated region
        $region61: #{tpu_custom_call.1} parent=59 // pred_check
          %p4028 = pneg %p136
        $region62: #{tpu_custom_call.1} parent=59 // pred_check_branch
          %4030 = sbr.rel (%p4028) target = $region64
        $region63: #{tpu_custom_call.1} parent=59 // pred_region
          %s4031 = sand.u32 %s121, 1
          %s4032 = scalar_lea.sflag [#allocation4], %s4031
          %s4033 = sand.u32 %s121, 1
          %s4034 = smul.addr %s4033, 512
          %s4035 = scalar_lea.vmem [#allocation10], %s4034
          %4036 = dma.done %s4032, 8192
        $region64: #{tpu_custom_call.1} parent=59 // pred_fallthru
          _
      $region60: #{tpu_custom_call.1} parent=5 // pred_fallthru
        _
    $region6: #{tpu_custom_call.1} parent=1 // loop_footer
      %s22 = sadd.s32 1, %s18
    $region7: #{tpu_custom_call.1} parent=1 // loop_footer_branch
      %17 = sbr.rel target = $region3
    $region8: #{tpu_custom_call.1} parent=1 // loop_exit
      _
    %4037 = vsyncpa [#allocation3], 1
    %s4038 = scalar_lea.sflag [#allocation3], 1
    %4039 = vsyncpa %s4038, 1
    %4040 = vsyncpa [#allocation6], 1
    %4041 = vsyncpa [#allocation9], 1
    %4042 = vsyncpa [#allocation4], 1
    %s4043 = scalar_lea.sflag [#allocation4], 1
    %4044 = vsyncpa %s4043, 1

</llo_original>
